<compile_context>
chip_gen: v6e
topology: v6e:2x2x1
jax: 0.10.0
libtpu: 0.0.40
codegen_flags: <defaults>
</compile_context>

<pallas_src>
import math

import numpy as np
import jax
import jax.numpy as jnp
from jax import lax
from jax.experimental import pallas as pl
from jax.experimental.pallas import tpu as pltpu

_N_REPEAT = 4  # v6 == [x1 | x2] repeated 4 times along dim 1


def _selection_matrices(K: int, d2: int, dtype):
    """Constant matrices with  out_folded = x1_folded @ M1 + x2_folded @ M2.

    Folded layout (per folded row r, slot m in [0,K), repeat t in [0,4),
    column s in [0, 1+d2)):
        out[r, m*oc + t*w + 0]     = 2 * a[r*K+m]          (x1 col of v6 + x1)
        out[r, m*oc + t*w + 1 + c] = b[r*K+m, c] + a[r*K+m] (x2 cols of v6 + x1)
    """
    w = 1 + d2
    oc = _N_REPEAT * w
    M1 = np.zeros((K, K * oc), dtype=np.float32)
    M2 = np.zeros((K * d2, K * oc), dtype=np.float32)
    for m in range(K):
        base = m * oc
        for t in range(_N_REPEAT):
            M1[m, base + t * w] = 2.0
            for c in range(d2):
                M1[m, base + t * w + 1 + c] = 1.0
                M2[m * d2 + c, base + t * w + 1 + c] = 1.0
    return jnp.asarray(M1, dtype=dtype), jnp.asarray(M2, dtype=dtype)


def _kernel(x1_ref, x2_ref, m1_ref, m2_ref, o_ref):
    # Two small constant-matrix matmuls on the (otherwise idle) MXU build the
    # whole lane-dense output tile; HIGHEST precision keeps f32 values exact
    # (selection coefficients are 0/1/2), matching the reference bit-for-bit
    # up to the single rounding of a+b.
    acc = jnp.dot(x1_ref[...], m1_ref[...],
                  preferred_element_type=jnp.float32,
                  precision=lax.Precision.HIGHEST)
    acc = acc + jnp.dot(x2_ref[...], m2_ref[...],
                        preferred_element_type=jnp.float32,
                        precision=lax.Precision.HIGHEST)
    o_ref[...] = acc.astype(o_ref.dtype)


def _pick_fold(B: int, d2: int):
    """Largest fold K (<=32) s.t. K*4*(1+d2) % 128 == 0 and B % K == 0."""
    oc = _N_REPEAT * (1 + d2)
    base = 128 // math.gcd(oc, 128)          # <= 32 since oc is a multiple of 4
    for k in (32, 16, 8, 4, 2, 1):
        if k % base == 0 and B % k == 0:
            return k
    return None


def model_forward_pallas(x1: jax.Array, x2: jax.Array, *,
                         block_rows: int | None = None,
                         target_block_bytes: int = 4 << 20) -> jax.Array:
    """Fused cat/cat/cat/cat/add/view forward as a single Pallas kernel."""
    B, d1 = x1.shape
    B2, d2 = x2.shape
    assert B == B2
    assert d1 == 1, "x1 feature dim must be 1 for the torch broadcast x1 + v6"
    dtype = x1.dtype
    itemsize = np.dtype(dtype).itemsize
    oc = _N_REPEAT * (1 + d2)                # logical output width per batch row

    K = _pick_fold(B, d2)
    if K is None:
        raise ValueError("batch size must be a multiple of the fold factor; "
                         "use model_forward() which falls back to XLA")

    R = B // K                               # folded rows
    W = K * oc                               # folded (lane-dense) output width

    # Free row-major reshapes — no data movement, contiguous DMAs.
    x1f = x1.reshape(R, K)
    x2f = x2.reshape(R, K * d2)
    M1, M2 = _selection_matrices(K, d2, dtype)

    # dtype-aware sublane granule (f32:8, bf16:16, int8:32).
    sub = {4: 8, 2: 16, 1: 32}.get(itemsize, 8)

    if block_rows is None:
        block_rows = max(sub, target_block_bytes // (W * itemsize))
    TR = min(R, block_rows)
    if TR < R:
        TR = max(sub, (TR // sub) * sub)
    elif R >= 2 * sub:
        # Split a single-block problem in two so the "parallel" grid axis can
        # actually shard across both TensorCores on v7x.
        half = (R + 1) // 2
        TR = ((half + sub - 1) // sub) * sub

    grid = (pl.cdiv(R, TR),)                 # partial last block is masked

    out = pl.pallas_call(
        _kernel,
        out_shape=jax.ShapeDtypeStruct((R, W), dtype),
        grid=grid,
        in_specs=[
            pl.BlockSpec((TR, K), lambda i: (i, 0)),
            pl.BlockSpec((TR, K * d2), lambda i: (i, 0)),
            pl.BlockSpec((K, W), lambda i: (0, 0)),        # constant block,
            pl.BlockSpec((K * d2, W), lambda i: (0, 0)),   # fetched once
        ],
        out_specs=pl.BlockSpec((TR, W), lambda i: (i, 0)),
        compiler_params=pltpu.CompilerParams(
            dimension_semantics=("parallel",),
            vmem_limit_bytes=32 * 1024 * 1024),
        cost_estimate=pl.CostEstimate(
            flops=2 * B * (1 + d2) * oc,
            transcendentals=0,
            bytes_accessed=B * (1 + d2 + oc) * itemsize),
    )(x1f, x2f, M1, M2)

    # Folded layout flattens (row-major) to exactly the torch (B, oc).view(-1).
    return out.reshape(-1)


def model_forward(x1: jax.Array, x2: jax.Array, *,
                  pallas_min_out_bytes: int = 4 << 20) -> jax.Array:
    """Dispatcher: tiny / ragged / exotic-dtype -> fused XLA; else Pallas."""
    B, d1 = x1.shape
    _, d2 = x2.shape
    oc = _N_REPEAT * (d1 + d2)
    out_bytes = B * oc * np.dtype(x1.dtype).itemsize
    supported_dtype = np.dtype(x1.dtype) in (np.dtype(np.float32),
                                             np.dtype(jnp.bfloat16))
    K = _pick_fold(B, d2) if d1 == 1 else None
    if d1 != 1 or K is None or not supported_dtype or out_bytes < pallas_min_out_bytes:
        # Trivially fusable tile+add: XLA runs this near HBM roofline, and it
        # covers ragged batch sizes without any padding copy of the inputs.
        v1 = jnp.concatenate([x1, x2], axis=1)
        return (jnp.tile(v1, (1, _N_REPEAT)) + x1).reshape(-1)
    return model_forward_pallas(x1, x2)


def _reference(x1, x2):
    v1 = jnp.concatenate((x1, x2), axis=1)
    v3 = jnp.concatenate((x1, x2), axis=1)
    v4 = jnp.concatenate((v1, v3), axis=1)
    v5 = jnp.concatenate((v4, v3), axis=1)
    v6 = jnp.concatenate((v1, v5), axis=1)
    v2 = x1 + v6
    return v2.reshape(-1)


if __name__ == "__main__":
    key = jax.random.PRNGKey(0)
    k1, k2, k3, k4 = jax.random.split(key, 4)
    d1, d2 = 1, 3

    # (1) Multi-block Pallas path: B=4096, fold K=32 -> 128 folded rows,
    #     block_rows=32 -> grid=(4,).
    B = 4096
    x1 = jax.random.normal(k1, (B, d1), dtype=jnp.float32)
    x2 = jax.random.normal(k2, (B, d2), dtype=jnp.float32)
    out = model_forward_pallas(x1, x2, block_rows=32)
    jax.block_until_ready(out)
    ref = _reference(x1, x2)
    assert out.shape == ref.shape == (B * 4 * (d1 + d2),)
    assert jnp.allclose(out, ref, atol=1e-6, rtol=1e-6)

    # (2) Folded-row count not divisible by the block -> masked partial last
    #     block (no input padding):  B=4192 -> R=131, grid=(5,).
    B2 = 4192
    y1 = jax.random.normal(k3, (B2, d1), dtype=jnp.float32)
    y2 = jax.random.normal(k4, (B2, d2), dtype=jnp.float32)
    out2 = model_forward_pallas(y1, y2, block_rows=32)
    jax.block_until_ready(out2)
    assert jnp.allclose(out2, _reference(y1, y2), atol=1e-6, rtol=1e-6)

    # (3) Module-sized toy shapes through the dispatcher (XLA fast path).
    x1s, x2s = x1[:2], x2[:2]
    outs = model_forward(x1s, x2s)
    jax.block_until_ready(outs)
    assert jnp.allclose(outs, _reference(x1s, x2s), atol=1e-6, rtol=1e-6)

    print("KERNEL_OK")
</pallas_src>

<mosaic_0001>
module attributes {stable_mosaic.version = 11 : i64} {
  func.func @_kernel(%arg0: i32, %arg1: memref<32x32xf32, #tpu.memory_space<vmem>>, %arg2: memref<32x96xf32, #tpu.memory_space<vmem>>, %arg3: memref<32x512xf32, #tpu.memory_space<vmem>>, %arg4: memref<96x512xf32, #tpu.memory_space<vmem>>, %arg5: memref<32x512xf32, #tpu.memory_space<vmem>>) attributes {dimension_semantics = [#tpu.dimension_semantics<parallel>], iteration_bounds = array<i64: 4>, scalar_prefetch = 0 : i64, scratch_operands = 0 : i64, tpu.core_type = #tpu.core_type<tc>, window_params = [{transform_indices = @transform_0, window_bounds = array<i64: 32, 32>}, {transform_indices = @transform_1, window_bounds = array<i64: 32, 96>}, {pipeline_mode = #tpu.pipeline_mode<synchronous>, transform_indices = @transform_2, window_bounds = array<i64: 32, 512>}, {pipeline_mode = #tpu.pipeline_mode<synchronous>, transform_indices = @transform_3, window_bounds = array<i64: 96, 512>}, {transform_indices = @transform_4, window_bounds = array<i64: 32, 512>}]} {
    %c0 = arith.constant 0 : index
    %c0_0 = arith.constant 0 : index
    %0 = vector.load %arg1[%c0, %c0_0] : memref<32x32xf32, #tpu.memory_space<vmem>>, vector<32x32xf32>
    %c0_1 = arith.constant 0 : index
    %c0_2 = arith.constant 0 : index
    %1 = vector.load %arg3[%c0_1, %c0_2] : memref<32x512xf32, #tpu.memory_space<vmem>>, vector<32x512xf32>
    %cst = arith.constant dense<0.000000e+00> : vector<32x512xf32>
    %2 = tpu.matmul %0, %1, %cst {dimension_numbers = #tpu.dot_dimension_numbers<[1], [0], [0], [1], [0, 0, 1, 1], [], []>, precision = #tpu.contract_precision<fp32>} : vector<32x32xf32>, vector<32x512xf32>, vector<32x512xf32> -> vector<32x512xf32>
    %c0_3 = arith.constant 0 : index
    %c0_4 = arith.constant 0 : index
    %3 = vector.load %arg2[%c0_3, %c0_4] : memref<32x96xf32, #tpu.memory_space<vmem>>, vector<32x96xf32>
    %c0_5 = arith.constant 0 : index
    %c0_6 = arith.constant 0 : index
    %4 = vector.load %arg4[%c0_5, %c0_6] : memref<96x512xf32, #tpu.memory_space<vmem>>, vector<96x512xf32>
    %cst_7 = arith.constant dense<0.000000e+00> : vector<32x512xf32>
    %5 = tpu.matmul %3, %4, %cst_7 {dimension_numbers = #tpu.dot_dimension_numbers<[1], [0], [0], [1], [0, 0, 1, 1], [], []>, precision = #tpu.contract_precision<fp32>} : vector<32x96xf32>, vector<96x512xf32>, vector<32x512xf32> -> vector<32x512xf32>
    %6 = arith.addf %2, %5 : vector<32x512xf32>
    %c0_8 = arith.constant 0 : index
    %c0_9 = arith.constant 0 : index
    %7 = vector.load %arg5[%c0_8, %c0_9] : memref<32x512xf32, #tpu.memory_space<vmem>>, vector<32x512xf32>
    tpu.vector_store %arg5[%c0_8, %c0_9], %6 {strides = array<i32>} : memref<32x512xf32, #tpu.memory_space<vmem>>, vector<32x512xf32>,
    return
  }
  func.func @transform_0(%arg0: i32) -> (i32, i32) {
    %c0_i32 = arith.constant 0 : i32
    %c0_i32_0 = arith.constant 0 : i32
    return %arg0, %c0_i32 : i32, i32
  }
  func.func @transform_1(%arg0: i32) -> (i32, i32) {
    %c0_i32 = arith.constant 0 : i32
    %c0_i32_0 = arith.constant 0 : i32
    return %arg0, %c0_i32 : i32, i32
  }
  func.func @transform_2(%arg0: i32) -> (i32, i32) {
    %c0_i32 = arith.constant 0 : i32
    %c0_i32_0 = arith.constant 0 : i32
    %c0_i32_1 = arith.constant 0 : i32
    return %c0_i32, %c0_i32_0 : i32, i32
  }
  func.func @transform_3(%arg0: i32) -> (i32, i32) {
    %c0_i32 = arith.constant 0 : i32
    %c0_i32_0 = arith.constant 0 : i32
    %c0_i32_1 = arith.constant 0 : i32
    return %c0_i32, %c0_i32_0 : i32, i32
  }
  func.func @transform_4(%arg0: i32) -> (i32, i32) {
    %c0_i32 = arith.constant 0 : i32
    %c0_i32_0 = arith.constant 0 : i32
    return %arg0, %c0_i32 : i32, i32
  }
}

</mosaic_0001>

<llo_original>
// kernel: tpu_custom_call.1
$region0: #{tpu_custom_call.1}
  #allocation0 [shape = 'u32[]', space=smem, size = 0x4, offset = 0x4, fixed_abs, tag = 'smem constant byte address 0x4 - core index']
  #allocation1 [shape = 'u32[144,128]{1,0:T(1,128)}', space=vmem, size = 0x12000, scoped, tag = 'internal scratch']
  %s0 = inlined_call_operand.vmem [shape: f32[128,32], index: 0, kind: input, shape index: {}]
  %s1 = inlined_call_operand.vmem [shape: f32[128,96], index: 1, kind: input, shape index: {}]
  %s2 = inlined_call_operand.hbm [shape: f32[32,512], index: 2, kind: input, shape index: {}]
  %s3 = inlined_call_operand.vmem [shape: f32[96,512], index: 3, kind: input, shape index: {}]
  %s4 = inlined_call_operand.hbm [shape: f32[128,512], index: 4, kind: output, shape index: {}]
  %s5 = sld [smem:[#allocation0]]
  $region53: #{tpu_custom_call.1} parent=0
    _
  %s7 = ssub.s32 1, %s5
  %s8 = scalar_select 0, %s7, %s5
  $region1: #{tpu_custom_call.1} parent=0
    #allocation2 [shape = 'u8[65536]{0}', space=vmem, size = 0x10000, scoped, tag = 'input window, operand 2, single buffered']
    #allocation3 [shape = 's32[2]{0}', space=sflag, size = 0x8, scoped, tag = 'scoped memory for tpu_custom_call.1']
    #allocation4 [shape = 's32[2]{0}', space=sflag, size = 0x8, scoped, tag = 'scoped memory for tpu_custom_call.1']
    #allocation5 [shape = 'u8[131072]{0}', space=vmem, size = 0x20000, scoped, tag = 'output window, operand 0']
    %9 = vsyncpa [#allocation3], 0
    %10 = vsyncpa [#allocation4], 0
    %s11 = scalar_lea.sflag [#allocation4], 1
    %12 = vsyncpa %s11, 0
    loop: start=0, step=1, limit=6
    $region2: #{tpu_custom_call.1} parent=1 // loop_pre_header
      _
    $region3: #{tpu_custom_call.1} parent=1 // loop_header
      %s14 = sphi 0, %s18
      %p15 = scmp.ge.s32.totalorder %s14, 6
      %s24 = sphi 0, %s26
      %s27 = sphi 0, %s24
      %s28 = sphi 0, %s27
      %s44 = sphi 0, %s28
      %s50 = sphi 0, %s52
      %s53 = sphi 0, %s50
      %s54 = sphi 0, %s53
      %s70 = sphi 0, %s54
      %s74 = sphi 0, %s74
      %s76 = sphi 0, %s74
      %s77 = sphi 0, %s76
      %s91 = sphi 0, %s77
      %s95 = sphi 0, %s95
      %s97 = sphi 0, %s95
      %s98 = sphi 0, %s97
      %s112 = sphi 0, %s98
      %s118 = sphi 0, %s120
      %s121 = sphi 0, %s118
      %s122 = sphi 0, %s121
      %s138 = sphi 0, %s122
    $region4: #{tpu_custom_call.1} parent=1 // loop_header_branch
      %17 = sbr.rel (%p15) target = $region8
    $region5: #{tpu_custom_call.1} parent=1 // loop_body
      %s19 = ssub.s32 %s14, 1
      %s20 = ssub.s32 %s14, 2
      %s21 = sadd.s32 %s14, 1
      %s22 = ssub.s32 %s14, %s21
      %p23 = scmp.eq.s32.totalorder %s22, 0
      %s25 = sadd.s32 %s24, 1
      %s26 = scalar_select %p23, %s24, %s25
      %p29 = pneg %p23
      %p30 = scmp.eq.s32.totalorder %s14, 3
      %p31 = por %p29, %p30
      %p32 = scmp.ne.s32.totalorder %s24, %s27
      %p33 = scmp.eq.s32.totalorder %s14, 0
      %p34 = por %p32, %p33
      %p35 = scmp.ne.s32.totalorder %s24, %s27
      %p36 = scmp.eq.s32.totalorder %s19, 3
      %p37 = por %p35, %p36
      %p38 = scmp.ne.s32.totalorder %s27, %s28
      %p39 = scmp.eq.s32.totalorder %s19, 0
      %p40 = por %p38, %p39
      %p41 = scmp.ne.s32.totalorder %s27, %s28
      %p42 = scmp.eq.s32.totalorder %s20, 3
      %p43 = por %p41, %p42
      %p45 = scmp.ne.s32.totalorder %s28, %s44
      %p46 = scmp.eq.s32.totalorder %s20, 0
      %p47 = por %p45, %p46
      %s48 = ssub.s32 %s14, %s21
      %p49 = scmp.eq.s32.totalorder %s48, 0
      %s51 = sadd.s32 %s50, 1
      %s52 = scalar_select %p49, %s50, %s51
      %p55 = pneg %p49
      %p56 = scmp.eq.s32.totalorder %s14, 3
      %p57 = por %p55, %p56
      %p58 = scmp.ne.s32.totalorder %s50, %s53
      %p59 = scmp.eq.s32.totalorder %s14, 0
      %p60 = por %p58, %p59
      %p61 = scmp.ne.s32.totalorder %s50, %s53
      %p62 = scmp.eq.s32.totalorder %s19, 3
      %p63 = por %p61, %p62
      %p64 = scmp.ne.s32.totalorder %s53, %s54
      %p65 = scmp.eq.s32.totalorder %s19, 0
      %p66 = por %p64, %p65
      %p67 = scmp.ne.s32.totalorder %s53, %s54
      %p68 = scmp.eq.s32.totalorder %s20, 3
      %p69 = por %p67, %p68
      %p71 = scmp.ne.s32.totalorder %s54, %s70
      %p72 = scmp.eq.s32.totalorder %s20, 0
      %p73 = por %p71, %p72
      %s75 = sadd.s32 %s74, 1
      %p78 = scmp.eq.s32.totalorder %s14, 3
      %p79 = scmp.ne.s32.totalorder %s74, %s76
      %p80 = scmp.eq.s32.totalorder %s14, 0
      %p81 = por %p79, %p80
      %p82 = scmp.ne.s32.totalorder %s74, %s76
      %p83 = scmp.eq.s32.totalorder %s19, 3
      %p84 = por %p82, %p83
      %p85 = scmp.ne.s32.totalorder %s76, %s77
      %p86 = scmp.eq.s32.totalorder %s19, 0
      %p87 = por %p85, %p86
      %p88 = scmp.ne.s32.totalorder %s76, %s77
      %p89 = scmp.eq.s32.totalorder %s20, 3
      %p90 = por %p88, %p89
      %p92 = scmp.ne.s32.totalorder %s77, %s91
      %p93 = scmp.eq.s32.totalorder %s20, 0
      %p94 = por %p92, %p93
      %s96 = sadd.s32 %s95, 1
      %p99 = scmp.eq.s32.totalorder %s14, 3
      %p100 = scmp.ne.s32.totalorder %s95, %s97
      %p101 = scmp.eq.s32.totalorder %s14, 0
      %p102 = por %p100, %p101
      %p103 = scmp.ne.s32.totalorder %s95, %s97
      %p104 = scmp.eq.s32.totalorder %s19, 3
      %p105 = por %p103, %p104
      %p106 = scmp.ne.s32.totalorder %s97, %s98
      %p107 = scmp.eq.s32.totalorder %s19, 0
      %p108 = por %p106, %p107
      %p109 = scmp.ne.s32.totalorder %s97, %s98
      %p110 = scmp.eq.s32.totalorder %s20, 3
      %p111 = por %p109, %p110
      %p113 = scmp.ne.s32.totalorder %s98, %s112
      %p114 = scmp.eq.s32.totalorder %s20, 0
      %p115 = por %p113, %p114
      %s116 = ssub.s32 %s14, %s21
      %p117 = scmp.eq.s32.totalorder %s116, 0
      %s119 = sadd.s32 %s118, 1
      %s120 = scalar_select %p117, %s118, %s119
      %p123 = pneg %p117
      %p124 = scmp.eq.s32.totalorder %s14, 3
      %p125 = por %p123, %p124
      %p126 = scmp.ne.s32.totalorder %s118, %s121
      %p127 = scmp.eq.s32.totalorder %s14, 0
      %p128 = por %p126, %p127
      %p129 = scmp.ne.s32.totalorder %s118, %s121
      %p130 = scmp.eq.s32.totalorder %s19, 3
      %p131 = por %p129, %p130
      %p132 = scmp.ne.s32.totalorder %s121, %s122
      %p133 = scmp.eq.s32.totalorder %s19, 0
      %p134 = por %p132, %p133
      %p135 = scmp.ne.s32.totalorder %s121, %s122
      %p136 = scmp.eq.s32.totalorder %s20, 3
      %p137 = por %p135, %p136
      %p139 = scmp.ne.s32.totalorder %s122, %s138
      %p140 = scmp.eq.s32.totalorder %s20, 0
      %p141 = por %p139, %p140
      %p142 = scmp.le.s32.totalorder 1, %s14
      %p143 = scmp.lt.s32.totalorder %s14, 5
      %p144 = pnand %p142, %p143
      %p145 = pneg %p144
      // Predicated region
      $region9: #{tpu_custom_call.1} parent=5 // pred_check
        _
      $region10: #{tpu_custom_call.1} parent=5 // pred_check_branch
        %147 = sbr.rel (%p144) target = $region12
      $region11: #{tpu_custom_call.1} parent=5 // pred_region
        %s148 = ssub.s32 %s14, 1
        // Predicated region
        $region13: #{tpu_custom_call.1} parent=11 // pred_check
          %p149 = pneg %p87
        $region14: #{tpu_custom_call.1} parent=11 // pred_check_branch
          %151 = sbr.rel (%p149) target = $region16
        $region15: #{tpu_custom_call.1} parent=11 // pred_region
          %s153 = ssub.s32 2048, 2048
          %154 = vsyncadd [#allocation3], %s153
          %s155 = sshll.u32 [#allocation2], 4
          %s156 = int_to_ptr.vmem [resolvable:$true] %s155
          %161 = dma.hbm_to_vmem [thread:$0]  %s2, 2048, %s156, [#allocation3], 512, 512, 32
        $region16: #{tpu_custom_call.1} parent=11 // pred_fallthru
          _
        // Predicated region
        $region17: #{tpu_custom_call.1} parent=11 // pred_check
          %p162 = pneg %p108
        $region18: #{tpu_custom_call.1} parent=11 // pred_check_branch
          %164 = sbr.rel (%p162) target = $region20
        $region19: #{tpu_custom_call.1} parent=11 // pred_region
          _
        $region20: #{tpu_custom_call.1} parent=11 // pred_fallthru
          _
      $region12: #{tpu_custom_call.1} parent=5 // pred_fallthru
        _
      %p165 = scmp.lt.s32.totalorder %s14, 4
      // Predicated region
      $region21: #{tpu_custom_call.1} parent=5 // pred_check
        %p166 = pneg %p165
      $region22: #{tpu_custom_call.1} parent=5 // pred_check_branch
        %168 = sbr.rel (%p166) target = $region24
      $region23: #{tpu_custom_call.1} parent=5 // pred_region
        // Predicated region
        $region25: #{tpu_custom_call.1} parent=23 // pred_check
          %p169 = pneg %p34
        $region26: #{tpu_custom_call.1} parent=23 // pred_check_branch
          %171 = sbr.rel (%p169) target = $region28
        $region27: #{tpu_custom_call.1} parent=23 // pred_region
          %s172 = smul.u32 4, %s14
          %p173 = scmp.lt.s32.totalorder %s172, 15
          %s174 = scalar_select %p173, %s172, 15
          %s175 = smul.addr %s174, 8
          %s176 = scalar_lea.vmem %s0, %s175
          %s177 = smul.u32 4, %s14
        $region28: #{tpu_custom_call.1} parent=23 // pred_fallthru
          _
        // Predicated region
        $region29: #{tpu_custom_call.1} parent=23 // pred_check
          %p178 = pneg %p60
        $region30: #{tpu_custom_call.1} parent=23 // pred_check_branch
          %180 = sbr.rel (%p178) target = $region32
        $region31: #{tpu_custom_call.1} parent=23 // pred_region
          %s181 = smul.u32 4, %s14
          %p182 = scmp.lt.s32.totalorder %s181, 15
          %s183 = scalar_select %p182, %s181, 15
          %s184 = smul.addr %s183, 8
          %s185 = scalar_lea.vmem %s1, %s184
          %s186 = smul.u32 4, %s14
        $region32: #{tpu_custom_call.1} parent=23 // pred_fallthru
          _
      $region24: #{tpu_custom_call.1} parent=5 // pred_fallthru
        _
      %p187 = scmp.le.s32.totalorder 1, %s14
      %p188 = scmp.lt.s32.totalorder %s14, 5
      %p189 = pnand %p187, %p188
      %p190 = pneg %p189
      // Predicated region
      $region33: #{tpu_custom_call.1} parent=5 // pred_check
        _
      $region34: #{tpu_custom_call.1} parent=5 // pred_check_branch
        %192 = sbr.rel (%p189) target = $region36
      $region35: #{tpu_custom_call.1} parent=5 // pred_region
        %s193 = ssub.s32 %s14, 1
        // Predicated region
        $region37: #{tpu_custom_call.1} parent=35 // pred_check
          %p194 = pneg %p87
        $region38: #{tpu_custom_call.1} parent=35 // pred_check_branch
          %196 = sbr.rel (%p194) target = $region40
        $region39: #{tpu_custom_call.1} parent=35 // pred_region
          %197 = dma.done [#allocation3], 2048
        $region40: #{tpu_custom_call.1} parent=35 // pred_fallthru
          _
        %s198 = smul.u32 4, %s19
        %p199 = scmp.lt.s32.totalorder %s198, 15
        %s200 = scalar_select %p199, %s198, 15
        %s201 = smul.addr %s200, 8
        %s202 = scalar_lea.vmem %s0, %s201
        %p203 = pneg %p40
        %p204 = pneg %p37
        %s205 = smul.u32 4, %s19
        %p206 = scmp.lt.s32.totalorder %s205, 15
        %s207 = scalar_select %p206, %s205, 15
        %s208 = smul.addr %s207, 8
        %s209 = scalar_lea.vmem %s1, %s208
        %p210 = pneg %p66
        %p211 = pneg %p63
        %p212 = pneg %p87
        %p213 = pneg %p84
        %p214 = pneg %p108
        %p215 = pneg %p105
        %p216 = pneg %p134
        %p217 = pneg %p131
        %s218 = sand.u32 %s121, 1
        %s219 = scalar_lea.sflag [#allocation4], %s218
        %s220 = sand.u32 %s121, 1
        %s221 = smul.addr %s220, 128
        %s222 = scalar_lea.vmem [#allocation5], %s221
        %s223 = smul.u32 4, %s19
        %p224 = scmp.lt.s32.totalorder %s223, 15
        %s225 = scalar_select %p224, %s223, 15
        %s226 = smul.addr %s225, 8
        %s227 = scalar_lea.vmem %s0, %s226
        %s228 = smul.u32 4, %s19
        %s229 = smul.u32 4, %s19
        %p230 = scmp.lt.s32.totalorder %s229, 15
        %s231 = scalar_select %p230, %s229, 15
        %s232 = smul.addr %s231, 8
        %s233 = scalar_lea.vmem %s1, %s232
        %s234 = smul.u32 4, %s19
        %s235 = smul.u32 4, %s19
        %v236 = vld [vmem:[%s227] sm:$0xff]
        %v237 = vld [vmem:[%s227 + $0x8] sm:$0xff]
        %v238 = vld [vmem:[%s227 + $0x10] sm:$0xff]
        %v239 = vld [vmem:[%s227 + $0x18] sm:$0xff]
        %v240 = vld [vmem:[#allocation2] sm:$0xff]
        %v241 = vld [vmem:[#allocation2 + $0x8] sm:$0xff]
        %v242 = vld [vmem:[#allocation2 + $0x10] sm:$0xff]
        %v243 = vld [vmem:[#allocation2 + $0x18] sm:$0xff]
        %v244 = vld [vmem:[#allocation2 + $0x20] sm:$0xff]
        %v245 = vld [vmem:[#allocation2 + $0x28] sm:$0xff]
        %v246 = vld [vmem:[#allocation2 + $0x30] sm:$0xff]
        %v247 = vld [vmem:[#allocation2 + $0x38] sm:$0xff]
        %v248 = vld [vmem:[#allocation2 + $0x40] sm:$0xff]
        %v249 = vld [vmem:[#allocation2 + $0x48] sm:$0xff]
        %v250 = vld [vmem:[#allocation2 + $0x50] sm:$0xff]
        %v251 = vld [vmem:[#allocation2 + $0x58] sm:$0xff]
        %v252 = vld [vmem:[#allocation2 + $0x60] sm:$0xff]
        %v253 = vld [vmem:[#allocation2 + $0x68] sm:$0xff]
        %v254 = vld [vmem:[#allocation2 + $0x70] sm:$0xff]
        %v255 = vld [vmem:[#allocation2 + $0x78] sm:$0xff]
        %v256 = vld [vmem:[%s233] sm:$0xff]
        %v257 = vld [vmem:[%s233 + $0x8] sm:$0xff]
        %v258 = vld [vmem:[%s233 + $0x10] sm:$0xff]
        %v259 = vld [vmem:[%s233 + $0x18] sm:$0xff]
        %v260 = vld [vmem:[%s3] sm:$0xff]
        %v261 = vld [vmem:[%s3 + $0x8] sm:$0xff]
        %v262 = vld [vmem:[%s3 + $0x10] sm:$0xff]
        %v263 = vld [vmem:[%s3 + $0x18] sm:$0xff]
        %v264 = vld [vmem:[%s3 + $0x20] sm:$0xff]
        %v265 = vld [vmem:[%s3 + $0x28] sm:$0xff]
        %v266 = vld [vmem:[%s3 + $0x30] sm:$0xff]
        %v267 = vld [vmem:[%s3 + $0x38] sm:$0xff]
        %v268 = vld [vmem:[%s3 + $0x40] sm:$0xff]
        %v269 = vld [vmem:[%s3 + $0x48] sm:$0xff]
        %v270 = vld [vmem:[%s3 + $0x50] sm:$0xff]
        %v271 = vld [vmem:[%s3 + $0x58] sm:$0xff]
        %v272 = vld [vmem:[%s3 + $0x60] sm:$0xff]
        %v273 = vld [vmem:[%s3 + $0x68] sm:$0xff]
        %v274 = vld [vmem:[%s3 + $0x70] sm:$0xff]
        %v275 = vld [vmem:[%s3 + $0x78] sm:$0xff]
        %v276 = vld [vmem:[%s3 + $0x80] sm:$0xff]
        %v277 = vld [vmem:[%s3 + $0x88] sm:$0xff]
        %v278 = vld [vmem:[%s3 + $0x90] sm:$0xff]
        %v279 = vld [vmem:[%s3 + $0x98] sm:$0xff]
        %v280 = vld [vmem:[%s3 + $0xa0] sm:$0xff]
        %v281 = vld [vmem:[%s3 + $0xa8] sm:$0xff]
        %v282 = vld [vmem:[%s3 + $0xb0] sm:$0xff]
        %v283 = vld [vmem:[%s3 + $0xb8] sm:$0xff]
        %v284 = vld [vmem:[%s3 + $0xc0] sm:$0xff]
        %v285 = vld [vmem:[%s3 + $0xc8] sm:$0xff]
        %v286 = vld [vmem:[%s3 + $0xd0] sm:$0xff]
        %v287 = vld [vmem:[%s3 + $0xd8] sm:$0xff]
        %v288 = vld [vmem:[%s3 + $0xe0] sm:$0xff]
        %v289 = vld [vmem:[%s3 + $0xe8] sm:$0xff]
        %v290 = vld [vmem:[%s3 + $0xf0] sm:$0xff]
        %v291 = vld [vmem:[%s3 + $0xf8] sm:$0xff]
        %v292 = vld [vmem:[%s3 + $0x100] sm:$0xff]
        %v293 = vld [vmem:[%s3 + $0x108] sm:$0xff]
        %v294 = vld [vmem:[%s3 + $0x110] sm:$0xff]
        %v295 = vld [vmem:[%s3 + $0x118] sm:$0xff]
        %v296 = vld [vmem:[%s3 + $0x120] sm:$0xff]
        %v297 = vld [vmem:[%s3 + $0x128] sm:$0xff]
        %v298 = vld [vmem:[%s3 + $0x130] sm:$0xff]
        %v299 = vld [vmem:[%s3 + $0x138] sm:$0xff]
        %v300 = vld [vmem:[%s3 + $0x140] sm:$0xff]
        %v301 = vld [vmem:[%s3 + $0x148] sm:$0xff]
        %v302 = vld [vmem:[%s3 + $0x150] sm:$0xff]
        %v303 = vld [vmem:[%s3 + $0x158] sm:$0xff]
        %v304 = vld [vmem:[%s3 + $0x160] sm:$0xff]
        %v305 = vld [vmem:[%s3 + $0x168] sm:$0xff]
        %v306 = vld [vmem:[%s3 + $0x170] sm:$0xff]
        %v307 = vld [vmem:[%s3 + $0x178] sm:$0xff]
        %vm308 = vcmask 785408
        %v310 = vsel %vm308, %v256, 0
        %v313 = vsel %vm308, %v257, 0
        %v316 = vsel %vm308, %v258, 0
        %v319 = vsel %vm308, %v259, 0
        %321 = vmatprep.subr.mxu0 0.0
        %322 = vmatpush1.msra.mxu0 0.0
        %323 = vmatprep.subr.mxu0 0.0
        %324 = vmatpush1.msra.mxu0 0.0
        %325 = vmatprep.subr.mxu0 0.0
        %326 = vmatpush1.msra.mxu0 0.0
        %327 = vmatprep.subr.mxu0 0.0
        %328 = vmatpush1.msra.mxu0 0.0
        %v329 = vand.u32 %v305, 4294901760
        %330 = vmatprep.subr.mxu0 %v329
        %v331 = vand.u32 %v304, 4294901760
        %332 = vmatpush1.msra.mxu0 %v331
        %v333 = vand.u32 %v301, 4294901760
        %334 = vmatprep.subr.mxu0 %v333
        %v335 = vand.u32 %v300, 4294901760
        %336 = vmatpush1.msra.mxu0 %v335
        %v337 = vand.u32 %v297, 4294901760
        %338 = vmatprep.subr.mxu0 %v337
        %v339 = vand.u32 %v296, 4294901760
        %340 = vmatpush1.msra.mxu0 %v339
        %v341 = vand.u32 %v293, 4294901760
        %342 = vmatprep.subr.mxu0 %v341
        %v343 = vand.u32 %v292, 4294901760
        %344 = vmatpush1.msra.mxu0 %v343
        %v345 = vand.u32 %v289, 4294901760
        %346 = vmatprep.subr.mxu0 %v345
        %v347 = vand.u32 %v288, 4294901760
        %348 = vmatpush1.msra.mxu0 %v347
        %v349 = vand.u32 %v285, 4294901760
        %350 = vmatprep.subr.mxu0 %v349
        %v351 = vand.u32 %v284, 4294901760
        %352 = vmatpush1.msra.mxu0 %v351
        %v353 = vand.u32 %v281, 4294901760
        %354 = vmatprep.subr.mxu0 %v353
        %v355 = vand.u32 %v280, 4294901760
        %356 = vmatpush1.msra.mxu0 %v355
        %v357 = vand.u32 %v277, 4294901760
        %358 = vmatprep.subr.mxu0 %v357
        %v359 = vand.u32 %v276, 4294901760
        %360 = vmatpush1.msra.mxu0 %v359
        %v361 = vand.u32 %v273, 4294901760
        %362 = vmatprep.subr.mxu0 %v361
        %v363 = vand.u32 %v272, 4294901760
        %364 = vmatpush1.msra.mxu0 %v363
        %v365 = vand.u32 %v269, 4294901760
        %366 = vmatprep.subr.mxu0 %v365
        %v367 = vand.u32 %v268, 4294901760
        %368 = vmatpush1.msra.mxu0 %v367
        %v369 = vand.u32 %v265, 4294901760
        %370 = vmatprep.subr.mxu0 %v369
        %v371 = vand.u32 %v264, 4294901760
        %372 = vmatpush1.msra.mxu0 %v371
        %v373 = vand.u32 %v261, 4294901760
        %374 = vmatprep.subr.mxu0 %v373
        %v375 = vand.u32 %v260, 4294901760
        %376 = vmatpush1.msra.mxu0 %v375
        %377 = vmatprep.subr.mxu0 0.0
        %378 = vmatpush2.msra.mxu0 0.0
        %379 = vmatprep.subr.mxu0 0.0
        %380 = vmatpush2.msra.mxu0 0.0
        %381 = vmatprep.subr.mxu0 0.0
        %382 = vmatpush2.msra.mxu0 0.0
        %383 = vmatprep.subr.mxu0 0.0
        %384 = vmatpush2.msra.mxu0 0.0
        %385 = vmatprep.subr.mxu0 0.0
        %386 = vmatpush2.msra.mxu0 0.0
        %387 = vmatprep.subr.mxu0 0.0
        %388 = vmatpush2.msra.mxu0 0.0
        %389 = vmatprep.subr.mxu0 0.0
        %390 = vmatpush2.msra.mxu0 0.0
        %391 = vmatprep.subr.mxu0 0.0
        %392 = vmatpush2.msra.mxu0 0.0
        %393 = vmatprep.subr.mxu0 0.0
        %394 = vmatpush2.msra.mxu0 0.0
        %395 = vmatprep.subr.mxu0 0.0
        %396 = vmatpush2.msra.mxu0 0.0
        %397 = vmatprep.subr.mxu0 0.0
        %398 = vmatpush2.msra.mxu0 0.0
        %399 = vmatprep.subr.mxu0 0.0
        %400 = vmatpush2.msra.mxu0 0.0
        %401 = vmatprep.subr.mxu0 0.0
        %402 = vmatpush2.msra.mxu0 0.0
        %403 = vmatprep.subr.mxu0 0.0
        %404 = vmatpush2.msra.mxu0 0.0
        %405 = vmatprep.subr.mxu0 0.0
        %406 = vmatpush2.msra.mxu0 0.0
        %407 = vmatprep.subr.mxu0 0.0
        %408 = vmatpush2.msra.mxu0 0.0
        %409 = vmatprep.mubr.f32.mxu0 0.0
        %v410 = vand.u32 %v310, 4294901760
        %v411 = vsub.f32 %v310, %v410
        %v412 = vand.u32 %v411, 4294901760
        %v413 = vsub.f32 %v411, %v412
        %v414 = vand.u32 %v413, 4294901760
        %415 = vmatmul.mubr.f32.gmra.mxu0 %v414
        %v416 = vpop.f32.mrf.mxu0
        %v417 = vadd.f32 0.0, %v416
        %v418 = vpop.f32.mrf.mxu0
        %v419 = vadd.f32 0.0, %v418
        %420 = vmatprep.mubr.f32.mxu0 0.0
        %v421 = vand.u32 %v313, 4294901760
        %v422 = vsub.f32 %v313, %v421
        %v423 = vand.u32 %v422, 4294901760
        %v424 = vsub.f32 %v422, %v423
        %v425 = vand.u32 %v424, 4294901760
        %426 = vmatmul.mubr.f32.gmra.mxu0 %v425
        %v427 = vpop.f32.mrf.mxu0
        %v428 = vadd.f32 0.0, %v427
        %v429 = vpop.f32.mrf.mxu0
        %v430 = vadd.f32 0.0, %v429
        %431 = vmatprep.mubr.f32.mxu0 0.0
        %v432 = vand.u32 %v316, 4294901760
        %v433 = vsub.f32 %v316, %v432
        %v434 = vand.u32 %v433, 4294901760
        %v435 = vsub.f32 %v433, %v434
        %v436 = vand.u32 %v435, 4294901760
        %437 = vmatmul.mubr.f32.gmra.mxu0 %v436
        %v438 = vpop.f32.mrf.mxu0
        %v439 = vadd.f32 0.0, %v438
        %v440 = vpop.f32.mrf.mxu0
        %v441 = vadd.f32 0.0, %v440
        %442 = vmatprep.mubr.f32.mxu0 0.0
        %v443 = vand.u32 %v319, 4294901760
        %v444 = vsub.f32 %v319, %v443
        %v445 = vand.u32 %v444, 4294901760
        %v446 = vsub.f32 %v444, %v445
        %v447 = vand.u32 %v446, 4294901760
        %448 = vmatmul.mubr.f32.gmra.mxu0 %v447
        %v449 = vpop.f32.mrf.mxu0
        %v450 = vadd.f32 0.0, %v449
        %v451 = vpop.f32.mrf.mxu0
        %v452 = vadd.f32 0.0, %v451
        %453 = vdwg.mxu0
        %454 = vmatprep.subr.mxu0 0.0
        %455 = vmatpush1.msra.mxu0 0.0
        %456 = vmatprep.subr.mxu0 0.0
        %457 = vmatpush1.msra.mxu0 0.0
        %458 = vmatprep.subr.mxu0 0.0
        %459 = vmatpush1.msra.mxu0 0.0
        %460 = vmatprep.subr.mxu0 0.0
        %461 = vmatpush1.msra.mxu0 0.0
        %v462 = vand.u32 %v305, 4294901760
        %v463 = vsub.f32 %v305, %v462
        %v464 = vand.u32 %v463, 4294901760
        %v465 = vsub.f32 %v463, %v464
        %v466 = vand.u32 %v465, 4294901760
        %467 = vmatprep.subr.mxu0 %v466
        %v468 = vand.u32 %v304, 4294901760
        %v469 = vsub.f32 %v304, %v468
        %v470 = vand.u32 %v469, 4294901760
        %v471 = vsub.f32 %v469, %v470
        %v472 = vand.u32 %v471, 4294901760
        %473 = vmatpush1.msra.mxu0 %v472
        %v474 = vand.u32 %v301, 4294901760
        %v475 = vsub.f32 %v301, %v474
        %v476 = vand.u32 %v475, 4294901760
        %v477 = vsub.f32 %v475, %v476
        %v478 = vand.u32 %v477, 4294901760
        %479 = vmatprep.subr.mxu0 %v478
        %v480 = vand.u32 %v300, 4294901760
        %v481 = vsub.f32 %v300, %v480
        %v482 = vand.u32 %v481, 4294901760
        %v483 = vsub.f32 %v481, %v482
        %v484 = vand.u32 %v483, 4294901760
        %485 = vmatpush1.msra.mxu0 %v484
        %v486 = vand.u32 %v297, 4294901760
        %v487 = vsub.f32 %v297, %v486
        %v488 = vand.u32 %v487, 4294901760
        %v489 = vsub.f32 %v487, %v488
        %v490 = vand.u32 %v489, 4294901760
        %491 = vmatprep.subr.mxu0 %v490
        %v492 = vand.u32 %v296, 4294901760
        %v493 = vsub.f32 %v296, %v492
        %v494 = vand.u32 %v493, 4294901760
        %v495 = vsub.f32 %v493, %v494
        %v496 = vand.u32 %v495, 4294901760
        %497 = vmatpush1.msra.mxu0 %v496
        %v498 = vand.u32 %v293, 4294901760
        %v499 = vsub.f32 %v293, %v498
        %v500 = vand.u32 %v499, 4294901760
        %v501 = vsub.f32 %v499, %v500
        %v502 = vand.u32 %v501, 4294901760
        %503 = vmatprep.subr.mxu0 %v502
        %v504 = vand.u32 %v292, 4294901760
        %v505 = vsub.f32 %v292, %v504
        %v506 = vand.u32 %v505, 4294901760
        %v507 = vsub.f32 %v505, %v506
        %v508 = vand.u32 %v507, 4294901760
        %509 = vmatpush1.msra.mxu0 %v508
        %v510 = vand.u32 %v289, 4294901760
        %v511 = vsub.f32 %v289, %v510
        %v512 = vand.u32 %v511, 4294901760
        %v513 = vsub.f32 %v511, %v512
        %v514 = vand.u32 %v513, 4294901760
        %515 = vmatprep.subr.mxu0 %v514
        %v516 = vand.u32 %v288, 4294901760
        %v517 = vsub.f32 %v288, %v516
        %v518 = vand.u32 %v517, 4294901760
        %v519 = vsub.f32 %v517, %v518
        %v520 = vand.u32 %v519, 4294901760
        %521 = vmatpush1.msra.mxu0 %v520
        %v522 = vand.u32 %v285, 4294901760
        %v523 = vsub.f32 %v285, %v522
        %v524 = vand.u32 %v523, 4294901760
        %v525 = vsub.f32 %v523, %v524
        %v526 = vand.u32 %v525, 4294901760
        %527 = vmatprep.subr.mxu0 %v526
        %v528 = vand.u32 %v284, 4294901760
        %v529 = vsub.f32 %v284, %v528
        %v530 = vand.u32 %v529, 4294901760
        %v531 = vsub.f32 %v529, %v530
        %v532 = vand.u32 %v531, 4294901760
        %533 = vmatpush1.msra.mxu0 %v532
        %v534 = vand.u32 %v281, 4294901760
        %v535 = vsub.f32 %v281, %v534
        %v536 = vand.u32 %v535, 4294901760
        %v537 = vsub.f32 %v535, %v536
        %v538 = vand.u32 %v537, 4294901760
        %539 = vmatprep.subr.mxu0 %v538
        %v540 = vand.u32 %v280, 4294901760
        %v541 = vsub.f32 %v280, %v540
        %v542 = vand.u32 %v541, 4294901760
        %v543 = vsub.f32 %v541, %v542
        %v544 = vand.u32 %v543, 4294901760
        %545 = vmatpush1.msra.mxu0 %v544
        %v546 = vand.u32 %v277, 4294901760
        %v547 = vsub.f32 %v277, %v546
        %v548 = vand.u32 %v547, 4294901760
        %v549 = vsub.f32 %v547, %v548
        %v550 = vand.u32 %v549, 4294901760
        %551 = vmatprep.subr.mxu0 %v550
        %v552 = vand.u32 %v276, 4294901760
        %v553 = vsub.f32 %v276, %v552
        %v554 = vand.u32 %v553, 4294901760
        %v555 = vsub.f32 %v553, %v554
        %v556 = vand.u32 %v555, 4294901760
        %557 = vmatpush1.msra.mxu0 %v556
        %v558 = vand.u32 %v273, 4294901760
        %v559 = vsub.f32 %v273, %v558
        %v560 = vand.u32 %v559, 4294901760
        %v561 = vsub.f32 %v559, %v560
        %v562 = vand.u32 %v561, 4294901760
        %563 = vmatprep.subr.mxu0 %v562
        %v564 = vand.u32 %v272, 4294901760
        %v565 = vsub.f32 %v272, %v564
        %v566 = vand.u32 %v565, 4294901760
        %v567 = vsub.f32 %v565, %v566
        %v568 = vand.u32 %v567, 4294901760
        %569 = vmatpush1.msra.mxu0 %v568
        %v570 = vand.u32 %v269, 4294901760
        %v571 = vsub.f32 %v269, %v570
        %v572 = vand.u32 %v571, 4294901760
        %v573 = vsub.f32 %v571, %v572
        %v574 = vand.u32 %v573, 4294901760
        %575 = vmatprep.subr.mxu0 %v574
        %v576 = vand.u32 %v268, 4294901760
        %v577 = vsub.f32 %v268, %v576
        %v578 = vand.u32 %v577, 4294901760
        %v579 = vsub.f32 %v577, %v578
        %v580 = vand.u32 %v579, 4294901760
        %581 = vmatpush1.msra.mxu0 %v580
        %v582 = vand.u32 %v265, 4294901760
        %v583 = vsub.f32 %v265, %v582
        %v584 = vand.u32 %v583, 4294901760
        %v585 = vsub.f32 %v583, %v584
        %v586 = vand.u32 %v585, 4294901760
        %587 = vmatprep.subr.mxu0 %v586
        %v588 = vand.u32 %v264, 4294901760
        %v589 = vsub.f32 %v264, %v588
        %v590 = vand.u32 %v589, 4294901760
        %v591 = vsub.f32 %v589, %v590
        %v592 = vand.u32 %v591, 4294901760
        %593 = vmatpush1.msra.mxu0 %v592
        %v594 = vand.u32 %v261, 4294901760
        %v595 = vsub.f32 %v261, %v594
        %v596 = vand.u32 %v595, 4294901760
        %v597 = vsub.f32 %v595, %v596
        %v598 = vand.u32 %v597, 4294901760
        %599 = vmatprep.subr.mxu0 %v598
        %v600 = vand.u32 %v260, 4294901760
        %v601 = vsub.f32 %v260, %v600
        %v602 = vand.u32 %v601, 4294901760
        %v603 = vsub.f32 %v601, %v602
        %v604 = vand.u32 %v603, 4294901760
        %605 = vmatpush1.msra.mxu0 %v604
        %606 = vmatprep.subr.mxu0 0.0
        %607 = vmatpush2.msra.mxu0 0.0
        %608 = vmatprep.subr.mxu0 0.0
        %609 = vmatpush2.msra.mxu0 0.0
        %610 = vmatprep.subr.mxu0 0.0
        %611 = vmatpush2.msra.mxu0 0.0
        %612 = vmatprep.subr.mxu0 0.0
        %613 = vmatpush2.msra.mxu0 0.0
        %614 = vmatprep.subr.mxu0 0.0
        %615 = vmatpush2.msra.mxu0 0.0
        %616 = vmatprep.subr.mxu0 0.0
        %617 = vmatpush2.msra.mxu0 0.0
        %618 = vmatprep.subr.mxu0 0.0
        %619 = vmatpush2.msra.mxu0 0.0
        %620 = vmatprep.subr.mxu0 0.0
        %621 = vmatpush2.msra.mxu0 0.0
        %622 = vmatprep.subr.mxu0 0.0
        %623 = vmatpush2.msra.mxu0 0.0
        %624 = vmatprep.subr.mxu0 0.0
        %625 = vmatpush2.msra.mxu0 0.0
        %626 = vmatprep.subr.mxu0 0.0
        %627 = vmatpush2.msra.mxu0 0.0
        %628 = vmatprep.subr.mxu0 0.0
        %629 = vmatpush2.msra.mxu0 0.0
        %630 = vmatprep.subr.mxu0 0.0
        %631 = vmatpush2.msra.mxu0 0.0
        %632 = vmatprep.subr.mxu0 0.0
        %633 = vmatpush2.msra.mxu0 0.0
        %634 = vmatprep.subr.mxu0 0.0
        %635 = vmatpush2.msra.mxu0 0.0
        %636 = vmatprep.subr.mxu0 0.0
        %637 = vmatpush2.msra.mxu0 0.0
        %638 = vmatprep.mubr.f32.mxu0 0.0
        %v639 = vand.u32 %v310, 4294901760
        %640 = vmatmul.mubr.f32.gmra.mxu0 %v639
        %v641 = vpop.f32.mrf.mxu0
        %v642 = vadd.f32 %v417, %v641
        %v643 = vpop.f32.mrf.mxu0
        %v644 = vadd.f32 %v419, %v643
        %645 = vmatprep.mubr.f32.mxu0 0.0
        %v646 = vand.u32 %v313, 4294901760
        %647 = vmatmul.mubr.f32.gmra.mxu0 %v646
        %v648 = vpop.f32.mrf.mxu0
        %v649 = vadd.f32 %v428, %v648
        %v650 = vpop.f32.mrf.mxu0
        %v651 = vadd.f32 %v430, %v650
        %652 = vmatprep.mubr.f32.mxu0 0.0
        %v653 = vand.u32 %v316, 4294901760
        %654 = vmatmul.mubr.f32.gmra.mxu0 %v653
        %v655 = vpop.f32.mrf.mxu0
        %v656 = vadd.f32 %v439, %v655
        %v657 = vpop.f32.mrf.mxu0
        %v658 = vadd.f32 %v441, %v657
        %659 = vmatprep.mubr.f32.mxu0 0.0
        %v660 = vand.u32 %v319, 4294901760
        %661 = vmatmul.mubr.f32.gmra.mxu0 %v660
        %v662 = vpop.f32.mrf.mxu0
        %v663 = vadd.f32 %v450, %v662
        %v664 = vpop.f32.mrf.mxu0
        %v665 = vadd.f32 %v452, %v664
        %666 = vdwg.mxu0
        %667 = vmatprep.subr.mxu0 0.0
        %668 = vmatpush1.msra.mxu0 0.0
        %669 = vmatprep.subr.mxu0 0.0
        %670 = vmatpush1.msra.mxu0 0.0
        %671 = vmatprep.subr.mxu0 0.0
        %672 = vmatpush1.msra.mxu0 0.0
        %673 = vmatprep.subr.mxu0 0.0
        %674 = vmatpush1.msra.mxu0 0.0
        %v675 = vand.u32 %v305, 4294901760
        %v676 = vsub.f32 %v305, %v675
        %677 = vmatprep.subr.mxu0 %v676
        %v678 = vand.u32 %v304, 4294901760
        %v679 = vsub.f32 %v304, %v678
        %680 = vmatpush1.msra.mxu0 %v679
        %v681 = vand.u32 %v301, 4294901760
        %v682 = vsub.f32 %v301, %v681
        %683 = vmatprep.subr.mxu0 %v682
        %v684 = vand.u32 %v300, 4294901760
        %v685 = vsub.f32 %v300, %v684
        %686 = vmatpush1.msra.mxu0 %v685
        %v687 = vand.u32 %v297, 4294901760
        %v688 = vsub.f32 %v297, %v687
        %689 = vmatprep.subr.mxu0 %v688
        %v690 = vand.u32 %v296, 4294901760
        %v691 = vsub.f32 %v296, %v690
        %692 = vmatpush1.msra.mxu0 %v691
        %v693 = vand.u32 %v293, 4294901760
        %v694 = vsub.f32 %v293, %v693
        %695 = vmatprep.subr.mxu0 %v694
        %v696 = vand.u32 %v292, 4294901760
        %v697 = vsub.f32 %v292, %v696
        %698 = vmatpush1.msra.mxu0 %v697
        %v699 = vand.u32 %v289, 4294901760
        %v700 = vsub.f32 %v289, %v699
        %701 = vmatprep.subr.mxu0 %v700
        %v702 = vand.u32 %v288, 4294901760
        %v703 = vsub.f32 %v288, %v702
        %704 = vmatpush1.msra.mxu0 %v703
        %v705 = vand.u32 %v285, 4294901760
        %v706 = vsub.f32 %v285, %v705
        %707 = vmatprep.subr.mxu0 %v706
        %v708 = vand.u32 %v284, 4294901760
        %v709 = vsub.f32 %v284, %v708
        %710 = vmatpush1.msra.mxu0 %v709
        %v711 = vand.u32 %v281, 4294901760
        %v712 = vsub.f32 %v281, %v711
        %713 = vmatprep.subr.mxu0 %v712
        %v714 = vand.u32 %v280, 4294901760
        %v715 = vsub.f32 %v280, %v714
        %716 = vmatpush1.msra.mxu0 %v715
        %v717 = vand.u32 %v277, 4294901760
        %v718 = vsub.f32 %v277, %v717
        %719 = vmatprep.subr.mxu0 %v718
        %v720 = vand.u32 %v276, 4294901760
        %v721 = vsub.f32 %v276, %v720
        %722 = vmatpush1.msra.mxu0 %v721
        %v723 = vand.u32 %v273, 4294901760
        %v724 = vsub.f32 %v273, %v723
        %725 = vmatprep.subr.mxu0 %v724
        %v726 = vand.u32 %v272, 4294901760
        %v727 = vsub.f32 %v272, %v726
        %728 = vmatpush1.msra.mxu0 %v727
        %v729 = vand.u32 %v269, 4294901760
        %v730 = vsub.f32 %v269, %v729
        %731 = vmatprep.subr.mxu0 %v730
        %v732 = vand.u32 %v268, 4294901760
        %v733 = vsub.f32 %v268, %v732
        %734 = vmatpush1.msra.mxu0 %v733
        %v735 = vand.u32 %v265, 4294901760
        %v736 = vsub.f32 %v265, %v735
        %737 = vmatprep.subr.mxu0 %v736
        %v738 = vand.u32 %v264, 4294901760
        %v739 = vsub.f32 %v264, %v738
        %740 = vmatpush1.msra.mxu0 %v739
        %v741 = vand.u32 %v261, 4294901760
        %v742 = vsub.f32 %v261, %v741
        %743 = vmatprep.subr.mxu0 %v742
        %v744 = vand.u32 %v260, 4294901760
        %v745 = vsub.f32 %v260, %v744
        %746 = vmatpush1.msra.mxu0 %v745
        %747 = vmatprep.subr.mxu0 0.0
        %748 = vmatpush2.msra.mxu0 0.0
        %749 = vmatprep.subr.mxu0 0.0
        %750 = vmatpush2.msra.mxu0 0.0
        %751 = vmatprep.subr.mxu0 0.0
        %752 = vmatpush2.msra.mxu0 0.0
        %753 = vmatprep.subr.mxu0 0.0
        %754 = vmatpush2.msra.mxu0 0.0
        %755 = vmatprep.subr.mxu0 0.0
        %756 = vmatpush2.msra.mxu0 0.0
        %757 = vmatprep.subr.mxu0 0.0
        %758 = vmatpush2.msra.mxu0 0.0
        %759 = vmatprep.subr.mxu0 0.0
        %760 = vmatpush2.msra.mxu0 0.0
        %761 = vmatprep.subr.mxu0 0.0
        %762 = vmatpush2.msra.mxu0 0.0
        %763 = vmatprep.subr.mxu0 0.0
        %764 = vmatpush2.msra.mxu0 0.0
        %765 = vmatprep.subr.mxu0 0.0
        %766 = vmatpush2.msra.mxu0 0.0
        %767 = vmatprep.subr.mxu0 0.0
        %768 = vmatpush2.msra.mxu0 0.0
        %769 = vmatprep.subr.mxu0 0.0
        %770 = vmatpush2.msra.mxu0 0.0
        %771 = vmatprep.subr.mxu0 0.0
        %772 = vmatpush2.msra.mxu0 0.0
        %773 = vmatprep.subr.mxu0 0.0
        %774 = vmatpush2.msra.mxu0 0.0
        %775 = vmatprep.subr.mxu0 0.0
        %776 = vmatpush2.msra.mxu0 0.0
        %777 = vmatprep.subr.mxu0 0.0
        %778 = vmatpush2.msra.mxu0 0.0
        %779 = vmatprep.mubr.f32.mxu0 0.0
        %v780 = vand.u32 %v310, 4294901760
        %v781 = vsub.f32 %v310, %v780
        %782 = vmatmul.mubr.f32.gmra.mxu0 %v781
        %v783 = vpop.f32.mrf.mxu0
        %v784 = vadd.f32 %v642, %v783
        %v785 = vpop.f32.mrf.mxu0
        %v786 = vadd.f32 %v644, %v785
        %787 = vmatprep.mubr.f32.mxu0 0.0
        %v788 = vand.u32 %v313, 4294901760
        %v789 = vsub.f32 %v313, %v788
        %790 = vmatmul.mubr.f32.gmra.mxu0 %v789
        %v791 = vpop.f32.mrf.mxu0
        %v792 = vadd.f32 %v649, %v791
        %v793 = vpop.f32.mrf.mxu0
        %v794 = vadd.f32 %v651, %v793
        %795 = vmatprep.mubr.f32.mxu0 0.0
        %v796 = vand.u32 %v316, 4294901760
        %v797 = vsub.f32 %v316, %v796
        %798 = vmatmul.mubr.f32.gmra.mxu0 %v797
        %v799 = vpop.f32.mrf.mxu0
        %v800 = vadd.f32 %v656, %v799
        %v801 = vpop.f32.mrf.mxu0
        %v802 = vadd.f32 %v658, %v801
        %803 = vmatprep.mubr.f32.mxu0 0.0
        %v804 = vand.u32 %v319, 4294901760
        %v805 = vsub.f32 %v319, %v804
        %806 = vmatmul.mubr.f32.gmra.mxu0 %v805
        %v807 = vpop.f32.mrf.mxu0
        %v808 = vadd.f32 %v663, %v807
        %v809 = vpop.f32.mrf.mxu0
        %v810 = vadd.f32 %v665, %v809
        %811 = vdwg.mxu0
        %812 = vmatprep.subr.mxu0 0.0
        %813 = vmatpush1.msra.mxu0 0.0
        %814 = vmatprep.subr.mxu0 0.0
        %815 = vmatpush1.msra.mxu0 0.0
        %816 = vmatprep.subr.mxu0 0.0
        %817 = vmatpush1.msra.mxu0 0.0
        %818 = vmatprep.subr.mxu0 0.0
        %819 = vmatpush1.msra.mxu0 0.0
        %v820 = vand.u32 %v305, 4294901760
        %821 = vmatprep.subr.mxu0 %v820
        %v822 = vand.u32 %v304, 4294901760
        %823 = vmatpush1.msra.mxu0 %v822
        %v824 = vand.u32 %v301, 4294901760
        %825 = vmatprep.subr.mxu0 %v824
        %v826 = vand.u32 %v300, 4294901760
        %827 = vmatpush1.msra.mxu0 %v826
        %v828 = vand.u32 %v297, 4294901760
        %829 = vmatprep.subr.mxu0 %v828
        %v830 = vand.u32 %v296, 4294901760
        %831 = vmatpush1.msra.mxu0 %v830
        %v832 = vand.u32 %v293, 4294901760
        %833 = vmatprep.subr.mxu0 %v832
        %v834 = vand.u32 %v292, 4294901760
        %835 = vmatpush1.msra.mxu0 %v834
        %v836 = vand.u32 %v289, 4294901760
        %837 = vmatprep.subr.mxu0 %v836
        %v838 = vand.u32 %v288, 4294901760
        %839 = vmatpush1.msra.mxu0 %v838
        %v840 = vand.u32 %v285, 4294901760
        %841 = vmatprep.subr.mxu0 %v840
        %v842 = vand.u32 %v284, 4294901760
        %843 = vmatpush1.msra.mxu0 %v842
        %v844 = vand.u32 %v281, 4294901760
        %845 = vmatprep.subr.mxu0 %v844
        %v846 = vand.u32 %v280, 4294901760
        %847 = vmatpush1.msra.mxu0 %v846
        %v848 = vand.u32 %v277, 4294901760
        %849 = vmatprep.subr.mxu0 %v848
        %v850 = vand.u32 %v276, 4294901760
        %851 = vmatpush1.msra.mxu0 %v850
        %v852 = vand.u32 %v273, 4294901760
        %853 = vmatprep.subr.mxu0 %v852
        %v854 = vand.u32 %v272, 4294901760
        %855 = vmatpush1.msra.mxu0 %v854
        %v856 = vand.u32 %v269, 4294901760
        %857 = vmatprep.subr.mxu0 %v856
        %v858 = vand.u32 %v268, 4294901760
        %859 = vmatpush1.msra.mxu0 %v858
        %v860 = vand.u32 %v265, 4294901760
        %861 = vmatprep.subr.mxu0 %v860
        %v862 = vand.u32 %v264, 4294901760
        %863 = vmatpush1.msra.mxu0 %v862
        %v864 = vand.u32 %v261, 4294901760
        %865 = vmatprep.subr.mxu0 %v864
        %v866 = vand.u32 %v260, 4294901760
        %867 = vmatpush1.msra.mxu0 %v866
        %868 = vmatprep.subr.mxu0 0.0
        %869 = vmatpush2.msra.mxu0 0.0
        %870 = vmatprep.subr.mxu0 0.0
        %871 = vmatpush2.msra.mxu0 0.0
        %872 = vmatprep.subr.mxu0 0.0
        %873 = vmatpush2.msra.mxu0 0.0
        %874 = vmatprep.subr.mxu0 0.0
        %875 = vmatpush2.msra.mxu0 0.0
        %876 = vmatprep.subr.mxu0 0.0
        %877 = vmatpush2.msra.mxu0 0.0
        %878 = vmatprep.subr.mxu0 0.0
        %879 = vmatpush2.msra.mxu0 0.0
        %880 = vmatprep.subr.mxu0 0.0
        %881 = vmatpush2.msra.mxu0 0.0
        %882 = vmatprep.subr.mxu0 0.0
        %883 = vmatpush2.msra.mxu0 0.0
        %884 = vmatprep.subr.mxu0 0.0
        %885 = vmatpush2.msra.mxu0 0.0
        %886 = vmatprep.subr.mxu0 0.0
        %887 = vmatpush2.msra.mxu0 0.0
        %888 = vmatprep.subr.mxu0 0.0
        %889 = vmatpush2.msra.mxu0 0.0
        %890 = vmatprep.subr.mxu0 0.0
        %891 = vmatpush2.msra.mxu0 0.0
        %892 = vmatprep.subr.mxu0 0.0
        %893 = vmatpush2.msra.mxu0 0.0
        %894 = vmatprep.subr.mxu0 0.0
        %895 = vmatpush2.msra.mxu0 0.0
        %896 = vmatprep.subr.mxu0 0.0
        %897 = vmatpush2.msra.mxu0 0.0
        %898 = vmatprep.subr.mxu0 0.0
        %899 = vmatpush2.msra.mxu0 0.0
        %900 = vmatprep.mubr.f32.mxu0 0.0
        %v901 = vand.u32 %v310, 4294901760
        %v902 = vsub.f32 %v310, %v901
        %v903 = vand.u32 %v902, 4294901760
        %904 = vmatmul.mubr.f32.gmra.mxu0 %v903
        %v905 = vpop.f32.mrf.mxu0
        %v906 = vadd.f32 %v784, %v905
        %v907 = vpop.f32.mrf.mxu0
        %v908 = vadd.f32 %v786, %v907
        %909 = vmatprep.mubr.f32.mxu0 0.0
        %v910 = vand.u32 %v313, 4294901760
        %v911 = vsub.f32 %v313, %v910
        %v912 = vand.u32 %v911, 4294901760
        %913 = vmatmul.mubr.f32.gmra.mxu0 %v912
        %v914 = vpop.f32.mrf.mxu0
        %v915 = vadd.f32 %v792, %v914
        %v916 = vpop.f32.mrf.mxu0
        %v917 = vadd.f32 %v794, %v916
        %918 = vmatprep.mubr.f32.mxu0 0.0
        %v919 = vand.u32 %v316, 4294901760
        %v920 = vsub.f32 %v316, %v919
        %v921 = vand.u32 %v920, 4294901760
        %922 = vmatmul.mubr.f32.gmra.mxu0 %v921
        %v923 = vpop.f32.mrf.mxu0
        %v924 = vadd.f32 %v800, %v923
        %v925 = vpop.f32.mrf.mxu0
        %v926 = vadd.f32 %v802, %v925
        %927 = vmatprep.mubr.f32.mxu0 0.0
        %v928 = vand.u32 %v319, 4294901760
        %v929 = vsub.f32 %v319, %v928
        %v930 = vand.u32 %v929, 4294901760
        %931 = vmatmul.mubr.f32.gmra.mxu0 %v930
        %v932 = vpop.f32.mrf.mxu0
        %v933 = vadd.f32 %v808, %v932
        %v934 = vpop.f32.mrf.mxu0
        %v935 = vadd.f32 %v810, %v934
        %936 = vdwg.mxu0
        %937 = vmatprep.subr.mxu0 0.0
        %938 = vmatpush1.msra.mxu0 0.0
        %939 = vmatprep.subr.mxu0 0.0
        %940 = vmatpush1.msra.mxu0 0.0
        %941 = vmatprep.subr.mxu0 0.0
        %942 = vmatpush1.msra.mxu0 0.0
        %943 = vmatprep.subr.mxu0 0.0
        %944 = vmatpush1.msra.mxu0 0.0
        %v945 = vand.u32 %v305, 4294901760
        %v946 = vsub.f32 %v305, %v945
        %v947 = vand.u32 %v946, 4294901760
        %948 = vmatprep.subr.mxu0 %v947
        %v949 = vand.u32 %v304, 4294901760
        %v950 = vsub.f32 %v304, %v949
        %v951 = vand.u32 %v950, 4294901760
        %952 = vmatpush1.msra.mxu0 %v951
        %v953 = vand.u32 %v301, 4294901760
        %v954 = vsub.f32 %v301, %v953
        %v955 = vand.u32 %v954, 4294901760
        %956 = vmatprep.subr.mxu0 %v955
        %v957 = vand.u32 %v300, 4294901760
        %v958 = vsub.f32 %v300, %v957
        %v959 = vand.u32 %v958, 4294901760
        %960 = vmatpush1.msra.mxu0 %v959
        %v961 = vand.u32 %v297, 4294901760
        %v962 = vsub.f32 %v297, %v961
        %v963 = vand.u32 %v962, 4294901760
        %964 = vmatprep.subr.mxu0 %v963
        %v965 = vand.u32 %v296, 4294901760
        %v966 = vsub.f32 %v296, %v965
        %v967 = vand.u32 %v966, 4294901760
        %968 = vmatpush1.msra.mxu0 %v967
        %v969 = vand.u32 %v293, 4294901760
        %v970 = vsub.f32 %v293, %v969
        %v971 = vand.u32 %v970, 4294901760
        %972 = vmatprep.subr.mxu0 %v971
        %v973 = vand.u32 %v292, 4294901760
        %v974 = vsub.f32 %v292, %v973
        %v975 = vand.u32 %v974, 4294901760
        %976 = vmatpush1.msra.mxu0 %v975
        %v977 = vand.u32 %v289, 4294901760
        %v978 = vsub.f32 %v289, %v977
        %v979 = vand.u32 %v978, 4294901760
        %980 = vmatprep.subr.mxu0 %v979
        %v981 = vand.u32 %v288, 4294901760
        %v982 = vsub.f32 %v288, %v981
        %v983 = vand.u32 %v982, 4294901760
        %984 = vmatpush1.msra.mxu0 %v983
        %v985 = vand.u32 %v285, 4294901760
        %v986 = vsub.f32 %v285, %v985
        %v987 = vand.u32 %v986, 4294901760
        %988 = vmatprep.subr.mxu0 %v987
        %v989 = vand.u32 %v284, 4294901760
        %v990 = vsub.f32 %v284, %v989
        %v991 = vand.u32 %v990, 4294901760
        %992 = vmatpush1.msra.mxu0 %v991
        %v993 = vand.u32 %v281, 4294901760
        %v994 = vsub.f32 %v281, %v993
        %v995 = vand.u32 %v994, 4294901760
        %996 = vmatprep.subr.mxu0 %v995
        %v997 = vand.u32 %v280, 4294901760
        %v998 = vsub.f32 %v280, %v997
        %v999 = vand.u32 %v998, 4294901760
        %1000 = vmatpush1.msra.mxu0 %v999
        %v1001 = vand.u32 %v277, 4294901760
        %v1002 = vsub.f32 %v277, %v1001
        %v1003 = vand.u32 %v1002, 4294901760
        %1004 = vmatprep.subr.mxu0 %v1003
        %v1005 = vand.u32 %v276, 4294901760
        %v1006 = vsub.f32 %v276, %v1005
        %v1007 = vand.u32 %v1006, 4294901760
        %1008 = vmatpush1.msra.mxu0 %v1007
        %v1009 = vand.u32 %v273, 4294901760
        %v1010 = vsub.f32 %v273, %v1009
        %v1011 = vand.u32 %v1010, 4294901760
        %1012 = vmatprep.subr.mxu0 %v1011
        %v1013 = vand.u32 %v272, 4294901760
        %v1014 = vsub.f32 %v272, %v1013
        %v1015 = vand.u32 %v1014, 4294901760
        %1016 = vmatpush1.msra.mxu0 %v1015
        %v1017 = vand.u32 %v269, 4294901760
        %v1018 = vsub.f32 %v269, %v1017
        %v1019 = vand.u32 %v1018, 4294901760
        %1020 = vmatprep.subr.mxu0 %v1019
        %v1021 = vand.u32 %v268, 4294901760
        %v1022 = vsub.f32 %v268, %v1021
        %v1023 = vand.u32 %v1022, 4294901760
        %1024 = vmatpush1.msra.mxu0 %v1023
        %v1025 = vand.u32 %v265, 4294901760
        %v1026 = vsub.f32 %v265, %v1025
        %v1027 = vand.u32 %v1026, 4294901760
        %1028 = vmatprep.subr.mxu0 %v1027
        %v1029 = vand.u32 %v264, 4294901760
        %v1030 = vsub.f32 %v264, %v1029
        %v1031 = vand.u32 %v1030, 4294901760
        %1032 = vmatpush1.msra.mxu0 %v1031
        %v1033 = vand.u32 %v261, 4294901760
        %v1034 = vsub.f32 %v261, %v1033
        %v1035 = vand.u32 %v1034, 4294901760
        %1036 = vmatprep.subr.mxu0 %v1035
        %v1037 = vand.u32 %v260, 4294901760
        %v1038 = vsub.f32 %v260, %v1037
        %v1039 = vand.u32 %v1038, 4294901760
        %1040 = vmatpush1.msra.mxu0 %v1039
        %1041 = vmatprep.subr.mxu0 0.0
        %1042 = vmatpush2.msra.mxu0 0.0
        %1043 = vmatprep.subr.mxu0 0.0
        %1044 = vmatpush2.msra.mxu0 0.0
        %1045 = vmatprep.subr.mxu0 0.0
        %1046 = vmatpush2.msra.mxu0 0.0
        %1047 = vmatprep.subr.mxu0 0.0
        %1048 = vmatpush2.msra.mxu0 0.0
        %1049 = vmatprep.subr.mxu0 0.0
        %1050 = vmatpush2.msra.mxu0 0.0
        %1051 = vmatprep.subr.mxu0 0.0
        %1052 = vmatpush2.msra.mxu0 0.0
        %1053 = vmatprep.subr.mxu0 0.0
        %1054 = vmatpush2.msra.mxu0 0.0
        %1055 = vmatprep.subr.mxu0 0.0
        %1056 = vmatpush2.msra.mxu0 0.0
        %1057 = vmatprep.subr.mxu0 0.0
        %1058 = vmatpush2.msra.mxu0 0.0
        %1059 = vmatprep.subr.mxu0 0.0
        %1060 = vmatpush2.msra.mxu0 0.0
        %1061 = vmatprep.subr.mxu0 0.0
        %1062 = vmatpush2.msra.mxu0 0.0
        %1063 = vmatprep.subr.mxu0 0.0
        %1064 = vmatpush2.msra.mxu0 0.0
        %1065 = vmatprep.subr.mxu0 0.0
        %1066 = vmatpush2.msra.mxu0 0.0
        %1067 = vmatprep.subr.mxu0 0.0
        %1068 = vmatpush2.msra.mxu0 0.0
        %1069 = vmatprep.subr.mxu0 0.0
        %1070 = vmatpush2.msra.mxu0 0.0
        %1071 = vmatprep.subr.mxu0 0.0
        %1072 = vmatpush2.msra.mxu0 0.0
        %1073 = vmatprep.mubr.f32.mxu0 0.0
        %v1074 = vand.u32 %v310, 4294901760
        %1075 = vmatmul.mubr.f32.gmra.mxu0 %v1074
        %v1076 = vpop.f32.mrf.mxu0
        %v1077 = vadd.f32 %v906, %v1076
        %v1078 = vpop.f32.mrf.mxu0
        %v1079 = vadd.f32 %v908, %v1078
        %1080 = vmatprep.mubr.f32.mxu0 0.0
        %v1081 = vand.u32 %v313, 4294901760
        %1082 = vmatmul.mubr.f32.gmra.mxu0 %v1081
        %v1083 = vpop.f32.mrf.mxu0
        %v1084 = vadd.f32 %v915, %v1083
        %v1085 = vpop.f32.mrf.mxu0
        %v1086 = vadd.f32 %v917, %v1085
        %1087 = vmatprep.mubr.f32.mxu0 0.0
        %v1088 = vand.u32 %v316, 4294901760
        %1089 = vmatmul.mubr.f32.gmra.mxu0 %v1088
        %v1090 = vpop.f32.mrf.mxu0
        %v1091 = vadd.f32 %v924, %v1090
        %v1092 = vpop.f32.mrf.mxu0
        %v1093 = vadd.f32 %v926, %v1092
        %1094 = vmatprep.mubr.f32.mxu0 0.0
        %v1095 = vand.u32 %v319, 4294901760
        %1096 = vmatmul.mubr.f32.gmra.mxu0 %v1095
        %v1097 = vpop.f32.mrf.mxu0
        %v1098 = vadd.f32 %v933, %v1097
        %v1099 = vpop.f32.mrf.mxu0
        %v1100 = vadd.f32 %v935, %v1099
        %1101 = vdwg.mxu0
        %1102 = vmatprep.subr.mxu0 0.0
        %1103 = vmatpush1.msra.mxu0 0.0
        %1104 = vmatprep.subr.mxu0 0.0
        %1105 = vmatpush1.msra.mxu0 0.0
        %1106 = vmatprep.subr.mxu0 0.0
        %1107 = vmatpush1.msra.mxu0 0.0
        %1108 = vmatprep.subr.mxu0 0.0
        %1109 = vmatpush1.msra.mxu0 0.0
        %v1110 = vand.u32 %v305, 4294901760
        %1111 = vmatprep.subr.mxu0 %v1110
        %v1112 = vand.u32 %v304, 4294901760
        %1113 = vmatpush1.msra.mxu0 %v1112
        %v1114 = vand.u32 %v301, 4294901760
        %1115 = vmatprep.subr.mxu0 %v1114
        %v1116 = vand.u32 %v300, 4294901760
        %1117 = vmatpush1.msra.mxu0 %v1116
        %v1118 = vand.u32 %v297, 4294901760
        %1119 = vmatprep.subr.mxu0 %v1118
        %v1120 = vand.u32 %v296, 4294901760
        %1121 = vmatpush1.msra.mxu0 %v1120
        %v1122 = vand.u32 %v293, 4294901760
        %1123 = vmatprep.subr.mxu0 %v1122
        %v1124 = vand.u32 %v292, 4294901760
        %1125 = vmatpush1.msra.mxu0 %v1124
        %v1126 = vand.u32 %v289, 4294901760
        %1127 = vmatprep.subr.mxu0 %v1126
        %v1128 = vand.u32 %v288, 4294901760
        %1129 = vmatpush1.msra.mxu0 %v1128
        %v1130 = vand.u32 %v285, 4294901760
        %1131 = vmatprep.subr.mxu0 %v1130
        %v1132 = vand.u32 %v284, 4294901760
        %1133 = vmatpush1.msra.mxu0 %v1132
        %v1134 = vand.u32 %v281, 4294901760
        %1135 = vmatprep.subr.mxu0 %v1134
        %v1136 = vand.u32 %v280, 4294901760
        %1137 = vmatpush1.msra.mxu0 %v1136
        %v1138 = vand.u32 %v277, 4294901760
        %1139 = vmatprep.subr.mxu0 %v1138
        %v1140 = vand.u32 %v276, 4294901760
        %1141 = vmatpush1.msra.mxu0 %v1140
        %v1142 = vand.u32 %v273, 4294901760
        %1143 = vmatprep.subr.mxu0 %v1142
        %v1144 = vand.u32 %v272, 4294901760
        %1145 = vmatpush1.msra.mxu0 %v1144
        %v1146 = vand.u32 %v269, 4294901760
        %1147 = vmatprep.subr.mxu0 %v1146
        %v1148 = vand.u32 %v268, 4294901760
        %1149 = vmatpush1.msra.mxu0 %v1148
        %v1150 = vand.u32 %v265, 4294901760
        %1151 = vmatprep.subr.mxu0 %v1150
        %v1152 = vand.u32 %v264, 4294901760
        %1153 = vmatpush1.msra.mxu0 %v1152
        %v1154 = vand.u32 %v261, 4294901760
        %1155 = vmatprep.subr.mxu0 %v1154
        %v1156 = vand.u32 %v260, 4294901760
        %1157 = vmatpush1.msra.mxu0 %v1156
        %1158 = vmatprep.subr.mxu0 0.0
        %1159 = vmatpush2.msra.mxu0 0.0
        %1160 = vmatprep.subr.mxu0 0.0
        %1161 = vmatpush2.msra.mxu0 0.0
        %1162 = vmatprep.subr.mxu0 0.0
        %1163 = vmatpush2.msra.mxu0 0.0
        %1164 = vmatprep.subr.mxu0 0.0
        %1165 = vmatpush2.msra.mxu0 0.0
        %1166 = vmatprep.subr.mxu0 0.0
        %1167 = vmatpush2.msra.mxu0 0.0
        %1168 = vmatprep.subr.mxu0 0.0
        %1169 = vmatpush2.msra.mxu0 0.0
        %1170 = vmatprep.subr.mxu0 0.0
        %1171 = vmatpush2.msra.mxu0 0.0
        %1172 = vmatprep.subr.mxu0 0.0
        %1173 = vmatpush2.msra.mxu0 0.0
        %1174 = vmatprep.subr.mxu0 0.0
        %1175 = vmatpush2.msra.mxu0 0.0
        %1176 = vmatprep.subr.mxu0 0.0
        %1177 = vmatpush2.msra.mxu0 0.0
        %1178 = vmatprep.subr.mxu0 0.0
        %1179 = vmatpush2.msra.mxu0 0.0
        %1180 = vmatprep.subr.mxu0 0.0
        %1181 = vmatpush2.msra.mxu0 0.0
        %1182 = vmatprep.subr.mxu0 0.0
        %1183 = vmatpush2.msra.mxu0 0.0
        %1184 = vmatprep.subr.mxu0 0.0
        %1185 = vmatpush2.msra.mxu0 0.0
        %1186 = vmatprep.subr.mxu0 0.0
        %1187 = vmatpush2.msra.mxu0 0.0
        %1188 = vmatprep.subr.mxu0 0.0
        %1189 = vmatpush2.msra.mxu0 0.0
        %1190 = vmatprep.mubr.f32.mxu0 0.0
        %v1191 = vand.u32 %v310, 4294901760
        %1192 = vmatmul.mubr.f32.gmra.mxu0 %v1191
        %v1193 = vpop.f32.mrf.mxu0
        %v1194 = vadd.f32 %v1077, %v1193
        %v1195 = vpop.f32.mrf.mxu0
        %v1196 = vadd.f32 %v1079, %v1195
        %1197 = vmatprep.mubr.f32.mxu0 0.0
        %v1198 = vand.u32 %v313, 4294901760
        %1199 = vmatmul.mubr.f32.gmra.mxu0 %v1198
        %v1200 = vpop.f32.mrf.mxu0
        %v1201 = vadd.f32 %v1084, %v1200
        %v1202 = vpop.f32.mrf.mxu0
        %v1203 = vadd.f32 %v1086, %v1202
        %1204 = vmatprep.mubr.f32.mxu0 0.0
        %v1205 = vand.u32 %v316, 4294901760
        %1206 = vmatmul.mubr.f32.gmra.mxu0 %v1205
        %v1207 = vpop.f32.mrf.mxu0
        %v1208 = vadd.f32 %v1091, %v1207
        %v1209 = vpop.f32.mrf.mxu0
        %v1210 = vadd.f32 %v1093, %v1209
        %1211 = vmatprep.mubr.f32.mxu0 0.0
        %v1212 = vand.u32 %v319, 4294901760
        %1213 = vmatmul.mubr.f32.gmra.mxu0 %v1212
        %v1214 = vpop.f32.mrf.mxu0
        %v1215 = vadd.f32 %v1098, %v1214
        %v1216 = vpop.f32.mrf.mxu0
        %v1217 = vadd.f32 %v1100, %v1216
        %1218 = vdwg.mxu0
        %1219 = vmatprep.subr.mxu0 0.0
        %1220 = vmatpush1.msra.mxu0 0.0
        %1221 = vmatprep.subr.mxu0 0.0
        %1222 = vmatpush1.msra.mxu0 0.0
        %1223 = vmatprep.subr.mxu0 0.0
        %1224 = vmatpush1.msra.mxu0 0.0
        %1225 = vmatprep.subr.mxu0 0.0
        %1226 = vmatpush1.msra.mxu0 0.0
        %v1227 = vand.u32 %v307, 4294901760
        %1228 = vmatprep.subr.mxu0 %v1227
        %v1229 = vand.u32 %v306, 4294901760
        %1230 = vmatpush1.msra.mxu0 %v1229
        %v1231 = vand.u32 %v303, 4294901760
        %1232 = vmatprep.subr.mxu0 %v1231
        %v1233 = vand.u32 %v302, 4294901760
        %1234 = vmatpush1.msra.mxu0 %v1233
        %v1235 = vand.u32 %v299, 4294901760
        %1236 = vmatprep.subr.mxu0 %v1235
        %v1237 = vand.u32 %v298, 4294901760
        %1238 = vmatpush1.msra.mxu0 %v1237
        %v1239 = vand.u32 %v295, 4294901760
        %1240 = vmatprep.subr.mxu0 %v1239
        %v1241 = vand.u32 %v294, 4294901760
        %1242 = vmatpush1.msra.mxu0 %v1241
        %v1243 = vand.u32 %v291, 4294901760
        %1244 = vmatprep.subr.mxu0 %v1243
        %v1245 = vand.u32 %v290, 4294901760
        %1246 = vmatpush1.msra.mxu0 %v1245
        %v1247 = vand.u32 %v287, 4294901760
        %1248 = vmatprep.subr.mxu0 %v1247
        %v1249 = vand.u32 %v286, 4294901760
        %1250 = vmatpush1.msra.mxu0 %v1249
        %v1251 = vand.u32 %v283, 4294901760
        %1252 = vmatprep.subr.mxu0 %v1251
        %v1253 = vand.u32 %v282, 4294901760
        %1254 = vmatpush1.msra.mxu0 %v1253
        %v1255 = vand.u32 %v279, 4294901760
        %1256 = vmatprep.subr.mxu0 %v1255
        %v1257 = vand.u32 %v278, 4294901760
        %1258 = vmatpush1.msra.mxu0 %v1257
        %v1259 = vand.u32 %v275, 4294901760
        %1260 = vmatprep.subr.mxu0 %v1259
        %v1261 = vand.u32 %v274, 4294901760
        %1262 = vmatpush1.msra.mxu0 %v1261
        %v1263 = vand.u32 %v271, 4294901760
        %1264 = vmatprep.subr.mxu0 %v1263
        %v1265 = vand.u32 %v270, 4294901760
        %1266 = vmatpush1.msra.mxu0 %v1265
        %v1267 = vand.u32 %v267, 4294901760
        %1268 = vmatprep.subr.mxu0 %v1267
        %v1269 = vand.u32 %v266, 4294901760
        %1270 = vmatpush1.msra.mxu0 %v1269
        %v1271 = vand.u32 %v263, 4294901760
        %1272 = vmatprep.subr.mxu0 %v1271
        %v1273 = vand.u32 %v262, 4294901760
        %1274 = vmatpush1.msra.mxu0 %v1273
        %1275 = vmatprep.subr.mxu0 0.0
        %1276 = vmatpush2.msra.mxu0 0.0
        %1277 = vmatprep.subr.mxu0 0.0
        %1278 = vmatpush2.msra.mxu0 0.0
        %1279 = vmatprep.subr.mxu0 0.0
        %1280 = vmatpush2.msra.mxu0 0.0
        %1281 = vmatprep.subr.mxu0 0.0
        %1282 = vmatpush2.msra.mxu0 0.0
        %1283 = vmatprep.subr.mxu0 0.0
        %1284 = vmatpush2.msra.mxu0 0.0
        %1285 = vmatprep.subr.mxu0 0.0
        %1286 = vmatpush2.msra.mxu0 0.0
        %1287 = vmatprep.subr.mxu0 0.0
        %1288 = vmatpush2.msra.mxu0 0.0
        %1289 = vmatprep.subr.mxu0 0.0
        %1290 = vmatpush2.msra.mxu0 0.0
        %1291 = vmatprep.subr.mxu0 0.0
        %1292 = vmatpush2.msra.mxu0 0.0
        %1293 = vmatprep.subr.mxu0 0.0
        %1294 = vmatpush2.msra.mxu0 0.0
        %1295 = vmatprep.subr.mxu0 0.0
        %1296 = vmatpush2.msra.mxu0 0.0
        %1297 = vmatprep.subr.mxu0 0.0
        %1298 = vmatpush2.msra.mxu0 0.0
        %1299 = vmatprep.subr.mxu0 0.0
        %1300 = vmatpush2.msra.mxu0 0.0
        %1301 = vmatprep.subr.mxu0 0.0
        %1302 = vmatpush2.msra.mxu0 0.0
        %1303 = vmatprep.subr.mxu0 0.0
        %1304 = vmatpush2.msra.mxu0 0.0
        %1305 = vmatprep.subr.mxu0 0.0
        %1306 = vmatpush2.msra.mxu0 0.0
        %1307 = vmatprep.mubr.f32.mxu0 0.0
        %v1308 = vand.u32 %v310, 4294901760
        %v1309 = vsub.f32 %v310, %v1308
        %v1310 = vand.u32 %v1309, 4294901760
        %v1311 = vsub.f32 %v1309, %v1310
        %v1312 = vand.u32 %v1311, 4294901760
        %1313 = vmatmul.mubr.f32.gmra.mxu0 %v1312
        %v1314 = vpop.f32.mrf.mxu0
        %v1315 = vadd.f32 0.0, %v1314
        %v1316 = vpop.f32.mrf.mxu0
        %v1317 = vadd.f32 0.0, %v1316
        %1318 = vmatprep.mubr.f32.mxu0 0.0
        %v1319 = vand.u32 %v313, 4294901760
        %v1320 = vsub.f32 %v313, %v1319
        %v1321 = vand.u32 %v1320, 4294901760
        %v1322 = vsub.f32 %v1320, %v1321
        %v1323 = vand.u32 %v1322, 4294901760
        %1324 = vmatmul.mubr.f32.gmra.mxu0 %v1323
        %v1325 = vpop.f32.mrf.mxu0
        %v1326 = vadd.f32 0.0, %v1325
        %v1327 = vpop.f32.mrf.mxu0
        %v1328 = vadd.f32 0.0, %v1327
        %1329 = vmatprep.mubr.f32.mxu0 0.0
        %v1330 = vand.u32 %v316, 4294901760
        %v1331 = vsub.f32 %v316, %v1330
        %v1332 = vand.u32 %v1331, 4294901760
        %v1333 = vsub.f32 %v1331, %v1332
        %v1334 = vand.u32 %v1333, 4294901760
        %1335 = vmatmul.mubr.f32.gmra.mxu0 %v1334
        %v1336 = vpop.f32.mrf.mxu0
        %v1337 = vadd.f32 0.0, %v1336
        %v1338 = vpop.f32.mrf.mxu0
        %v1339 = vadd.f32 0.0, %v1338
        %1340 = vmatprep.mubr.f32.mxu0 0.0
        %v1341 = vand.u32 %v319, 4294901760
        %v1342 = vsub.f32 %v319, %v1341
        %v1343 = vand.u32 %v1342, 4294901760
        %v1344 = vsub.f32 %v1342, %v1343
        %v1345 = vand.u32 %v1344, 4294901760
        %1346 = vmatmul.mubr.f32.gmra.mxu0 %v1345
        %v1347 = vpop.f32.mrf.mxu0
        %v1348 = vadd.f32 0.0, %v1347
        %v1349 = vpop.f32.mrf.mxu0
        %v1350 = vadd.f32 0.0, %v1349
        %1351 = vdwg.mxu0
        %1352 = vmatprep.subr.mxu0 0.0
        %1353 = vmatpush1.msra.mxu0 0.0
        %1354 = vmatprep.subr.mxu0 0.0
        %1355 = vmatpush1.msra.mxu0 0.0
        %1356 = vmatprep.subr.mxu0 0.0
        %1357 = vmatpush1.msra.mxu0 0.0
        %1358 = vmatprep.subr.mxu0 0.0
        %1359 = vmatpush1.msra.mxu0 0.0
        %v1360 = vand.u32 %v307, 4294901760
        %v1361 = vsub.f32 %v307, %v1360
        %v1362 = vand.u32 %v1361, 4294901760
        %v1363 = vsub.f32 %v1361, %v1362
        %v1364 = vand.u32 %v1363, 4294901760
        %1365 = vmatprep.subr.mxu0 %v1364
        %v1366 = vand.u32 %v306, 4294901760
        %v1367 = vsub.f32 %v306, %v1366
        %v1368 = vand.u32 %v1367, 4294901760
        %v1369 = vsub.f32 %v1367, %v1368
        %v1370 = vand.u32 %v1369, 4294901760
        %1371 = vmatpush1.msra.mxu0 %v1370
        %v1372 = vand.u32 %v303, 4294901760
        %v1373 = vsub.f32 %v303, %v1372
        %v1374 = vand.u32 %v1373, 4294901760
        %v1375 = vsub.f32 %v1373, %v1374
        %v1376 = vand.u32 %v1375, 4294901760
        %1377 = vmatprep.subr.mxu0 %v1376
        %v1378 = vand.u32 %v302, 4294901760
        %v1379 = vsub.f32 %v302, %v1378
        %v1380 = vand.u32 %v1379, 4294901760
        %v1381 = vsub.f32 %v1379, %v1380
        %v1382 = vand.u32 %v1381, 4294901760
        %1383 = vmatpush1.msra.mxu0 %v1382
        %v1384 = vand.u32 %v299, 4294901760
        %v1385 = vsub.f32 %v299, %v1384
        %v1386 = vand.u32 %v1385, 4294901760
        %v1387 = vsub.f32 %v1385, %v1386
        %v1388 = vand.u32 %v1387, 4294901760
        %1389 = vmatprep.subr.mxu0 %v1388
        %v1390 = vand.u32 %v298, 4294901760
        %v1391 = vsub.f32 %v298, %v1390
        %v1392 = vand.u32 %v1391, 4294901760
        %v1393 = vsub.f32 %v1391, %v1392
        %v1394 = vand.u32 %v1393, 4294901760
        %1395 = vmatpush1.msra.mxu0 %v1394
        %v1396 = vand.u32 %v295, 4294901760
        %v1397 = vsub.f32 %v295, %v1396
        %v1398 = vand.u32 %v1397, 4294901760
        %v1399 = vsub.f32 %v1397, %v1398
        %v1400 = vand.u32 %v1399, 4294901760
        %1401 = vmatprep.subr.mxu0 %v1400
        %v1402 = vand.u32 %v294, 4294901760
        %v1403 = vsub.f32 %v294, %v1402
        %v1404 = vand.u32 %v1403, 4294901760
        %v1405 = vsub.f32 %v1403, %v1404
        %v1406 = vand.u32 %v1405, 4294901760
        %1407 = vmatpush1.msra.mxu0 %v1406
        %v1408 = vand.u32 %v291, 4294901760
        %v1409 = vsub.f32 %v291, %v1408
        %v1410 = vand.u32 %v1409, 4294901760
        %v1411 = vsub.f32 %v1409, %v1410
        %v1412 = vand.u32 %v1411, 4294901760
        %1413 = vmatprep.subr.mxu0 %v1412
        %v1414 = vand.u32 %v290, 4294901760
        %v1415 = vsub.f32 %v290, %v1414
        %v1416 = vand.u32 %v1415, 4294901760
        %v1417 = vsub.f32 %v1415, %v1416
        %v1418 = vand.u32 %v1417, 4294901760
        %1419 = vmatpush1.msra.mxu0 %v1418
        %v1420 = vand.u32 %v287, 4294901760
        %v1421 = vsub.f32 %v287, %v1420
        %v1422 = vand.u32 %v1421, 4294901760
        %v1423 = vsub.f32 %v1421, %v1422
        %v1424 = vand.u32 %v1423, 4294901760
        %1425 = vmatprep.subr.mxu0 %v1424
        %v1426 = vand.u32 %v286, 4294901760
        %v1427 = vsub.f32 %v286, %v1426
        %v1428 = vand.u32 %v1427, 4294901760
        %v1429 = vsub.f32 %v1427, %v1428
        %v1430 = vand.u32 %v1429, 4294901760
        %1431 = vmatpush1.msra.mxu0 %v1430
        %v1432 = vand.u32 %v283, 4294901760
        %v1433 = vsub.f32 %v283, %v1432
        %v1434 = vand.u32 %v1433, 4294901760
        %v1435 = vsub.f32 %v1433, %v1434
        %v1436 = vand.u32 %v1435, 4294901760
        %1437 = vmatprep.subr.mxu0 %v1436
        %v1438 = vand.u32 %v282, 4294901760
        %v1439 = vsub.f32 %v282, %v1438
        %v1440 = vand.u32 %v1439, 4294901760
        %v1441 = vsub.f32 %v1439, %v1440
        %v1442 = vand.u32 %v1441, 4294901760
        %1443 = vmatpush1.msra.mxu0 %v1442
        %v1444 = vand.u32 %v279, 4294901760
        %v1445 = vsub.f32 %v279, %v1444
        %v1446 = vand.u32 %v1445, 4294901760
        %v1447 = vsub.f32 %v1445, %v1446
        %v1448 = vand.u32 %v1447, 4294901760
        %1449 = vmatprep.subr.mxu0 %v1448
        %v1450 = vand.u32 %v278, 4294901760
        %v1451 = vsub.f32 %v278, %v1450
        %v1452 = vand.u32 %v1451, 4294901760
        %v1453 = vsub.f32 %v1451, %v1452
        %v1454 = vand.u32 %v1453, 4294901760
        %1455 = vmatpush1.msra.mxu0 %v1454
        %v1456 = vand.u32 %v275, 4294901760
        %v1457 = vsub.f32 %v275, %v1456
        %v1458 = vand.u32 %v1457, 4294901760
        %v1459 = vsub.f32 %v1457, %v1458
        %v1460 = vand.u32 %v1459, 4294901760
        %1461 = vmatprep.subr.mxu0 %v1460
        %v1462 = vand.u32 %v274, 4294901760
        %v1463 = vsub.f32 %v274, %v1462
        %v1464 = vand.u32 %v1463, 4294901760
        %v1465 = vsub.f32 %v1463, %v1464
        %v1466 = vand.u32 %v1465, 4294901760
        %1467 = vmatpush1.msra.mxu0 %v1466
        %v1468 = vand.u32 %v271, 4294901760
        %v1469 = vsub.f32 %v271, %v1468
        %v1470 = vand.u32 %v1469, 4294901760
        %v1471 = vsub.f32 %v1469, %v1470
        %v1472 = vand.u32 %v1471, 4294901760
        %1473 = vmatprep.subr.mxu0 %v1472
        %v1474 = vand.u32 %v270, 4294901760
        %v1475 = vsub.f32 %v270, %v1474
        %v1476 = vand.u32 %v1475, 4294901760
        %v1477 = vsub.f32 %v1475, %v1476
        %v1478 = vand.u32 %v1477, 4294901760
        %1479 = vmatpush1.msra.mxu0 %v1478
        %v1480 = vand.u32 %v267, 4294901760
        %v1481 = vsub.f32 %v267, %v1480
        %v1482 = vand.u32 %v1481, 4294901760
        %v1483 = vsub.f32 %v1481, %v1482
        %v1484 = vand.u32 %v1483, 4294901760
        %1485 = vmatprep.subr.mxu0 %v1484
        %v1486 = vand.u32 %v266, 4294901760
        %v1487 = vsub.f32 %v266, %v1486
        %v1488 = vand.u32 %v1487, 4294901760
        %v1489 = vsub.f32 %v1487, %v1488
        %v1490 = vand.u32 %v1489, 4294901760
        %1491 = vmatpush1.msra.mxu0 %v1490
        %v1492 = vand.u32 %v263, 4294901760
        %v1493 = vsub.f32 %v263, %v1492
        %v1494 = vand.u32 %v1493, 4294901760
        %v1495 = vsub.f32 %v1493, %v1494
        %v1496 = vand.u32 %v1495, 4294901760
        %1497 = vmatprep.subr.mxu0 %v1496
        %v1498 = vand.u32 %v262, 4294901760
        %v1499 = vsub.f32 %v262, %v1498
        %v1500 = vand.u32 %v1499, 4294901760
        %v1501 = vsub.f32 %v1499, %v1500
        %v1502 = vand.u32 %v1501, 4294901760
        %1503 = vmatpush1.msra.mxu0 %v1502
        %1504 = vmatprep.subr.mxu0 0.0
        %1505 = vmatpush2.msra.mxu0 0.0
        %1506 = vmatprep.subr.mxu0 0.0
        %1507 = vmatpush2.msra.mxu0 0.0
        %1508 = vmatprep.subr.mxu0 0.0
        %1509 = vmatpush2.msra.mxu0 0.0
        %1510 = vmatprep.subr.mxu0 0.0
        %1511 = vmatpush2.msra.mxu0 0.0
        %1512 = vmatprep.subr.mxu0 0.0
        %1513 = vmatpush2.msra.mxu0 0.0
        %1514 = vmatprep.subr.mxu0 0.0
        %1515 = vmatpush2.msra.mxu0 0.0
        %1516 = vmatprep.subr.mxu0 0.0
        %1517 = vmatpush2.msra.mxu0 0.0
        %1518 = vmatprep.subr.mxu0 0.0
        %1519 = vmatpush2.msra.mxu0 0.0
        %1520 = vmatprep.subr.mxu0 0.0
        %1521 = vmatpush2.msra.mxu0 0.0
        %1522 = vmatprep.subr.mxu0 0.0
        %1523 = vmatpush2.msra.mxu0 0.0
        %1524 = vmatprep.subr.mxu0 0.0
        %1525 = vmatpush2.msra.mxu0 0.0
        %1526 = vmatprep.subr.mxu0 0.0
        %1527 = vmatpush2.msra.mxu0 0.0
        %1528 = vmatprep.subr.mxu0 0.0
        %1529 = vmatpush2.msra.mxu0 0.0
        %1530 = vmatprep.subr.mxu0 0.0
        %1531 = vmatpush2.msra.mxu0 0.0
        %1532 = vmatprep.subr.mxu0 0.0
        %1533 = vmatpush2.msra.mxu0 0.0
        %1534 = vmatprep.subr.mxu0 0.0
        %1535 = vmatpush2.msra.mxu0 0.0
        %1536 = vmatprep.mubr.f32.mxu0 0.0
        %v1537 = vand.u32 %v310, 4294901760
        %1538 = vmatmul.mubr.f32.gmra.mxu0 %v1537
        %v1539 = vpop.f32.mrf.mxu0
        %v1540 = vadd.f32 %v1315, %v1539
        %v1541 = vpop.f32.mrf.mxu0
        %v1542 = vadd.f32 %v1317, %v1541
        %1543 = vmatprep.mubr.f32.mxu0 0.0
        %v1544 = vand.u32 %v313, 4294901760
        %1545 = vmatmul.mubr.f32.gmra.mxu0 %v1544
        %v1546 = vpop.f32.mrf.mxu0
        %v1547 = vadd.f32 %v1326, %v1546
        %v1548 = vpop.f32.mrf.mxu0
        %v1549 = vadd.f32 %v1328, %v1548
        %1550 = vmatprep.mubr.f32.mxu0 0.0
        %v1551 = vand.u32 %v316, 4294901760
        %1552 = vmatmul.mubr.f32.gmra.mxu0 %v1551
        %v1553 = vpop.f32.mrf.mxu0
        %v1554 = vadd.f32 %v1337, %v1553
        %v1555 = vpop.f32.mrf.mxu0
        %v1556 = vadd.f32 %v1339, %v1555
        %1557 = vmatprep.mubr.f32.mxu0 0.0
        %v1558 = vand.u32 %v319, 4294901760
        %1559 = vmatmul.mubr.f32.gmra.mxu0 %v1558
        %v1560 = vpop.f32.mrf.mxu0
        %v1561 = vadd.f32 %v1348, %v1560
        %v1562 = vpop.f32.mrf.mxu0
        %v1563 = vadd.f32 %v1350, %v1562
        %1564 = vdwg.mxu0
        %1565 = vmatprep.subr.mxu0 0.0
        %1566 = vmatpush1.msra.mxu0 0.0
        %1567 = vmatprep.subr.mxu0 0.0
        %1568 = vmatpush1.msra.mxu0 0.0
        %1569 = vmatprep.subr.mxu0 0.0
        %1570 = vmatpush1.msra.mxu0 0.0
        %1571 = vmatprep.subr.mxu0 0.0
        %1572 = vmatpush1.msra.mxu0 0.0
        %v1573 = vand.u32 %v307, 4294901760
        %v1574 = vsub.f32 %v307, %v1573
        %1575 = vmatprep.subr.mxu0 %v1574
        %v1576 = vand.u32 %v306, 4294901760
        %v1577 = vsub.f32 %v306, %v1576
        %1578 = vmatpush1.msra.mxu0 %v1577
        %v1579 = vand.u32 %v303, 4294901760
        %v1580 = vsub.f32 %v303, %v1579
        %1581 = vmatprep.subr.mxu0 %v1580
        %v1582 = vand.u32 %v302, 4294901760
        %v1583 = vsub.f32 %v302, %v1582
        %1584 = vmatpush1.msra.mxu0 %v1583
        %v1585 = vand.u32 %v299, 4294901760
        %v1586 = vsub.f32 %v299, %v1585
        %1587 = vmatprep.subr.mxu0 %v1586
        %v1588 = vand.u32 %v298, 4294901760
        %v1589 = vsub.f32 %v298, %v1588
        %1590 = vmatpush1.msra.mxu0 %v1589
        %v1591 = vand.u32 %v295, 4294901760
        %v1592 = vsub.f32 %v295, %v1591
        %1593 = vmatprep.subr.mxu0 %v1592
        %v1594 = vand.u32 %v294, 4294901760
        %v1595 = vsub.f32 %v294, %v1594
        %1596 = vmatpush1.msra.mxu0 %v1595
        %v1597 = vand.u32 %v291, 4294901760
        %v1598 = vsub.f32 %v291, %v1597
        %1599 = vmatprep.subr.mxu0 %v1598
        %v1600 = vand.u32 %v290, 4294901760
        %v1601 = vsub.f32 %v290, %v1600
        %1602 = vmatpush1.msra.mxu0 %v1601
        %v1603 = vand.u32 %v287, 4294901760
        %v1604 = vsub.f32 %v287, %v1603
        %1605 = vmatprep.subr.mxu0 %v1604
        %v1606 = vand.u32 %v286, 4294901760
        %v1607 = vsub.f32 %v286, %v1606
        %1608 = vmatpush1.msra.mxu0 %v1607
        %v1609 = vand.u32 %v283, 4294901760
        %v1610 = vsub.f32 %v283, %v1609
        %1611 = vmatprep.subr.mxu0 %v1610
        %v1612 = vand.u32 %v282, 4294901760
        %v1613 = vsub.f32 %v282, %v1612
        %1614 = vmatpush1.msra.mxu0 %v1613
        %v1615 = vand.u32 %v279, 4294901760
        %v1616 = vsub.f32 %v279, %v1615
        %1617 = vmatprep.subr.mxu0 %v1616
        %v1618 = vand.u32 %v278, 4294901760
        %v1619 = vsub.f32 %v278, %v1618
        %1620 = vmatpush1.msra.mxu0 %v1619
        %v1621 = vand.u32 %v275, 4294901760
        %v1622 = vsub.f32 %v275, %v1621
        %1623 = vmatprep.subr.mxu0 %v1622
        %v1624 = vand.u32 %v274, 4294901760
        %v1625 = vsub.f32 %v274, %v1624
        %1626 = vmatpush1.msra.mxu0 %v1625
        %v1627 = vand.u32 %v271, 4294901760
        %v1628 = vsub.f32 %v271, %v1627
        %1629 = vmatprep.subr.mxu0 %v1628
        %v1630 = vand.u32 %v270, 4294901760
        %v1631 = vsub.f32 %v270, %v1630
        %1632 = vmatpush1.msra.mxu0 %v1631
        %v1633 = vand.u32 %v267, 4294901760
        %v1634 = vsub.f32 %v267, %v1633
        %1635 = vmatprep.subr.mxu0 %v1634
        %v1636 = vand.u32 %v266, 4294901760
        %v1637 = vsub.f32 %v266, %v1636
        %1638 = vmatpush1.msra.mxu0 %v1637
        %v1639 = vand.u32 %v263, 4294901760
        %v1640 = vsub.f32 %v263, %v1639
        %1641 = vmatprep.subr.mxu0 %v1640
        %v1642 = vand.u32 %v262, 4294901760
        %v1643 = vsub.f32 %v262, %v1642
        %1644 = vmatpush1.msra.mxu0 %v1643
        %1645 = vmatprep.subr.mxu0 0.0
        %1646 = vmatpush2.msra.mxu0 0.0
        %1647 = vmatprep.subr.mxu0 0.0
        %1648 = vmatpush2.msra.mxu0 0.0
        %1649 = vmatprep.subr.mxu0 0.0
        %1650 = vmatpush2.msra.mxu0 0.0
        %1651 = vmatprep.subr.mxu0 0.0
        %1652 = vmatpush2.msra.mxu0 0.0
        %1653 = vmatprep.subr.mxu0 0.0
        %1654 = vmatpush2.msra.mxu0 0.0
        %1655 = vmatprep.subr.mxu0 0.0
        %1656 = vmatpush2.msra.mxu0 0.0
        %1657 = vmatprep.subr.mxu0 0.0
        %1658 = vmatpush2.msra.mxu0 0.0
        %1659 = vmatprep.subr.mxu0 0.0
        %1660 = vmatpush2.msra.mxu0 0.0
        %1661 = vmatprep.subr.mxu0 0.0
        %1662 = vmatpush2.msra.mxu0 0.0
        %1663 = vmatprep.subr.mxu0 0.0
        %1664 = vmatpush2.msra.mxu0 0.0
        %1665 = vmatprep.subr.mxu0 0.0
        %1666 = vmatpush2.msra.mxu0 0.0
        %1667 = vmatprep.subr.mxu0 0.0
        %1668 = vmatpush2.msra.mxu0 0.0
        %1669 = vmatprep.subr.mxu0 0.0
        %1670 = vmatpush2.msra.mxu0 0.0
        %1671 = vmatprep.subr.mxu0 0.0
        %1672 = vmatpush2.msra.mxu0 0.0
        %1673 = vmatprep.subr.mxu0 0.0
        %1674 = vmatpush2.msra.mxu0 0.0
        %1675 = vmatprep.subr.mxu0 0.0
        %1676 = vmatpush2.msra.mxu0 0.0
        %1677 = vmatprep.mubr.f32.mxu0 0.0
        %v1678 = vand.u32 %v310, 4294901760
        %v1679 = vsub.f32 %v310, %v1678
        %1680 = vmatmul.mubr.f32.gmra.mxu0 %v1679
        %v1681 = vpop.f32.mrf.mxu0
        %v1682 = vadd.f32 %v1540, %v1681
        %v1683 = vpop.f32.mrf.mxu0
        %v1684 = vadd.f32 %v1542, %v1683
        %1685 = vmatprep.mubr.f32.mxu0 0.0
        %v1686 = vand.u32 %v313, 4294901760
        %v1687 = vsub.f32 %v313, %v1686
        %1688 = vmatmul.mubr.f32.gmra.mxu0 %v1687
        %v1689 = vpop.f32.mrf.mxu0
        %v1690 = vadd.f32 %v1547, %v1689
        %v1691 = vpop.f32.mrf.mxu0
        %v1692 = vadd.f32 %v1549, %v1691
        %1693 = vmatprep.mubr.f32.mxu0 0.0
        %v1694 = vand.u32 %v316, 4294901760
        %v1695 = vsub.f32 %v316, %v1694
        %1696 = vmatmul.mubr.f32.gmra.mxu0 %v1695
        %v1697 = vpop.f32.mrf.mxu0
        %v1698 = vadd.f32 %v1554, %v1697
        %v1699 = vpop.f32.mrf.mxu0
        %v1700 = vadd.f32 %v1556, %v1699
        %1701 = vmatprep.mubr.f32.mxu0 0.0
        %v1702 = vand.u32 %v319, 4294901760
        %v1703 = vsub.f32 %v319, %v1702
        %1704 = vmatmul.mubr.f32.gmra.mxu0 %v1703
        %v1705 = vpop.f32.mrf.mxu0
        %v1706 = vadd.f32 %v1561, %v1705
        %v1707 = vpop.f32.mrf.mxu0
        %v1708 = vadd.f32 %v1563, %v1707
        %1709 = vdwg.mxu0
        %1710 = vmatprep.subr.mxu0 0.0
        %1711 = vmatpush1.msra.mxu0 0.0
        %1712 = vmatprep.subr.mxu0 0.0
        %1713 = vmatpush1.msra.mxu0 0.0
        %1714 = vmatprep.subr.mxu0 0.0
        %1715 = vmatpush1.msra.mxu0 0.0
        %1716 = vmatprep.subr.mxu0 0.0
        %1717 = vmatpush1.msra.mxu0 0.0
        %v1718 = vand.u32 %v307, 4294901760
        %1719 = vmatprep.subr.mxu0 %v1718
        %v1720 = vand.u32 %v306, 4294901760
        %1721 = vmatpush1.msra.mxu0 %v1720
        %v1722 = vand.u32 %v303, 4294901760
        %1723 = vmatprep.subr.mxu0 %v1722
        %v1724 = vand.u32 %v302, 4294901760
        %1725 = vmatpush1.msra.mxu0 %v1724
        %v1726 = vand.u32 %v299, 4294901760
        %1727 = vmatprep.subr.mxu0 %v1726
        %v1728 = vand.u32 %v298, 4294901760
        %1729 = vmatpush1.msra.mxu0 %v1728
        %v1730 = vand.u32 %v295, 4294901760
        %1731 = vmatprep.subr.mxu0 %v1730
        %v1732 = vand.u32 %v294, 4294901760
        %1733 = vmatpush1.msra.mxu0 %v1732
        %v1734 = vand.u32 %v291, 4294901760
        %1735 = vmatprep.subr.mxu0 %v1734
        %v1736 = vand.u32 %v290, 4294901760
        %1737 = vmatpush1.msra.mxu0 %v1736
        %v1738 = vand.u32 %v287, 4294901760
        %1739 = vmatprep.subr.mxu0 %v1738
        %v1740 = vand.u32 %v286, 4294901760
        %1741 = vmatpush1.msra.mxu0 %v1740
        %v1742 = vand.u32 %v283, 4294901760
        %1743 = vmatprep.subr.mxu0 %v1742
        %v1744 = vand.u32 %v282, 4294901760
        %1745 = vmatpush1.msra.mxu0 %v1744
        %v1746 = vand.u32 %v279, 4294901760
        %1747 = vmatprep.subr.mxu0 %v1746
        %v1748 = vand.u32 %v278, 4294901760
        %1749 = vmatpush1.msra.mxu0 %v1748
        %v1750 = vand.u32 %v275, 4294901760
        %1751 = vmatprep.subr.mxu0 %v1750
        %v1752 = vand.u32 %v274, 4294901760
        %1753 = vmatpush1.msra.mxu0 %v1752
        %v1754 = vand.u32 %v271, 4294901760
        %1755 = vmatprep.subr.mxu0 %v1754
        %v1756 = vand.u32 %v270, 4294901760
        %1757 = vmatpush1.msra.mxu0 %v1756
        %v1758 = vand.u32 %v267, 4294901760
        %1759 = vmatprep.subr.mxu0 %v1758
        %v1760 = vand.u32 %v266, 4294901760
        %1761 = vmatpush1.msra.mxu0 %v1760
        %v1762 = vand.u32 %v263, 4294901760
        %1763 = vmatprep.subr.mxu0 %v1762
        %v1764 = vand.u32 %v262, 4294901760
        %1765 = vmatpush1.msra.mxu0 %v1764
        %1766 = vmatprep.subr.mxu0 0.0
        %1767 = vmatpush2.msra.mxu0 0.0
        %1768 = vmatprep.subr.mxu0 0.0
        %1769 = vmatpush2.msra.mxu0 0.0
        %1770 = vmatprep.subr.mxu0 0.0
        %1771 = vmatpush2.msra.mxu0 0.0
        %1772 = vmatprep.subr.mxu0 0.0
        %1773 = vmatpush2.msra.mxu0 0.0
        %1774 = vmatprep.subr.mxu0 0.0
        %1775 = vmatpush2.msra.mxu0 0.0
        %1776 = vmatprep.subr.mxu0 0.0
        %1777 = vmatpush2.msra.mxu0 0.0
        %1778 = vmatprep.subr.mxu0 0.0
        %1779 = vmatpush2.msra.mxu0 0.0
        %1780 = vmatprep.subr.mxu0 0.0
        %1781 = vmatpush2.msra.mxu0 0.0
        %1782 = vmatprep.subr.mxu0 0.0
        %1783 = vmatpush2.msra.mxu0 0.0
        %1784 = vmatprep.subr.mxu0 0.0
        %1785 = vmatpush2.msra.mxu0 0.0
        %1786 = vmatprep.subr.mxu0 0.0
        %1787 = vmatpush2.msra.mxu0 0.0
        %1788 = vmatprep.subr.mxu0 0.0
        %1789 = vmatpush2.msra.mxu0 0.0
        %1790 = vmatprep.subr.mxu0 0.0
        %1791 = vmatpush2.msra.mxu0 0.0
        %1792 = vmatprep.subr.mxu0 0.0
        %1793 = vmatpush2.msra.mxu0 0.0
        %1794 = vmatprep.subr.mxu0 0.0
        %1795 = vmatpush2.msra.mxu0 0.0
        %1796 = vmatprep.subr.mxu0 0.0
        %1797 = vmatpush2.msra.mxu0 0.0
        %1798 = vmatprep.mubr.f32.mxu0 0.0
        %v1799 = vand.u32 %v310, 4294901760
        %v1800 = vsub.f32 %v310, %v1799
        %v1801 = vand.u32 %v1800, 4294901760
        %1802 = vmatmul.mubr.f32.gmra.mxu0 %v1801
        %v1803 = vpop.f32.mrf.mxu0
        %v1804 = vadd.f32 %v1682, %v1803
        %v1805 = vpop.f32.mrf.mxu0
        %v1806 = vadd.f32 %v1684, %v1805
        %1807 = vmatprep.mubr.f32.mxu0 0.0
        %v1808 = vand.u32 %v313, 4294901760
        %v1809 = vsub.f32 %v313, %v1808
        %v1810 = vand.u32 %v1809, 4294901760
        %1811 = vmatmul.mubr.f32.gmra.mxu0 %v1810
        %v1812 = vpop.f32.mrf.mxu0
        %v1813 = vadd.f32 %v1690, %v1812
        %v1814 = vpop.f32.mrf.mxu0
        %v1815 = vadd.f32 %v1692, %v1814
        %1816 = vmatprep.mubr.f32.mxu0 0.0
        %v1817 = vand.u32 %v316, 4294901760
        %v1818 = vsub.f32 %v316, %v1817
        %v1819 = vand.u32 %v1818, 4294901760
        %1820 = vmatmul.mubr.f32.gmra.mxu0 %v1819
        %v1821 = vpop.f32.mrf.mxu0
        %v1822 = vadd.f32 %v1698, %v1821
        %v1823 = vpop.f32.mrf.mxu0
        %v1824 = vadd.f32 %v1700, %v1823
        %1825 = vmatprep.mubr.f32.mxu0 0.0
        %v1826 = vand.u32 %v319, 4294901760
        %v1827 = vsub.f32 %v319, %v1826
        %v1828 = vand.u32 %v1827, 4294901760
        %1829 = vmatmul.mubr.f32.gmra.mxu0 %v1828
        %v1830 = vpop.f32.mrf.mxu0
        %v1831 = vadd.f32 %v1706, %v1830
        %v1832 = vpop.f32.mrf.mxu0
        %v1833 = vadd.f32 %v1708, %v1832
        %1834 = vdwg.mxu0
        %1835 = vmatprep.subr.mxu0 0.0
        %1836 = vmatpush1.msra.mxu0 0.0
        %1837 = vmatprep.subr.mxu0 0.0
        %1838 = vmatpush1.msra.mxu0 0.0
        %1839 = vmatprep.subr.mxu0 0.0
        %1840 = vmatpush1.msra.mxu0 0.0
        %1841 = vmatprep.subr.mxu0 0.0
        %1842 = vmatpush1.msra.mxu0 0.0
        %v1843 = vand.u32 %v307, 4294901760
        %v1844 = vsub.f32 %v307, %v1843
        %v1845 = vand.u32 %v1844, 4294901760
        %1846 = vmatprep.subr.mxu0 %v1845
        %v1847 = vand.u32 %v306, 4294901760
        %v1848 = vsub.f32 %v306, %v1847
        %v1849 = vand.u32 %v1848, 4294901760
        %1850 = vmatpush1.msra.mxu0 %v1849
        %v1851 = vand.u32 %v303, 4294901760
        %v1852 = vsub.f32 %v303, %v1851
        %v1853 = vand.u32 %v1852, 4294901760
        %1854 = vmatprep.subr.mxu0 %v1853
        %v1855 = vand.u32 %v302, 4294901760
        %v1856 = vsub.f32 %v302, %v1855
        %v1857 = vand.u32 %v1856, 4294901760
        %1858 = vmatpush1.msra.mxu0 %v1857
        %v1859 = vand.u32 %v299, 4294901760
        %v1860 = vsub.f32 %v299, %v1859
        %v1861 = vand.u32 %v1860, 4294901760
        %1862 = vmatprep.subr.mxu0 %v1861
        %v1863 = vand.u32 %v298, 4294901760
        %v1864 = vsub.f32 %v298, %v1863
        %v1865 = vand.u32 %v1864, 4294901760
        %1866 = vmatpush1.msra.mxu0 %v1865
        %v1867 = vand.u32 %v295, 4294901760
        %v1868 = vsub.f32 %v295, %v1867
        %v1869 = vand.u32 %v1868, 4294901760
        %1870 = vmatprep.subr.mxu0 %v1869
        %v1871 = vand.u32 %v294, 4294901760
        %v1872 = vsub.f32 %v294, %v1871
        %v1873 = vand.u32 %v1872, 4294901760
        %1874 = vmatpush1.msra.mxu0 %v1873
        %v1875 = vand.u32 %v291, 4294901760
        %v1876 = vsub.f32 %v291, %v1875
        %v1877 = vand.u32 %v1876, 4294901760
        %1878 = vmatprep.subr.mxu0 %v1877
        %v1879 = vand.u32 %v290, 4294901760
        %v1880 = vsub.f32 %v290, %v1879
        %v1881 = vand.u32 %v1880, 4294901760
        %1882 = vmatpush1.msra.mxu0 %v1881
        %v1883 = vand.u32 %v287, 4294901760
        %v1884 = vsub.f32 %v287, %v1883
        %v1885 = vand.u32 %v1884, 4294901760
        %1886 = vmatprep.subr.mxu0 %v1885
        %v1887 = vand.u32 %v286, 4294901760
        %v1888 = vsub.f32 %v286, %v1887
        %v1889 = vand.u32 %v1888, 4294901760
        %1890 = vmatpush1.msra.mxu0 %v1889
        %v1891 = vand.u32 %v283, 4294901760
        %v1892 = vsub.f32 %v283, %v1891
        %v1893 = vand.u32 %v1892, 4294901760
        %1894 = vmatprep.subr.mxu0 %v1893
        %v1895 = vand.u32 %v282, 4294901760
        %v1896 = vsub.f32 %v282, %v1895
        %v1897 = vand.u32 %v1896, 4294901760
        %1898 = vmatpush1.msra.mxu0 %v1897
        %v1899 = vand.u32 %v279, 4294901760
        %v1900 = vsub.f32 %v279, %v1899
        %v1901 = vand.u32 %v1900, 4294901760
        %1902 = vmatprep.subr.mxu0 %v1901
        %v1903 = vand.u32 %v278, 4294901760
        %v1904 = vsub.f32 %v278, %v1903
        %v1905 = vand.u32 %v1904, 4294901760
        %1906 = vmatpush1.msra.mxu0 %v1905
        %v1907 = vand.u32 %v275, 4294901760
        %v1908 = vsub.f32 %v275, %v1907
        %v1909 = vand.u32 %v1908, 4294901760
        %1910 = vmatprep.subr.mxu0 %v1909
        %v1911 = vand.u32 %v274, 4294901760
        %v1912 = vsub.f32 %v274, %v1911
        %v1913 = vand.u32 %v1912, 4294901760
        %1914 = vmatpush1.msra.mxu0 %v1913
        %v1915 = vand.u32 %v271, 4294901760
        %v1916 = vsub.f32 %v271, %v1915
        %v1917 = vand.u32 %v1916, 4294901760
        %1918 = vmatprep.subr.mxu0 %v1917
        %v1919 = vand.u32 %v270, 4294901760
        %v1920 = vsub.f32 %v270, %v1919
        %v1921 = vand.u32 %v1920, 4294901760
        %1922 = vmatpush1.msra.mxu0 %v1921
        %v1923 = vand.u32 %v267, 4294901760
        %v1924 = vsub.f32 %v267, %v1923
        %v1925 = vand.u32 %v1924, 4294901760
        %1926 = vmatprep.subr.mxu0 %v1925
        %v1927 = vand.u32 %v266, 4294901760
        %v1928 = vsub.f32 %v266, %v1927
        %v1929 = vand.u32 %v1928, 4294901760
        %1930 = vmatpush1.msra.mxu0 %v1929
        %v1931 = vand.u32 %v263, 4294901760
        %v1932 = vsub.f32 %v263, %v1931
        %v1933 = vand.u32 %v1932, 4294901760
        %1934 = vmatprep.subr.mxu0 %v1933
        %v1935 = vand.u32 %v262, 4294901760
        %v1936 = vsub.f32 %v262, %v1935
        %v1937 = vand.u32 %v1936, 4294901760
        %1938 = vmatpush1.msra.mxu0 %v1937
        %1939 = vmatprep.subr.mxu0 0.0
        %1940 = vmatpush2.msra.mxu0 0.0
        %1941 = vmatprep.subr.mxu0 0.0
        %1942 = vmatpush2.msra.mxu0 0.0
        %1943 = vmatprep.subr.mxu0 0.0
        %1944 = vmatpush2.msra.mxu0 0.0
        %1945 = vmatprep.subr.mxu0 0.0
        %1946 = vmatpush2.msra.mxu0 0.0
        %1947 = vmatprep.subr.mxu0 0.0
        %1948 = vmatpush2.msra.mxu0 0.0
        %1949 = vmatprep.subr.mxu0 0.0
        %1950 = vmatpush2.msra.mxu0 0.0
        %1951 = vmatprep.subr.mxu0 0.0
        %1952 = vmatpush2.msra.mxu0 0.0
        %1953 = vmatprep.subr.mxu0 0.0
        %1954 = vmatpush2.msra.mxu0 0.0
        %1955 = vmatprep.subr.mxu0 0.0
        %1956 = vmatpush2.msra.mxu0 0.0
        %1957 = vmatprep.subr.mxu0 0.0
        %1958 = vmatpush2.msra.mxu0 0.0
        %1959 = vmatprep.subr.mxu0 0.0
        %1960 = vmatpush2.msra.mxu0 0.0
        %1961 = vmatprep.subr.mxu0 0.0
        %1962 = vmatpush2.msra.mxu0 0.0
        %1963 = vmatprep.subr.mxu0 0.0
        %1964 = vmatpush2.msra.mxu0 0.0
        %1965 = vmatprep.subr.mxu0 0.0
        %1966 = vmatpush2.msra.mxu0 0.0
        %1967 = vmatprep.subr.mxu0 0.0
        %1968 = vmatpush2.msra.mxu0 0.0
        %1969 = vmatprep.subr.mxu0 0.0
        %1970 = vmatpush2.msra.mxu0 0.0
        %1971 = vmatprep.mubr.f32.mxu0 0.0
        %v1972 = vand.u32 %v310, 4294901760
        %1973 = vmatmul.mubr.f32.gmra.mxu0 %v1972
        %v1974 = vpop.f32.mrf.mxu0
        %v1975 = vadd.f32 %v1804, %v1974
        %v1976 = vpop.f32.mrf.mxu0
        %v1977 = vadd.f32 %v1806, %v1976
        %1978 = vmatprep.mubr.f32.mxu0 0.0
        %v1979 = vand.u32 %v313, 4294901760
        %1980 = vmatmul.mubr.f32.gmra.mxu0 %v1979
        %v1981 = vpop.f32.mrf.mxu0
        %v1982 = vadd.f32 %v1813, %v1981
        %v1983 = vpop.f32.mrf.mxu0
        %v1984 = vadd.f32 %v1815, %v1983
        %1985 = vmatprep.mubr.f32.mxu0 0.0
        %v1986 = vand.u32 %v316, 4294901760
        %1987 = vmatmul.mubr.f32.gmra.mxu0 %v1986
        %v1988 = vpop.f32.mrf.mxu0
        %v1989 = vadd.f32 %v1822, %v1988
        %v1990 = vpop.f32.mrf.mxu0
        %v1991 = vadd.f32 %v1824, %v1990
        %1992 = vmatprep.mubr.f32.mxu0 0.0
        %v1993 = vand.u32 %v319, 4294901760
        %1994 = vmatmul.mubr.f32.gmra.mxu0 %v1993
        %v1995 = vpop.f32.mrf.mxu0
        %v1996 = vadd.f32 %v1831, %v1995
        %v1997 = vpop.f32.mrf.mxu0
        %v1998 = vadd.f32 %v1833, %v1997
        %1999 = vdwg.mxu0
        %2000 = vmatprep.subr.mxu0 0.0
        %2001 = vmatpush1.msra.mxu0 0.0
        %2002 = vmatprep.subr.mxu0 0.0
        %2003 = vmatpush1.msra.mxu0 0.0
        %2004 = vmatprep.subr.mxu0 0.0
        %2005 = vmatpush1.msra.mxu0 0.0
        %2006 = vmatprep.subr.mxu0 0.0
        %2007 = vmatpush1.msra.mxu0 0.0
        %v2008 = vand.u32 %v307, 4294901760
        %2009 = vmatprep.subr.mxu0 %v2008
        %v2010 = vand.u32 %v306, 4294901760
        %2011 = vmatpush1.msra.mxu0 %v2010
        %v2012 = vand.u32 %v303, 4294901760
        %2013 = vmatprep.subr.mxu0 %v2012
        %v2014 = vand.u32 %v302, 4294901760
        %2015 = vmatpush1.msra.mxu0 %v2014
        %v2016 = vand.u32 %v299, 4294901760
        %2017 = vmatprep.subr.mxu0 %v2016
        %v2018 = vand.u32 %v298, 4294901760
        %2019 = vmatpush1.msra.mxu0 %v2018
        %v2020 = vand.u32 %v295, 4294901760
        %2021 = vmatprep.subr.mxu0 %v2020
        %v2022 = vand.u32 %v294, 4294901760
        %2023 = vmatpush1.msra.mxu0 %v2022
        %v2024 = vand.u32 %v291, 4294901760
        %2025 = vmatprep.subr.mxu0 %v2024
        %v2026 = vand.u32 %v290, 4294901760
        %2027 = vmatpush1.msra.mxu0 %v2026
        %v2028 = vand.u32 %v287, 4294901760
        %2029 = vmatprep.subr.mxu0 %v2028
        %v2030 = vand.u32 %v286, 4294901760
        %2031 = vmatpush1.msra.mxu0 %v2030
        %v2032 = vand.u32 %v283, 4294901760
        %2033 = vmatprep.subr.mxu0 %v2032
        %v2034 = vand.u32 %v282, 4294901760
        %2035 = vmatpush1.msra.mxu0 %v2034
        %v2036 = vand.u32 %v279, 4294901760
        %2037 = vmatprep.subr.mxu0 %v2036
        %v2038 = vand.u32 %v278, 4294901760
        %2039 = vmatpush1.msra.mxu0 %v2038
        %v2040 = vand.u32 %v275, 4294901760
        %2041 = vmatprep.subr.mxu0 %v2040
        %v2042 = vand.u32 %v274, 4294901760
        %2043 = vmatpush1.msra.mxu0 %v2042
        %v2044 = vand.u32 %v271, 4294901760
        %2045 = vmatprep.subr.mxu0 %v2044
        %v2046 = vand.u32 %v270, 4294901760
        %2047 = vmatpush1.msra.mxu0 %v2046
        %v2048 = vand.u32 %v267, 4294901760
        %2049 = vmatprep.subr.mxu0 %v2048
        %v2050 = vand.u32 %v266, 4294901760
        %2051 = vmatpush1.msra.mxu0 %v2050
        %v2052 = vand.u32 %v263, 4294901760
        %2053 = vmatprep.subr.mxu0 %v2052
        %v2054 = vand.u32 %v262, 4294901760
        %2055 = vmatpush1.msra.mxu0 %v2054
        %2056 = vmatprep.subr.mxu0 0.0
        %2057 = vmatpush2.msra.mxu0 0.0
        %2058 = vmatprep.subr.mxu0 0.0
        %2059 = vmatpush2.msra.mxu0 0.0
        %2060 = vmatprep.subr.mxu0 0.0
        %2061 = vmatpush2.msra.mxu0 0.0
        %2062 = vmatprep.subr.mxu0 0.0
        %2063 = vmatpush2.msra.mxu0 0.0
        %2064 = vmatprep.subr.mxu0 0.0
        %2065 = vmatpush2.msra.mxu0 0.0
        %2066 = vmatprep.subr.mxu0 0.0
        %2067 = vmatpush2.msra.mxu0 0.0
        %2068 = vmatprep.subr.mxu0 0.0
        %2069 = vmatpush2.msra.mxu0 0.0
        %2070 = vmatprep.subr.mxu0 0.0
        %2071 = vmatpush2.msra.mxu0 0.0
        %2072 = vmatprep.subr.mxu0 0.0
        %2073 = vmatpush2.msra.mxu0 0.0
        %2074 = vmatprep.subr.mxu0 0.0
        %2075 = vmatpush2.msra.mxu0 0.0
        %2076 = vmatprep.subr.mxu0 0.0
        %2077 = vmatpush2.msra.mxu0 0.0
        %2078 = vmatprep.subr.mxu0 0.0
        %2079 = vmatpush2.msra.mxu0 0.0
        %2080 = vmatprep.subr.mxu0 0.0
        %2081 = vmatpush2.msra.mxu0 0.0
        %2082 = vmatprep.subr.mxu0 0.0
        %2083 = vmatpush2.msra.mxu0 0.0
        %2084 = vmatprep.subr.mxu0 0.0
        %2085 = vmatpush2.msra.mxu0 0.0
        %2086 = vmatprep.subr.mxu0 0.0
        %2087 = vmatpush2.msra.mxu0 0.0
        %2088 = vmatprep.mubr.f32.mxu0 0.0
        %v2089 = vand.u32 %v310, 4294901760
        %2090 = vmatmul.mubr.f32.gmra.mxu0 %v2089
        %v2091 = vpop.f32.mrf.mxu0
        %v2092 = vadd.f32 %v1975, %v2091
        %v2093 = vpop.f32.mrf.mxu0
        %v2094 = vadd.f32 %v1977, %v2093
        %2095 = vmatprep.mubr.f32.mxu0 0.0
        %v2096 = vand.u32 %v313, 4294901760
        %2097 = vmatmul.mubr.f32.gmra.mxu0 %v2096
        %v2098 = vpop.f32.mrf.mxu0
        %v2099 = vadd.f32 %v1982, %v2098
        %v2100 = vpop.f32.mrf.mxu0
        %v2101 = vadd.f32 %v1984, %v2100
        %2102 = vmatprep.mubr.f32.mxu0 0.0
        %v2103 = vand.u32 %v316, 4294901760
        %2104 = vmatmul.mubr.f32.gmra.mxu0 %v2103
        %v2105 = vpop.f32.mrf.mxu0
        %v2106 = vadd.f32 %v1989, %v2105
        %v2107 = vpop.f32.mrf.mxu0
        %v2108 = vadd.f32 %v1991, %v2107
        %2109 = vmatprep.mubr.f32.mxu0 0.0
        %v2110 = vand.u32 %v319, 4294901760
        %2111 = vmatmul.mubr.f32.gmra.mxu0 %v2110
        %v2112 = vpop.f32.mrf.mxu0
        %v2113 = vadd.f32 %v1996, %v2112
        %v2114 = vpop.f32.mrf.mxu0
        %v2115 = vadd.f32 %v1998, %v2114
        %2116 = vdwg.mxu0
        %vm2117 = vcmask 261120
        %v2119 = vsel %vm2117, %v236, 0
        %v2122 = vsel %vm2117, %v237, 0
        %v2125 = vsel %vm2117, %v238, 0
        %v2128 = vsel %vm2117, %v239, 0
        %2130 = vmatprep.subr.mxu0 0.0
        %2131 = vmatpush1.msra.mxu0 0.0
        %2132 = vmatprep.subr.mxu0 0.0
        %2133 = vmatpush1.msra.mxu0 0.0
        %2134 = vmatprep.subr.mxu0 0.0
        %2135 = vmatpush1.msra.mxu0 0.0
        %2136 = vmatprep.subr.mxu0 0.0
        %2137 = vmatpush1.msra.mxu0 0.0
        %2138 = vmatprep.subr.mxu0 0.0
        %2139 = vmatpush1.msra.mxu0 0.0
        %2140 = vmatprep.subr.mxu0 0.0
        %2141 = vmatpush1.msra.mxu0 0.0
        %2142 = vmatprep.subr.mxu0 0.0
        %2143 = vmatpush1.msra.mxu0 0.0
        %2144 = vmatprep.subr.mxu0 0.0
        %2145 = vmatpush1.msra.mxu0 0.0
        %2146 = vmatprep.subr.mxu0 0.0
        %2147 = vmatpush1.msra.mxu0 0.0
        %2148 = vmatprep.subr.mxu0 0.0
        %2149 = vmatpush1.msra.mxu0 0.0
        %2150 = vmatprep.subr.mxu0 0.0
        %2151 = vmatpush1.msra.mxu0 0.0
        %2152 = vmatprep.subr.mxu0 0.0
        %2153 = vmatpush1.msra.mxu0 0.0
        %v2154 = vand.u32 %v253, 4294901760
        %2155 = vmatprep.subr.mxu0 %v2154
        %v2156 = vand.u32 %v252, 4294901760
        %2157 = vmatpush1.msra.mxu0 %v2156
        %v2158 = vand.u32 %v249, 4294901760
        %2159 = vmatprep.subr.mxu0 %v2158
        %v2160 = vand.u32 %v248, 4294901760
        %2161 = vmatpush1.msra.mxu0 %v2160
        %v2162 = vand.u32 %v245, 4294901760
        %2163 = vmatprep.subr.mxu0 %v2162
        %v2164 = vand.u32 %v244, 4294901760
        %2165 = vmatpush1.msra.mxu0 %v2164
        %v2166 = vand.u32 %v241, 4294901760
        %2167 = vmatprep.subr.mxu0 %v2166
        %v2168 = vand.u32 %v240, 4294901760
        %2169 = vmatpush1.msra.mxu0 %v2168
        %2170 = vmatprep.subr.mxu0 0.0
        %2171 = vmatpush2.msra.mxu0 0.0
        %2172 = vmatprep.subr.mxu0 0.0
        %2173 = vmatpush2.msra.mxu0 0.0
        %2174 = vmatprep.subr.mxu0 0.0
        %2175 = vmatpush2.msra.mxu0 0.0
        %2176 = vmatprep.subr.mxu0 0.0
        %2177 = vmatpush2.msra.mxu0 0.0
        %2178 = vmatprep.subr.mxu0 0.0
        %2179 = vmatpush2.msra.mxu0 0.0
        %2180 = vmatprep.subr.mxu0 0.0
        %2181 = vmatpush2.msra.mxu0 0.0
        %2182 = vmatprep.subr.mxu0 0.0
        %2183 = vmatpush2.msra.mxu0 0.0
        %2184 = vmatprep.subr.mxu0 0.0
        %2185 = vmatpush2.msra.mxu0 0.0
        %2186 = vmatprep.subr.mxu0 0.0
        %2187 = vmatpush2.msra.mxu0 0.0
        %2188 = vmatprep.subr.mxu0 0.0
        %2189 = vmatpush2.msra.mxu0 0.0
        %2190 = vmatprep.subr.mxu0 0.0
        %2191 = vmatpush2.msra.mxu0 0.0
        %2192 = vmatprep.subr.mxu0 0.0
        %2193 = vmatpush2.msra.mxu0 0.0
        %2194 = vmatprep.subr.mxu0 0.0
        %2195 = vmatpush2.msra.mxu0 0.0
        %2196 = vmatprep.subr.mxu0 0.0
        %2197 = vmatpush2.msra.mxu0 0.0
        %2198 = vmatprep.subr.mxu0 0.0
        %2199 = vmatpush2.msra.mxu0 0.0
        %2200 = vmatprep.subr.mxu0 0.0
        %2201 = vmatpush2.msra.mxu0 0.0
        %2202 = vmatprep.mubr.f32.mxu0 0.0
        %v2203 = vand.u32 %v2119, 4294901760
        %v2204 = vsub.f32 %v2119, %v2203
        %v2205 = vand.u32 %v2204, 4294901760
        %v2206 = vsub.f32 %v2204, %v2205
        %v2207 = vand.u32 %v2206, 4294901760
        %2208 = vmatmul.mubr.f32.gmra.mxu0 %v2207
        %v2209 = vpop.f32.mrf.mxu0
        %v2210 = vadd.f32 %v1194, %v2209
        %v2211 = vpop.f32.mrf.mxu0
        %v2212 = vadd.f32 %v1196, %v2211
        %2213 = vmatprep.mubr.f32.mxu0 0.0
        %v2214 = vand.u32 %v2122, 4294901760
        %v2215 = vsub.f32 %v2122, %v2214
        %v2216 = vand.u32 %v2215, 4294901760
        %v2217 = vsub.f32 %v2215, %v2216
        %v2218 = vand.u32 %v2217, 4294901760
        %2219 = vmatmul.mubr.f32.gmra.mxu0 %v2218
        %v2220 = vpop.f32.mrf.mxu0
        %v2221 = vadd.f32 %v1201, %v2220
        %v2222 = vpop.f32.mrf.mxu0
        %v2223 = vadd.f32 %v1203, %v2222
        %2224 = vmatprep.mubr.f32.mxu0 0.0
        %v2225 = vand.u32 %v2125, 4294901760
        %v2226 = vsub.f32 %v2125, %v2225
        %v2227 = vand.u32 %v2226, 4294901760
        %v2228 = vsub.f32 %v2226, %v2227
        %v2229 = vand.u32 %v2228, 4294901760
        %2230 = vmatmul.mubr.f32.gmra.mxu0 %v2229
        %v2231 = vpop.f32.mrf.mxu0
        %v2232 = vadd.f32 %v1208, %v2231
        %v2233 = vpop.f32.mrf.mxu0
        %v2234 = vadd.f32 %v1210, %v2233
        %2235 = vmatprep.mubr.f32.mxu0 0.0
        %v2236 = vand.u32 %v2128, 4294901760
        %v2237 = vsub.f32 %v2128, %v2236
        %v2238 = vand.u32 %v2237, 4294901760
        %v2239 = vsub.f32 %v2237, %v2238
        %v2240 = vand.u32 %v2239, 4294901760
        %2241 = vmatmul.mubr.f32.gmra.mxu0 %v2240
        %v2242 = vpop.f32.mrf.mxu0
        %v2243 = vadd.f32 %v1215, %v2242
        %v2244 = vpop.f32.mrf.mxu0
        %v2245 = vadd.f32 %v1217, %v2244
        %2246 = vdwg.mxu0
        %2247 = vmatprep.subr.mxu0 0.0
        %2248 = vmatpush1.msra.mxu0 0.0
        %2249 = vmatprep.subr.mxu0 0.0
        %2250 = vmatpush1.msra.mxu0 0.0
        %2251 = vmatprep.subr.mxu0 0.0
        %2252 = vmatpush1.msra.mxu0 0.0
        %2253 = vmatprep.subr.mxu0 0.0
        %2254 = vmatpush1.msra.mxu0 0.0
        %2255 = vmatprep.subr.mxu0 0.0
        %2256 = vmatpush1.msra.mxu0 0.0
        %2257 = vmatprep.subr.mxu0 0.0
        %2258 = vmatpush1.msra.mxu0 0.0
        %2259 = vmatprep.subr.mxu0 0.0
        %2260 = vmatpush1.msra.mxu0 0.0
        %2261 = vmatprep.subr.mxu0 0.0
        %2262 = vmatpush1.msra.mxu0 0.0
        %2263 = vmatprep.subr.mxu0 0.0
        %2264 = vmatpush1.msra.mxu0 0.0
        %2265 = vmatprep.subr.mxu0 0.0
        %2266 = vmatpush1.msra.mxu0 0.0
        %2267 = vmatprep.subr.mxu0 0.0
        %2268 = vmatpush1.msra.mxu0 0.0
        %2269 = vmatprep.subr.mxu0 0.0
        %2270 = vmatpush1.msra.mxu0 0.0
        %v2271 = vand.u32 %v253, 4294901760
        %v2272 = vsub.f32 %v253, %v2271
        %v2273 = vand.u32 %v2272, 4294901760
        %v2274 = vsub.f32 %v2272, %v2273
        %v2275 = vand.u32 %v2274, 4294901760
        %2276 = vmatprep.subr.mxu0 %v2275
        %v2277 = vand.u32 %v252, 4294901760
        %v2278 = vsub.f32 %v252, %v2277
        %v2279 = vand.u32 %v2278, 4294901760
        %v2280 = vsub.f32 %v2278, %v2279
        %v2281 = vand.u32 %v2280, 4294901760
        %2282 = vmatpush1.msra.mxu0 %v2281
        %v2283 = vand.u32 %v249, 4294901760
        %v2284 = vsub.f32 %v249, %v2283
        %v2285 = vand.u32 %v2284, 4294901760
        %v2286 = vsub.f32 %v2284, %v2285
        %v2287 = vand.u32 %v2286, 4294901760
        %2288 = vmatprep.subr.mxu0 %v2287
        %v2289 = vand.u32 %v248, 4294901760
        %v2290 = vsub.f32 %v248, %v2289
        %v2291 = vand.u32 %v2290, 4294901760
        %v2292 = vsub.f32 %v2290, %v2291
        %v2293 = vand.u32 %v2292, 4294901760
        %2294 = vmatpush1.msra.mxu0 %v2293
        %v2295 = vand.u32 %v245, 4294901760
        %v2296 = vsub.f32 %v245, %v2295
        %v2297 = vand.u32 %v2296, 4294901760
        %v2298 = vsub.f32 %v2296, %v2297
        %v2299 = vand.u32 %v2298, 4294901760
        %2300 = vmatprep.subr.mxu0 %v2299
        %v2301 = vand.u32 %v244, 4294901760
        %v2302 = vsub.f32 %v244, %v2301
        %v2303 = vand.u32 %v2302, 4294901760
        %v2304 = vsub.f32 %v2302, %v2303
        %v2305 = vand.u32 %v2304, 4294901760
        %2306 = vmatpush1.msra.mxu0 %v2305
        %v2307 = vand.u32 %v241, 4294901760
        %v2308 = vsub.f32 %v241, %v2307
        %v2309 = vand.u32 %v2308, 4294901760
        %v2310 = vsub.f32 %v2308, %v2309
        %v2311 = vand.u32 %v2310, 4294901760
        %2312 = vmatprep.subr.mxu0 %v2311
        %v2313 = vand.u32 %v240, 4294901760
        %v2314 = vsub.f32 %v240, %v2313
        %v2315 = vand.u32 %v2314, 4294901760
        %v2316 = vsub.f32 %v2314, %v2315
        %v2317 = vand.u32 %v2316, 4294901760
        %2318 = vmatpush1.msra.mxu0 %v2317
        %2319 = vmatprep.subr.mxu0 0.0
        %2320 = vmatpush2.msra.mxu0 0.0
        %2321 = vmatprep.subr.mxu0 0.0
        %2322 = vmatpush2.msra.mxu0 0.0
        %2323 = vmatprep.subr.mxu0 0.0
        %2324 = vmatpush2.msra.mxu0 0.0
        %2325 = vmatprep.subr.mxu0 0.0
        %2326 = vmatpush2.msra.mxu0 0.0
        %2327 = vmatprep.subr.mxu0 0.0
        %2328 = vmatpush2.msra.mxu0 0.0
        %2329 = vmatprep.subr.mxu0 0.0
        %2330 = vmatpush2.msra.mxu0 0.0
        %2331 = vmatprep.subr.mxu0 0.0
        %2332 = vmatpush2.msra.mxu0 0.0
        %2333 = vmatprep.subr.mxu0 0.0
        %2334 = vmatpush2.msra.mxu0 0.0
        %2335 = vmatprep.subr.mxu0 0.0
        %2336 = vmatpush2.msra.mxu0 0.0
        %2337 = vmatprep.subr.mxu0 0.0
        %2338 = vmatpush2.msra.mxu0 0.0
        %2339 = vmatprep.subr.mxu0 0.0
        %2340 = vmatpush2.msra.mxu0 0.0
        %2341 = vmatprep.subr.mxu0 0.0
        %2342 = vmatpush2.msra.mxu0 0.0
        %2343 = vmatprep.subr.mxu0 0.0
        %2344 = vmatpush2.msra.mxu0 0.0
        %2345 = vmatprep.subr.mxu0 0.0
        %2346 = vmatpush2.msra.mxu0 0.0
        %2347 = vmatprep.subr.mxu0 0.0
        %2348 = vmatpush2.msra.mxu0 0.0
        %2349 = vmatprep.subr.mxu0 0.0
        %2350 = vmatpush2.msra.mxu0 0.0
        %2351 = vmatprep.mubr.f32.mxu0 0.0
        %v2352 = vand.u32 %v2119, 4294901760
        %2353 = vmatmul.mubr.f32.gmra.mxu0 %v2352
        %v2354 = vpop.f32.mrf.mxu0
        %v2355 = vadd.f32 %v2210, %v2354
        %v2356 = vpop.f32.mrf.mxu0
        %v2357 = vadd.f32 %v2212, %v2356
        %2358 = vmatprep.mubr.f32.mxu0 0.0
        %v2359 = vand.u32 %v2122, 4294901760
        %2360 = vmatmul.mubr.f32.gmra.mxu0 %v2359
        %v2361 = vpop.f32.mrf.mxu0
        %v2362 = vadd.f32 %v2221, %v2361
        %v2363 = vpop.f32.mrf.mxu0
        %v2364 = vadd.f32 %v2223, %v2363
        %2365 = vmatprep.mubr.f32.mxu0 0.0
        %v2366 = vand.u32 %v2125, 4294901760
        %2367 = vmatmul.mubr.f32.gmra.mxu0 %v2366
        %v2368 = vpop.f32.mrf.mxu0
        %v2369 = vadd.f32 %v2232, %v2368
        %v2370 = vpop.f32.mrf.mxu0
        %v2371 = vadd.f32 %v2234, %v2370
        %2372 = vmatprep.mubr.f32.mxu0 0.0
        %v2373 = vand.u32 %v2128, 4294901760
        %2374 = vmatmul.mubr.f32.gmra.mxu0 %v2373
        %v2375 = vpop.f32.mrf.mxu0
        %v2376 = vadd.f32 %v2243, %v2375
        %v2377 = vpop.f32.mrf.mxu0
        %v2378 = vadd.f32 %v2245, %v2377
        %2379 = vdwg.mxu0
        %2380 = vmatprep.subr.mxu0 0.0
        %2381 = vmatpush1.msra.mxu0 0.0
        %2382 = vmatprep.subr.mxu0 0.0
        %2383 = vmatpush1.msra.mxu0 0.0
        %2384 = vmatprep.subr.mxu0 0.0
        %2385 = vmatpush1.msra.mxu0 0.0
        %2386 = vmatprep.subr.mxu0 0.0
        %2387 = vmatpush1.msra.mxu0 0.0
        %2388 = vmatprep.subr.mxu0 0.0
        %2389 = vmatpush1.msra.mxu0 0.0
        %2390 = vmatprep.subr.mxu0 0.0
        %2391 = vmatpush1.msra.mxu0 0.0
        %2392 = vmatprep.subr.mxu0 0.0
        %2393 = vmatpush1.msra.mxu0 0.0
        %2394 = vmatprep.subr.mxu0 0.0
        %2395 = vmatpush1.msra.mxu0 0.0
        %2396 = vmatprep.subr.mxu0 0.0
        %2397 = vmatpush1.msra.mxu0 0.0
        %2398 = vmatprep.subr.mxu0 0.0
        %2399 = vmatpush1.msra.mxu0 0.0
        %2400 = vmatprep.subr.mxu0 0.0
        %2401 = vmatpush1.msra.mxu0 0.0
        %2402 = vmatprep.subr.mxu0 0.0
        %2403 = vmatpush1.msra.mxu0 0.0
        %v2404 = vand.u32 %v253, 4294901760
        %v2405 = vsub.f32 %v253, %v2404
        %2406 = vmatprep.subr.mxu0 %v2405
        %v2407 = vand.u32 %v252, 4294901760
        %v2408 = vsub.f32 %v252, %v2407
        %2409 = vmatpush1.msra.mxu0 %v2408
        %v2410 = vand.u32 %v249, 4294901760
        %v2411 = vsub.f32 %v249, %v2410
        %2412 = vmatprep.subr.mxu0 %v2411
        %v2413 = vand.u32 %v248, 4294901760
        %v2414 = vsub.f32 %v248, %v2413
        %2415 = vmatpush1.msra.mxu0 %v2414
        %v2416 = vand.u32 %v245, 4294901760
        %v2417 = vsub.f32 %v245, %v2416
        %2418 = vmatprep.subr.mxu0 %v2417
        %v2419 = vand.u32 %v244, 4294901760
        %v2420 = vsub.f32 %v244, %v2419
        %2421 = vmatpush1.msra.mxu0 %v2420
        %v2422 = vand.u32 %v241, 4294901760
        %v2423 = vsub.f32 %v241, %v2422
        %2424 = vmatprep.subr.mxu0 %v2423
        %v2425 = vand.u32 %v240, 4294901760
        %v2426 = vsub.f32 %v240, %v2425
        %2427 = vmatpush1.msra.mxu0 %v2426
        %2428 = vmatprep.subr.mxu0 0.0
        %2429 = vmatpush2.msra.mxu0 0.0
        %2430 = vmatprep.subr.mxu0 0.0
        %2431 = vmatpush2.msra.mxu0 0.0
        %2432 = vmatprep.subr.mxu0 0.0
        %2433 = vmatpush2.msra.mxu0 0.0
        %2434 = vmatprep.subr.mxu0 0.0
        %2435 = vmatpush2.msra.mxu0 0.0
        %2436 = vmatprep.subr.mxu0 0.0
        %2437 = vmatpush2.msra.mxu0 0.0
        %2438 = vmatprep.subr.mxu0 0.0
        %2439 = vmatpush2.msra.mxu0 0.0
        %2440 = vmatprep.subr.mxu0 0.0
        %2441 = vmatpush2.msra.mxu0 0.0
        %2442 = vmatprep.subr.mxu0 0.0
        %2443 = vmatpush2.msra.mxu0 0.0
        %2444 = vmatprep.subr.mxu0 0.0
        %2445 = vmatpush2.msra.mxu0 0.0
        %2446 = vmatprep.subr.mxu0 0.0
        %2447 = vmatpush2.msra.mxu0 0.0
        %2448 = vmatprep.subr.mxu0 0.0
        %2449 = vmatpush2.msra.mxu0 0.0
        %2450 = vmatprep.subr.mxu0 0.0
        %2451 = vmatpush2.msra.mxu0 0.0
        %2452 = vmatprep.subr.mxu0 0.0
        %2453 = vmatpush2.msra.mxu0 0.0
        %2454 = vmatprep.subr.mxu0 0.0
        %2455 = vmatpush2.msra.mxu0 0.0
        %2456 = vmatprep.subr.mxu0 0.0
        %2457 = vmatpush2.msra.mxu0 0.0
        %2458 = vmatprep.subr.mxu0 0.0
        %2459 = vmatpush2.msra.mxu0 0.0
        %2460 = vmatprep.mubr.f32.mxu0 0.0
        %v2461 = vand.u32 %v2119, 4294901760
        %v2462 = vsub.f32 %v2119, %v2461
        %2463 = vmatmul.mubr.f32.gmra.mxu0 %v2462
        %v2464 = vpop.f32.mrf.mxu0
        %v2465 = vadd.f32 %v2355, %v2464
        %v2466 = vpop.f32.mrf.mxu0
        %v2467 = vadd.f32 %v2357, %v2466
        %2468 = vmatprep.mubr.f32.mxu0 0.0
        %v2469 = vand.u32 %v2122, 4294901760
        %v2470 = vsub.f32 %v2122, %v2469
        %2471 = vmatmul.mubr.f32.gmra.mxu0 %v2470
        %v2472 = vpop.f32.mrf.mxu0
        %v2473 = vadd.f32 %v2362, %v2472
        %v2474 = vpop.f32.mrf.mxu0
        %v2475 = vadd.f32 %v2364, %v2474
        %2476 = vmatprep.mubr.f32.mxu0 0.0
        %v2477 = vand.u32 %v2125, 4294901760
        %v2478 = vsub.f32 %v2125, %v2477
        %2479 = vmatmul.mubr.f32.gmra.mxu0 %v2478
        %v2480 = vpop.f32.mrf.mxu0
        %v2481 = vadd.f32 %v2369, %v2480
        %v2482 = vpop.f32.mrf.mxu0
        %v2483 = vadd.f32 %v2371, %v2482
        %2484 = vmatprep.mubr.f32.mxu0 0.0
        %v2485 = vand.u32 %v2128, 4294901760
        %v2486 = vsub.f32 %v2128, %v2485
        %2487 = vmatmul.mubr.f32.gmra.mxu0 %v2486
        %v2488 = vpop.f32.mrf.mxu0
        %v2489 = vadd.f32 %v2376, %v2488
        %v2490 = vpop.f32.mrf.mxu0
        %v2491 = vadd.f32 %v2378, %v2490
        %2492 = vdwg.mxu0
        %2493 = vmatprep.subr.mxu0 0.0
        %2494 = vmatpush1.msra.mxu0 0.0
        %2495 = vmatprep.subr.mxu0 0.0
        %2496 = vmatpush1.msra.mxu0 0.0
        %2497 = vmatprep.subr.mxu0 0.0
        %2498 = vmatpush1.msra.mxu0 0.0
        %2499 = vmatprep.subr.mxu0 0.0
        %2500 = vmatpush1.msra.mxu0 0.0
        %2501 = vmatprep.subr.mxu0 0.0
        %2502 = vmatpush1.msra.mxu0 0.0
        %2503 = vmatprep.subr.mxu0 0.0
        %2504 = vmatpush1.msra.mxu0 0.0
        %2505 = vmatprep.subr.mxu0 0.0
        %2506 = vmatpush1.msra.mxu0 0.0
        %2507 = vmatprep.subr.mxu0 0.0
        %2508 = vmatpush1.msra.mxu0 0.0
        %2509 = vmatprep.subr.mxu0 0.0
        %2510 = vmatpush1.msra.mxu0 0.0
        %2511 = vmatprep.subr.mxu0 0.0
        %2512 = vmatpush1.msra.mxu0 0.0
        %2513 = vmatprep.subr.mxu0 0.0
        %2514 = vmatpush1.msra.mxu0 0.0
        %2515 = vmatprep.subr.mxu0 0.0
        %2516 = vmatpush1.msra.mxu0 0.0
        %v2517 = vand.u32 %v253, 4294901760
        %2518 = vmatprep.subr.mxu0 %v2517
        %v2519 = vand.u32 %v252, 4294901760
        %2520 = vmatpush1.msra.mxu0 %v2519
        %v2521 = vand.u32 %v249, 4294901760
        %2522 = vmatprep.subr.mxu0 %v2521
        %v2523 = vand.u32 %v248, 4294901760
        %2524 = vmatpush1.msra.mxu0 %v2523
        %v2525 = vand.u32 %v245, 4294901760
        %2526 = vmatprep.subr.mxu0 %v2525
        %v2527 = vand.u32 %v244, 4294901760
        %2528 = vmatpush1.msra.mxu0 %v2527
        %v2529 = vand.u32 %v241, 4294901760
        %2530 = vmatprep.subr.mxu0 %v2529
        %v2531 = vand.u32 %v240, 4294901760
        %2532 = vmatpush1.msra.mxu0 %v2531
        %2533 = vmatprep.subr.mxu0 0.0
        %2534 = vmatpush2.msra.mxu0 0.0
        %2535 = vmatprep.subr.mxu0 0.0
        %2536 = vmatpush2.msra.mxu0 0.0
        %2537 = vmatprep.subr.mxu0 0.0
        %2538 = vmatpush2.msra.mxu0 0.0
        %2539 = vmatprep.subr.mxu0 0.0
        %2540 = vmatpush2.msra.mxu0 0.0
        %2541 = vmatprep.subr.mxu0 0.0
        %2542 = vmatpush2.msra.mxu0 0.0
        %2543 = vmatprep.subr.mxu0 0.0
        %2544 = vmatpush2.msra.mxu0 0.0
        %2545 = vmatprep.subr.mxu0 0.0
        %2546 = vmatpush2.msra.mxu0 0.0
        %2547 = vmatprep.subr.mxu0 0.0
        %2548 = vmatpush2.msra.mxu0 0.0
        %2549 = vmatprep.subr.mxu0 0.0
        %2550 = vmatpush2.msra.mxu0 0.0
        %2551 = vmatprep.subr.mxu0 0.0
        %2552 = vmatpush2.msra.mxu0 0.0
        %2553 = vmatprep.subr.mxu0 0.0
        %2554 = vmatpush2.msra.mxu0 0.0
        %2555 = vmatprep.subr.mxu0 0.0
        %2556 = vmatpush2.msra.mxu0 0.0
        %2557 = vmatprep.subr.mxu0 0.0
        %2558 = vmatpush2.msra.mxu0 0.0
        %2559 = vmatprep.subr.mxu0 0.0
        %2560 = vmatpush2.msra.mxu0 0.0
        %2561 = vmatprep.subr.mxu0 0.0
        %2562 = vmatpush2.msra.mxu0 0.0
        %2563 = vmatprep.subr.mxu0 0.0
        %2564 = vmatpush2.msra.mxu0 0.0
        %2565 = vmatprep.mubr.f32.mxu0 0.0
        %v2566 = vand.u32 %v2119, 4294901760
        %v2567 = vsub.f32 %v2119, %v2566
        %v2568 = vand.u32 %v2567, 4294901760
        %2569 = vmatmul.mubr.f32.gmra.mxu0 %v2568
        %v2570 = vpop.f32.mrf.mxu0
        %v2571 = vadd.f32 %v2465, %v2570
        %v2572 = vpop.f32.mrf.mxu0
        %v2573 = vadd.f32 %v2467, %v2572
        %2574 = vmatprep.mubr.f32.mxu0 0.0
        %v2575 = vand.u32 %v2122, 4294901760
        %v2576 = vsub.f32 %v2122, %v2575
        %v2577 = vand.u32 %v2576, 4294901760
        %2578 = vmatmul.mubr.f32.gmra.mxu0 %v2577
        %v2579 = vpop.f32.mrf.mxu0
        %v2580 = vadd.f32 %v2473, %v2579
        %v2581 = vpop.f32.mrf.mxu0
        %v2582 = vadd.f32 %v2475, %v2581
        %2583 = vmatprep.mubr.f32.mxu0 0.0
        %v2584 = vand.u32 %v2125, 4294901760
        %v2585 = vsub.f32 %v2125, %v2584
        %v2586 = vand.u32 %v2585, 4294901760
        %2587 = vmatmul.mubr.f32.gmra.mxu0 %v2586
        %v2588 = vpop.f32.mrf.mxu0
        %v2589 = vadd.f32 %v2481, %v2588
        %v2590 = vpop.f32.mrf.mxu0
        %v2591 = vadd.f32 %v2483, %v2590
        %2592 = vmatprep.mubr.f32.mxu0 0.0
        %v2593 = vand.u32 %v2128, 4294901760
        %v2594 = vsub.f32 %v2128, %v2593
        %v2595 = vand.u32 %v2594, 4294901760
        %2596 = vmatmul.mubr.f32.gmra.mxu0 %v2595
        %v2597 = vpop.f32.mrf.mxu0
        %v2598 = vadd.f32 %v2489, %v2597
        %v2599 = vpop.f32.mrf.mxu0
        %v2600 = vadd.f32 %v2491, %v2599
        %2601 = vdwg.mxu0
        %2602 = vmatprep.subr.mxu0 0.0
        %2603 = vmatpush1.msra.mxu0 0.0
        %2604 = vmatprep.subr.mxu0 0.0
        %2605 = vmatpush1.msra.mxu0 0.0
        %2606 = vmatprep.subr.mxu0 0.0
        %2607 = vmatpush1.msra.mxu0 0.0
        %2608 = vmatprep.subr.mxu0 0.0
        %2609 = vmatpush1.msra.mxu0 0.0
        %2610 = vmatprep.subr.mxu0 0.0
        %2611 = vmatpush1.msra.mxu0 0.0
        %2612 = vmatprep.subr.mxu0 0.0
        %2613 = vmatpush1.msra.mxu0 0.0
        %2614 = vmatprep.subr.mxu0 0.0
        %2615 = vmatpush1.msra.mxu0 0.0
        %2616 = vmatprep.subr.mxu0 0.0
        %2617 = vmatpush1.msra.mxu0 0.0
        %2618 = vmatprep.subr.mxu0 0.0
        %2619 = vmatpush1.msra.mxu0 0.0
        %2620 = vmatprep.subr.mxu0 0.0
        %2621 = vmatpush1.msra.mxu0 0.0
        %2622 = vmatprep.subr.mxu0 0.0
        %2623 = vmatpush1.msra.mxu0 0.0
        %2624 = vmatprep.subr.mxu0 0.0
        %2625 = vmatpush1.msra.mxu0 0.0
        %v2626 = vand.u32 %v253, 4294901760
        %v2627 = vsub.f32 %v253, %v2626
        %v2628 = vand.u32 %v2627, 4294901760
        %2629 = vmatprep.subr.mxu0 %v2628
        %v2630 = vand.u32 %v252, 4294901760
        %v2631 = vsub.f32 %v252, %v2630
        %v2632 = vand.u32 %v2631, 4294901760
        %2633 = vmatpush1.msra.mxu0 %v2632
        %v2634 = vand.u32 %v249, 4294901760
        %v2635 = vsub.f32 %v249, %v2634
        %v2636 = vand.u32 %v2635, 4294901760
        %2637 = vmatprep.subr.mxu0 %v2636
        %v2638 = vand.u32 %v248, 4294901760
        %v2639 = vsub.f32 %v248, %v2638
        %v2640 = vand.u32 %v2639, 4294901760
        %2641 = vmatpush1.msra.mxu0 %v2640
        %v2642 = vand.u32 %v245, 4294901760
        %v2643 = vsub.f32 %v245, %v2642
        %v2644 = vand.u32 %v2643, 4294901760
        %2645 = vmatprep.subr.mxu0 %v2644
        %v2646 = vand.u32 %v244, 4294901760
        %v2647 = vsub.f32 %v244, %v2646
        %v2648 = vand.u32 %v2647, 4294901760
        %2649 = vmatpush1.msra.mxu0 %v2648
        %v2650 = vand.u32 %v241, 4294901760
        %v2651 = vsub.f32 %v241, %v2650
        %v2652 = vand.u32 %v2651, 4294901760
        %2653 = vmatprep.subr.mxu0 %v2652
        %v2654 = vand.u32 %v240, 4294901760
        %v2655 = vsub.f32 %v240, %v2654
        %v2656 = vand.u32 %v2655, 4294901760
        %2657 = vmatpush1.msra.mxu0 %v2656
        %2658 = vmatprep.subr.mxu0 0.0
        %2659 = vmatpush2.msra.mxu0 0.0
        %2660 = vmatprep.subr.mxu0 0.0
        %2661 = vmatpush2.msra.mxu0 0.0
        %2662 = vmatprep.subr.mxu0 0.0
        %2663 = vmatpush2.msra.mxu0 0.0
        %2664 = vmatprep.subr.mxu0 0.0
        %2665 = vmatpush2.msra.mxu0 0.0
        %2666 = vmatprep.subr.mxu0 0.0
        %2667 = vmatpush2.msra.mxu0 0.0
        %2668 = vmatprep.subr.mxu0 0.0
        %2669 = vmatpush2.msra.mxu0 0.0
        %2670 = vmatprep.subr.mxu0 0.0
        %2671 = vmatpush2.msra.mxu0 0.0
        %2672 = vmatprep.subr.mxu0 0.0
        %2673 = vmatpush2.msra.mxu0 0.0
        %2674 = vmatprep.subr.mxu0 0.0
        %2675 = vmatpush2.msra.mxu0 0.0
        %2676 = vmatprep.subr.mxu0 0.0
        %2677 = vmatpush2.msra.mxu0 0.0
        %2678 = vmatprep.subr.mxu0 0.0
        %2679 = vmatpush2.msra.mxu0 0.0
        %2680 = vmatprep.subr.mxu0 0.0
        %2681 = vmatpush2.msra.mxu0 0.0
        %2682 = vmatprep.subr.mxu0 0.0
        %2683 = vmatpush2.msra.mxu0 0.0
        %2684 = vmatprep.subr.mxu0 0.0
        %2685 = vmatpush2.msra.mxu0 0.0
        %2686 = vmatprep.subr.mxu0 0.0
        %2687 = vmatpush2.msra.mxu0 0.0
        %2688 = vmatprep.subr.mxu0 0.0
        %2689 = vmatpush2.msra.mxu0 0.0
        %2690 = vmatprep.mubr.f32.mxu0 0.0
        %v2691 = vand.u32 %v2119, 4294901760
        %2692 = vmatmul.mubr.f32.gmra.mxu0 %v2691
        %v2693 = vpop.f32.mrf.mxu0
        %v2694 = vadd.f32 %v2571, %v2693
        %v2695 = vpop.f32.mrf.mxu0
        %v2696 = vadd.f32 %v2573, %v2695
        %2697 = vmatprep.mubr.f32.mxu0 0.0
        %v2698 = vand.u32 %v2122, 4294901760
        %2699 = vmatmul.mubr.f32.gmra.mxu0 %v2698
        %v2700 = vpop.f32.mrf.mxu0
        %v2701 = vadd.f32 %v2580, %v2700
        %v2702 = vpop.f32.mrf.mxu0
        %v2703 = vadd.f32 %v2582, %v2702
        %2704 = vmatprep.mubr.f32.mxu0 0.0
        %v2705 = vand.u32 %v2125, 4294901760
        %2706 = vmatmul.mubr.f32.gmra.mxu0 %v2705
        %v2707 = vpop.f32.mrf.mxu0
        %v2708 = vadd.f32 %v2589, %v2707
        %v2709 = vpop.f32.mrf.mxu0
        %v2710 = vadd.f32 %v2591, %v2709
        %2711 = vmatprep.mubr.f32.mxu0 0.0
        %v2712 = vand.u32 %v2128, 4294901760
        %2713 = vmatmul.mubr.f32.gmra.mxu0 %v2712
        %v2714 = vpop.f32.mrf.mxu0
        %v2715 = vadd.f32 %v2598, %v2714
        %v2716 = vpop.f32.mrf.mxu0
        %v2717 = vadd.f32 %v2600, %v2716
        %2718 = vdwg.mxu0
        %2719 = vmatprep.subr.mxu0 0.0
        %2720 = vmatpush1.msra.mxu0 0.0
        %2721 = vmatprep.subr.mxu0 0.0
        %2722 = vmatpush1.msra.mxu0 0.0
        %2723 = vmatprep.subr.mxu0 0.0
        %2724 = vmatpush1.msra.mxu0 0.0
        %2725 = vmatprep.subr.mxu0 0.0
        %2726 = vmatpush1.msra.mxu0 0.0
        %2727 = vmatprep.subr.mxu0 0.0
        %2728 = vmatpush1.msra.mxu0 0.0
        %2729 = vmatprep.subr.mxu0 0.0
        %2730 = vmatpush1.msra.mxu0 0.0
        %2731 = vmatprep.subr.mxu0 0.0
        %2732 = vmatpush1.msra.mxu0 0.0
        %2733 = vmatprep.subr.mxu0 0.0
        %2734 = vmatpush1.msra.mxu0 0.0
        %2735 = vmatprep.subr.mxu0 0.0
        %2736 = vmatpush1.msra.mxu0 0.0
        %2737 = vmatprep.subr.mxu0 0.0
        %2738 = vmatpush1.msra.mxu0 0.0
        %2739 = vmatprep.subr.mxu0 0.0
        %2740 = vmatpush1.msra.mxu0 0.0
        %2741 = vmatprep.subr.mxu0 0.0
        %2742 = vmatpush1.msra.mxu0 0.0
        %v2743 = vand.u32 %v253, 4294901760
        %2744 = vmatprep.subr.mxu0 %v2743
        %v2745 = vand.u32 %v252, 4294901760
        %2746 = vmatpush1.msra.mxu0 %v2745
        %v2747 = vand.u32 %v249, 4294901760
        %2748 = vmatprep.subr.mxu0 %v2747
        %v2749 = vand.u32 %v248, 4294901760
        %2750 = vmatpush1.msra.mxu0 %v2749
        %v2751 = vand.u32 %v245, 4294901760
        %2752 = vmatprep.subr.mxu0 %v2751
        %v2753 = vand.u32 %v244, 4294901760
        %2754 = vmatpush1.msra.mxu0 %v2753
        %v2755 = vand.u32 %v241, 4294901760
        %2756 = vmatprep.subr.mxu0 %v2755
        %v2757 = vand.u32 %v240, 4294901760
        %2758 = vmatpush1.msra.mxu0 %v2757
        %2759 = vmatprep.subr.mxu0 0.0
        %2760 = vmatpush2.msra.mxu0 0.0
        %2761 = vmatprep.subr.mxu0 0.0
        %2762 = vmatpush2.msra.mxu0 0.0
        %2763 = vmatprep.subr.mxu0 0.0
        %2764 = vmatpush2.msra.mxu0 0.0
        %2765 = vmatprep.subr.mxu0 0.0
        %2766 = vmatpush2.msra.mxu0 0.0
        %2767 = vmatprep.subr.mxu0 0.0
        %2768 = vmatpush2.msra.mxu0 0.0
        %2769 = vmatprep.subr.mxu0 0.0
        %2770 = vmatpush2.msra.mxu0 0.0
        %2771 = vmatprep.subr.mxu0 0.0
        %2772 = vmatpush2.msra.mxu0 0.0
        %2773 = vmatprep.subr.mxu0 0.0
        %2774 = vmatpush2.msra.mxu0 0.0
        %2775 = vmatprep.subr.mxu0 0.0
        %2776 = vmatpush2.msra.mxu0 0.0
        %2777 = vmatprep.subr.mxu0 0.0
        %2778 = vmatpush2.msra.mxu0 0.0
        %2779 = vmatprep.subr.mxu0 0.0
        %2780 = vmatpush2.msra.mxu0 0.0
        %2781 = vmatprep.subr.mxu0 0.0
        %2782 = vmatpush2.msra.mxu0 0.0
        %2783 = vmatprep.subr.mxu0 0.0
        %2784 = vmatpush2.msra.mxu0 0.0
        %2785 = vmatprep.subr.mxu0 0.0
        %2786 = vmatpush2.msra.mxu0 0.0
        %2787 = vmatprep.subr.mxu0 0.0
        %2788 = vmatpush2.msra.mxu0 0.0
        %2789 = vmatprep.subr.mxu0 0.0
        %2790 = vmatpush2.msra.mxu0 0.0
        %2791 = vmatprep.mubr.f32.mxu0 0.0
        %v2792 = vand.u32 %v2119, 4294901760
        %2793 = vmatmul.mubr.f32.gmra.mxu0 %v2792
        %v2794 = vpop.f32.mrf.mxu0
        %v2795 = vadd.f32 %v2694, %v2794
        %v2796 = vpop.f32.mrf.mxu0
        %v2797 = vadd.f32 %v2696, %v2796
        %2798 = vmatprep.mubr.f32.mxu0 0.0
        %v2799 = vand.u32 %v2122, 4294901760
        %2800 = vmatmul.mubr.f32.gmra.mxu0 %v2799
        %v2801 = vpop.f32.mrf.mxu0
        %v2802 = vadd.f32 %v2701, %v2801
        %v2803 = vpop.f32.mrf.mxu0
        %v2804 = vadd.f32 %v2703, %v2803
        %2805 = vmatprep.mubr.f32.mxu0 0.0
        %v2806 = vand.u32 %v2125, 4294901760
        %2807 = vmatmul.mubr.f32.gmra.mxu0 %v2806
        %v2808 = vpop.f32.mrf.mxu0
        %v2809 = vadd.f32 %v2708, %v2808
        %v2810 = vpop.f32.mrf.mxu0
        %v2811 = vadd.f32 %v2710, %v2810
        %2812 = vmatprep.mubr.f32.mxu0 0.0
        %v2813 = vand.u32 %v2128, 4294901760
        %2814 = vmatmul.mubr.f32.gmra.mxu0 %v2813
        %v2815 = vpop.f32.mrf.mxu0
        %v2816 = vadd.f32 %v2715, %v2815
        %v2817 = vpop.f32.mrf.mxu0
        %v2818 = vadd.f32 %v2717, %v2817
        %2819 = vdwg.mxu0
        %2820 = vmatprep.subr.mxu0 0.0
        %2821 = vmatpush1.msra.mxu0 0.0
        %2822 = vmatprep.subr.mxu0 0.0
        %2823 = vmatpush1.msra.mxu0 0.0
        %2824 = vmatprep.subr.mxu0 0.0
        %2825 = vmatpush1.msra.mxu0 0.0
        %2826 = vmatprep.subr.mxu0 0.0
        %2827 = vmatpush1.msra.mxu0 0.0
        %2828 = vmatprep.subr.mxu0 0.0
        %2829 = vmatpush1.msra.mxu0 0.0
        %2830 = vmatprep.subr.mxu0 0.0
        %2831 = vmatpush1.msra.mxu0 0.0
        %2832 = vmatprep.subr.mxu0 0.0
        %2833 = vmatpush1.msra.mxu0 0.0
        %2834 = vmatprep.subr.mxu0 0.0
        %2835 = vmatpush1.msra.mxu0 0.0
        %2836 = vmatprep.subr.mxu0 0.0
        %2837 = vmatpush1.msra.mxu0 0.0
        %2838 = vmatprep.subr.mxu0 0.0
        %2839 = vmatpush1.msra.mxu0 0.0
        %2840 = vmatprep.subr.mxu0 0.0
        %2841 = vmatpush1.msra.mxu0 0.0
        %2842 = vmatprep.subr.mxu0 0.0
        %2843 = vmatpush1.msra.mxu0 0.0
        %v2844 = vand.u32 %v255, 4294901760
        %2845 = vmatprep.subr.mxu0 %v2844
        %v2846 = vand.u32 %v254, 4294901760
        %2847 = vmatpush1.msra.mxu0 %v2846
        %v2848 = vand.u32 %v251, 4294901760
        %2849 = vmatprep.subr.mxu0 %v2848
        %v2850 = vand.u32 %v250, 4294901760
        %2851 = vmatpush1.msra.mxu0 %v2850
        %v2852 = vand.u32 %v247, 4294901760
        %2853 = vmatprep.subr.mxu0 %v2852
        %v2854 = vand.u32 %v246, 4294901760
        %2855 = vmatpush1.msra.mxu0 %v2854
        %v2856 = vand.u32 %v243, 4294901760
        %2857 = vmatprep.subr.mxu0 %v2856
        %v2858 = vand.u32 %v242, 4294901760
        %2859 = vmatpush1.msra.mxu0 %v2858
        %2860 = vmatprep.subr.mxu0 0.0
        %2861 = vmatpush2.msra.mxu0 0.0
        %2862 = vmatprep.subr.mxu0 0.0
        %2863 = vmatpush2.msra.mxu0 0.0
        %2864 = vmatprep.subr.mxu0 0.0
        %2865 = vmatpush2.msra.mxu0 0.0
        %2866 = vmatprep.subr.mxu0 0.0
        %2867 = vmatpush2.msra.mxu0 0.0
        %2868 = vmatprep.subr.mxu0 0.0
        %2869 = vmatpush2.msra.mxu0 0.0
        %2870 = vmatprep.subr.mxu0 0.0
        %2871 = vmatpush2.msra.mxu0 0.0
        %2872 = vmatprep.subr.mxu0 0.0
        %2873 = vmatpush2.msra.mxu0 0.0
        %2874 = vmatprep.subr.mxu0 0.0
        %2875 = vmatpush2.msra.mxu0 0.0
        %2876 = vmatprep.subr.mxu0 0.0
        %2877 = vmatpush2.msra.mxu0 0.0
        %2878 = vmatprep.subr.mxu0 0.0
        %2879 = vmatpush2.msra.mxu0 0.0
        %2880 = vmatprep.subr.mxu0 0.0
        %2881 = vmatpush2.msra.mxu0 0.0
        %2882 = vmatprep.subr.mxu0 0.0
        %2883 = vmatpush2.msra.mxu0 0.0
        %2884 = vmatprep.subr.mxu0 0.0
        %2885 = vmatpush2.msra.mxu0 0.0
        %2886 = vmatprep.subr.mxu0 0.0
        %2887 = vmatpush2.msra.mxu0 0.0
        %2888 = vmatprep.subr.mxu0 0.0
        %2889 = vmatpush2.msra.mxu0 0.0
        %2890 = vmatprep.subr.mxu0 0.0
        %2891 = vmatpush2.msra.mxu0 0.0
        %2892 = vmatprep.mubr.f32.mxu0 0.0
        %v2893 = vand.u32 %v2119, 4294901760
        %v2894 = vsub.f32 %v2119, %v2893
        %v2895 = vand.u32 %v2894, 4294901760
        %v2896 = vsub.f32 %v2894, %v2895
        %v2897 = vand.u32 %v2896, 4294901760
        %2898 = vmatmul.mubr.f32.gmra.mxu0 %v2897
        %v2899 = vpop.f32.mrf.mxu0
        %v2900 = vadd.f32 %v2092, %v2899
        %v2901 = vpop.f32.mrf.mxu0
        %v2902 = vadd.f32 %v2094, %v2901
        %2903 = vmatprep.mubr.f32.mxu0 0.0
        %v2904 = vand.u32 %v2122, 4294901760
        %v2905 = vsub.f32 %v2122, %v2904
        %v2906 = vand.u32 %v2905, 4294901760
        %v2907 = vsub.f32 %v2905, %v2906
        %v2908 = vand.u32 %v2907, 4294901760
        %2909 = vmatmul.mubr.f32.gmra.mxu0 %v2908
        %v2910 = vpop.f32.mrf.mxu0
        %v2911 = vadd.f32 %v2099, %v2910
        %v2912 = vpop.f32.mrf.mxu0
        %v2913 = vadd.f32 %v2101, %v2912
        %2914 = vmatprep.mubr.f32.mxu0 0.0
        %v2915 = vand.u32 %v2125, 4294901760
        %v2916 = vsub.f32 %v2125, %v2915
        %v2917 = vand.u32 %v2916, 4294901760
        %v2918 = vsub.f32 %v2916, %v2917
        %v2919 = vand.u32 %v2918, 4294901760
        %2920 = vmatmul.mubr.f32.gmra.mxu0 %v2919
        %v2921 = vpop.f32.mrf.mxu0
        %v2922 = vadd.f32 %v2106, %v2921
        %v2923 = vpop.f32.mrf.mxu0
        %v2924 = vadd.f32 %v2108, %v2923
        %2925 = vmatprep.mubr.f32.mxu0 0.0
        %v2926 = vand.u32 %v2128, 4294901760
        %v2927 = vsub.f32 %v2128, %v2926
        %v2928 = vand.u32 %v2927, 4294901760
        %v2929 = vsub.f32 %v2927, %v2928
        %v2930 = vand.u32 %v2929, 4294901760
        %2931 = vmatmul.mubr.f32.gmra.mxu0 %v2930
        %v2932 = vpop.f32.mrf.mxu0
        %v2933 = vadd.f32 %v2113, %v2932
        %v2934 = vpop.f32.mrf.mxu0
        %v2935 = vadd.f32 %v2115, %v2934
        %2936 = vdwg.mxu0
        %2937 = vmatprep.subr.mxu0 0.0
        %2938 = vmatpush1.msra.mxu0 0.0
        %2939 = vmatprep.subr.mxu0 0.0
        %2940 = vmatpush1.msra.mxu0 0.0
        %2941 = vmatprep.subr.mxu0 0.0
        %2942 = vmatpush1.msra.mxu0 0.0
        %2943 = vmatprep.subr.mxu0 0.0
        %2944 = vmatpush1.msra.mxu0 0.0
        %2945 = vmatprep.subr.mxu0 0.0
        %2946 = vmatpush1.msra.mxu0 0.0
        %2947 = vmatprep.subr.mxu0 0.0
        %2948 = vmatpush1.msra.mxu0 0.0
        %2949 = vmatprep.subr.mxu0 0.0
        %2950 = vmatpush1.msra.mxu0 0.0
        %2951 = vmatprep.subr.mxu0 0.0
        %2952 = vmatpush1.msra.mxu0 0.0
        %2953 = vmatprep.subr.mxu0 0.0
        %2954 = vmatpush1.msra.mxu0 0.0
        %2955 = vmatprep.subr.mxu0 0.0
        %2956 = vmatpush1.msra.mxu0 0.0
        %2957 = vmatprep.subr.mxu0 0.0
        %2958 = vmatpush1.msra.mxu0 0.0
        %2959 = vmatprep.subr.mxu0 0.0
        %2960 = vmatpush1.msra.mxu0 0.0
        %v2961 = vand.u32 %v255, 4294901760
        %v2962 = vsub.f32 %v255, %v2961
        %v2963 = vand.u32 %v2962, 4294901760
        %v2964 = vsub.f32 %v2962, %v2963
        %v2965 = vand.u32 %v2964, 4294901760
        %2966 = vmatprep.subr.mxu0 %v2965
        %v2967 = vand.u32 %v254, 4294901760
        %v2968 = vsub.f32 %v254, %v2967
        %v2969 = vand.u32 %v2968, 4294901760
        %v2970 = vsub.f32 %v2968, %v2969
        %v2971 = vand.u32 %v2970, 4294901760
        %2972 = vmatpush1.msra.mxu0 %v2971
        %v2973 = vand.u32 %v251, 4294901760
        %v2974 = vsub.f32 %v251, %v2973
        %v2975 = vand.u32 %v2974, 4294901760
        %v2976 = vsub.f32 %v2974, %v2975
        %v2977 = vand.u32 %v2976, 4294901760
        %2978 = vmatprep.subr.mxu0 %v2977
        %v2979 = vand.u32 %v250, 4294901760
        %v2980 = vsub.f32 %v250, %v2979
        %v2981 = vand.u32 %v2980, 4294901760
        %v2982 = vsub.f32 %v2980, %v2981
        %v2983 = vand.u32 %v2982, 4294901760
        %2984 = vmatpush1.msra.mxu0 %v2983
        %v2985 = vand.u32 %v247, 4294901760
        %v2986 = vsub.f32 %v247, %v2985
        %v2987 = vand.u32 %v2986, 4294901760
        %v2988 = vsub.f32 %v2986, %v2987
        %v2989 = vand.u32 %v2988, 4294901760
        %2990 = vmatprep.subr.mxu0 %v2989
        %v2991 = vand.u32 %v246, 4294901760
        %v2992 = vsub.f32 %v246, %v2991
        %v2993 = vand.u32 %v2992, 4294901760
        %v2994 = vsub.f32 %v2992, %v2993
        %v2995 = vand.u32 %v2994, 4294901760
        %2996 = vmatpush1.msra.mxu0 %v2995
        %v2997 = vand.u32 %v243, 4294901760
        %v2998 = vsub.f32 %v243, %v2997
        %v2999 = vand.u32 %v2998, 4294901760
        %v3000 = vsub.f32 %v2998, %v2999
        %v3001 = vand.u32 %v3000, 4294901760
        %3002 = vmatprep.subr.mxu0 %v3001
        %v3003 = vand.u32 %v242, 4294901760
        %v3004 = vsub.f32 %v242, %v3003
        %v3005 = vand.u32 %v3004, 4294901760
        %v3006 = vsub.f32 %v3004, %v3005
        %v3007 = vand.u32 %v3006, 4294901760
        %3008 = vmatpush1.msra.mxu0 %v3007
        %3009 = vmatprep.subr.mxu0 0.0
        %3010 = vmatpush2.msra.mxu0 0.0
        %3011 = vmatprep.subr.mxu0 0.0
        %3012 = vmatpush2.msra.mxu0 0.0
        %3013 = vmatprep.subr.mxu0 0.0
        %3014 = vmatpush2.msra.mxu0 0.0
        %3015 = vmatprep.subr.mxu0 0.0
        %3016 = vmatpush2.msra.mxu0 0.0
        %3017 = vmatprep.subr.mxu0 0.0
        %3018 = vmatpush2.msra.mxu0 0.0
        %3019 = vmatprep.subr.mxu0 0.0
        %3020 = vmatpush2.msra.mxu0 0.0
        %3021 = vmatprep.subr.mxu0 0.0
        %3022 = vmatpush2.msra.mxu0 0.0
        %3023 = vmatprep.subr.mxu0 0.0
        %3024 = vmatpush2.msra.mxu0 0.0
        %3025 = vmatprep.subr.mxu0 0.0
        %3026 = vmatpush2.msra.mxu0 0.0
        %3027 = vmatprep.subr.mxu0 0.0
        %3028 = vmatpush2.msra.mxu0 0.0
        %3029 = vmatprep.subr.mxu0 0.0
        %3030 = vmatpush2.msra.mxu0 0.0
        %3031 = vmatprep.subr.mxu0 0.0
        %3032 = vmatpush2.msra.mxu0 0.0
        %3033 = vmatprep.subr.mxu0 0.0
        %3034 = vmatpush2.msra.mxu0 0.0
        %3035 = vmatprep.subr.mxu0 0.0
        %3036 = vmatpush2.msra.mxu0 0.0
        %3037 = vmatprep.subr.mxu0 0.0
        %3038 = vmatpush2.msra.mxu0 0.0
        %3039 = vmatprep.subr.mxu0 0.0
        %3040 = vmatpush2.msra.mxu0 0.0
        %3041 = vmatprep.mubr.f32.mxu0 0.0
        %v3042 = vand.u32 %v2119, 4294901760
        %3043 = vmatmul.mubr.f32.gmra.mxu0 %v3042
        %v3044 = vpop.f32.mrf.mxu0
        %v3045 = vadd.f32 %v2900, %v3044
        %v3046 = vpop.f32.mrf.mxu0
        %v3047 = vadd.f32 %v2902, %v3046
        %3048 = vmatprep.mubr.f32.mxu0 0.0
        %v3049 = vand.u32 %v2122, 4294901760
        %3050 = vmatmul.mubr.f32.gmra.mxu0 %v3049
        %v3051 = vpop.f32.mrf.mxu0
        %v3052 = vadd.f32 %v2911, %v3051
        %v3053 = vpop.f32.mrf.mxu0
        %v3054 = vadd.f32 %v2913, %v3053
        %3055 = vmatprep.mubr.f32.mxu0 0.0
        %v3056 = vand.u32 %v2125, 4294901760
        %3057 = vmatmul.mubr.f32.gmra.mxu0 %v3056
        %v3058 = vpop.f32.mrf.mxu0
        %v3059 = vadd.f32 %v2922, %v3058
        %v3060 = vpop.f32.mrf.mxu0
        %v3061 = vadd.f32 %v2924, %v3060
        %3062 = vmatprep.mubr.f32.mxu0 0.0
        %v3063 = vand.u32 %v2128, 4294901760
        %3064 = vmatmul.mubr.f32.gmra.mxu0 %v3063
        %v3065 = vpop.f32.mrf.mxu0
        %v3066 = vadd.f32 %v2933, %v3065
        %v3067 = vpop.f32.mrf.mxu0
        %v3068 = vadd.f32 %v2935, %v3067
        %3069 = vdwg.mxu0
        %3070 = vmatprep.subr.mxu0 0.0
        %3071 = vmatpush1.msra.mxu0 0.0
        %3072 = vmatprep.subr.mxu0 0.0
        %3073 = vmatpush1.msra.mxu0 0.0
        %3074 = vmatprep.subr.mxu0 0.0
        %3075 = vmatpush1.msra.mxu0 0.0
        %3076 = vmatprep.subr.mxu0 0.0
        %3077 = vmatpush1.msra.mxu0 0.0
        %3078 = vmatprep.subr.mxu0 0.0
        %3079 = vmatpush1.msra.mxu0 0.0
        %3080 = vmatprep.subr.mxu0 0.0
        %3081 = vmatpush1.msra.mxu0 0.0
        %3082 = vmatprep.subr.mxu0 0.0
        %3083 = vmatpush1.msra.mxu0 0.0
        %3084 = vmatprep.subr.mxu0 0.0
        %3085 = vmatpush1.msra.mxu0 0.0
        %3086 = vmatprep.subr.mxu0 0.0
        %3087 = vmatpush1.msra.mxu0 0.0
        %3088 = vmatprep.subr.mxu0 0.0
        %3089 = vmatpush1.msra.mxu0 0.0
        %3090 = vmatprep.subr.mxu0 0.0
        %3091 = vmatpush1.msra.mxu0 0.0
        %3092 = vmatprep.subr.mxu0 0.0
        %3093 = vmatpush1.msra.mxu0 0.0
        %v3094 = vand.u32 %v255, 4294901760
        %v3095 = vsub.f32 %v255, %v3094
        %3096 = vmatprep.subr.mxu0 %v3095
        %v3097 = vand.u32 %v254, 4294901760
        %v3098 = vsub.f32 %v254, %v3097
        %3099 = vmatpush1.msra.mxu0 %v3098
        %v3100 = vand.u32 %v251, 4294901760
        %v3101 = vsub.f32 %v251, %v3100
        %3102 = vmatprep.subr.mxu0 %v3101
        %v3103 = vand.u32 %v250, 4294901760
        %v3104 = vsub.f32 %v250, %v3103
        %3105 = vmatpush1.msra.mxu0 %v3104
        %v3106 = vand.u32 %v247, 4294901760
        %v3107 = vsub.f32 %v247, %v3106
        %3108 = vmatprep.subr.mxu0 %v3107
        %v3109 = vand.u32 %v246, 4294901760
        %v3110 = vsub.f32 %v246, %v3109
        %3111 = vmatpush1.msra.mxu0 %v3110
        %v3112 = vand.u32 %v243, 4294901760
        %v3113 = vsub.f32 %v243, %v3112
        %3114 = vmatprep.subr.mxu0 %v3113
        %v3115 = vand.u32 %v242, 4294901760
        %v3116 = vsub.f32 %v242, %v3115
        %3117 = vmatpush1.msra.mxu0 %v3116
        %3118 = vmatprep.subr.mxu0 0.0
        %3119 = vmatpush2.msra.mxu0 0.0
        %3120 = vmatprep.subr.mxu0 0.0
        %3121 = vmatpush2.msra.mxu0 0.0
        %3122 = vmatprep.subr.mxu0 0.0
        %3123 = vmatpush2.msra.mxu0 0.0
        %3124 = vmatprep.subr.mxu0 0.0
        %3125 = vmatpush2.msra.mxu0 0.0
        %3126 = vmatprep.subr.mxu0 0.0
        %3127 = vmatpush2.msra.mxu0 0.0
        %3128 = vmatprep.subr.mxu0 0.0
        %3129 = vmatpush2.msra.mxu0 0.0
        %3130 = vmatprep.subr.mxu0 0.0
        %3131 = vmatpush2.msra.mxu0 0.0
        %3132 = vmatprep.subr.mxu0 0.0
        %3133 = vmatpush2.msra.mxu0 0.0
        %3134 = vmatprep.subr.mxu0 0.0
        %3135 = vmatpush2.msra.mxu0 0.0
        %3136 = vmatprep.subr.mxu0 0.0
        %3137 = vmatpush2.msra.mxu0 0.0
        %3138 = vmatprep.subr.mxu0 0.0
        %3139 = vmatpush2.msra.mxu0 0.0
        %3140 = vmatprep.subr.mxu0 0.0
        %3141 = vmatpush2.msra.mxu0 0.0
        %3142 = vmatprep.subr.mxu0 0.0
        %3143 = vmatpush2.msra.mxu0 0.0
        %3144 = vmatprep.subr.mxu0 0.0
        %3145 = vmatpush2.msra.mxu0 0.0
        %3146 = vmatprep.subr.mxu0 0.0
        %3147 = vmatpush2.msra.mxu0 0.0
        %3148 = vmatprep.subr.mxu0 0.0
        %3149 = vmatpush2.msra.mxu0 0.0
        %3150 = vmatprep.mubr.f32.mxu0 0.0
        %v3151 = vand.u32 %v2119, 4294901760
        %v3152 = vsub.f32 %v2119, %v3151
        %3153 = vmatmul.mubr.f32.gmra.mxu0 %v3152
        %v3154 = vpop.f32.mrf.mxu0
        %v3155 = vadd.f32 %v3045, %v3154
        %v3156 = vpop.f32.mrf.mxu0
        %v3157 = vadd.f32 %v3047, %v3156
        %3158 = vmatprep.mubr.f32.mxu0 0.0
        %v3159 = vand.u32 %v2122, 4294901760
        %v3160 = vsub.f32 %v2122, %v3159
        %3161 = vmatmul.mubr.f32.gmra.mxu0 %v3160
        %v3162 = vpop.f32.mrf.mxu0
        %v3163 = vadd.f32 %v3052, %v3162
        %v3164 = vpop.f32.mrf.mxu0
        %v3165 = vadd.f32 %v3054, %v3164
        %3166 = vmatprep.mubr.f32.mxu0 0.0
        %v3167 = vand.u32 %v2125, 4294901760
        %v3168 = vsub.f32 %v2125, %v3167
        %3169 = vmatmul.mubr.f32.gmra.mxu0 %v3168
        %v3170 = vpop.f32.mrf.mxu0
        %v3171 = vadd.f32 %v3059, %v3170
        %v3172 = vpop.f32.mrf.mxu0
        %v3173 = vadd.f32 %v3061, %v3172
        %3174 = vmatprep.mubr.f32.mxu0 0.0
        %v3175 = vand.u32 %v2128, 4294901760
        %v3176 = vsub.f32 %v2128, %v3175
        %3177 = vmatmul.mubr.f32.gmra.mxu0 %v3176
        %v3178 = vpop.f32.mrf.mxu0
        %v3179 = vadd.f32 %v3066, %v3178
        %v3180 = vpop.f32.mrf.mxu0
        %v3181 = vadd.f32 %v3068, %v3180
        %3182 = vdwg.mxu0
        %3183 = vmatprep.subr.mxu0 0.0
        %3184 = vmatpush1.msra.mxu0 0.0
        %3185 = vmatprep.subr.mxu0 0.0
        %3186 = vmatpush1.msra.mxu0 0.0
        %3187 = vmatprep.subr.mxu0 0.0
        %3188 = vmatpush1.msra.mxu0 0.0
        %3189 = vmatprep.subr.mxu0 0.0
        %3190 = vmatpush1.msra.mxu0 0.0
        %3191 = vmatprep.subr.mxu0 0.0
        %3192 = vmatpush1.msra.mxu0 0.0
        %3193 = vmatprep.subr.mxu0 0.0
        %3194 = vmatpush1.msra.mxu0 0.0
        %3195 = vmatprep.subr.mxu0 0.0
        %3196 = vmatpush1.msra.mxu0 0.0
        %3197 = vmatprep.subr.mxu0 0.0
        %3198 = vmatpush1.msra.mxu0 0.0
        %3199 = vmatprep.subr.mxu0 0.0
        %3200 = vmatpush1.msra.mxu0 0.0
        %3201 = vmatprep.subr.mxu0 0.0
        %3202 = vmatpush1.msra.mxu0 0.0
        %3203 = vmatprep.subr.mxu0 0.0
        %3204 = vmatpush1.msra.mxu0 0.0
        %3205 = vmatprep.subr.mxu0 0.0
        %3206 = vmatpush1.msra.mxu0 0.0
        %v3207 = vand.u32 %v255, 4294901760
        %3208 = vmatprep.subr.mxu0 %v3207
        %v3209 = vand.u32 %v254, 4294901760
        %3210 = vmatpush1.msra.mxu0 %v3209
        %v3211 = vand.u32 %v251, 4294901760
        %3212 = vmatprep.subr.mxu0 %v3211
        %v3213 = vand.u32 %v250, 4294901760
        %3214 = vmatpush1.msra.mxu0 %v3213
        %v3215 = vand.u32 %v247, 4294901760
        %3216 = vmatprep.subr.mxu0 %v3215
        %v3217 = vand.u32 %v246, 4294901760
        %3218 = vmatpush1.msra.mxu0 %v3217
        %v3219 = vand.u32 %v243, 4294901760
        %3220 = vmatprep.subr.mxu0 %v3219
        %v3221 = vand.u32 %v242, 4294901760
        %3222 = vmatpush1.msra.mxu0 %v3221
        %3223 = vmatprep.subr.mxu0 0.0
        %3224 = vmatpush2.msra.mxu0 0.0
        %3225 = vmatprep.subr.mxu0 0.0
        %3226 = vmatpush2.msra.mxu0 0.0
        %3227 = vmatprep.subr.mxu0 0.0
        %3228 = vmatpush2.msra.mxu0 0.0
        %3229 = vmatprep.subr.mxu0 0.0
        %3230 = vmatpush2.msra.mxu0 0.0
        %3231 = vmatprep.subr.mxu0 0.0
        %3232 = vmatpush2.msra.mxu0 0.0
        %3233 = vmatprep.subr.mxu0 0.0
        %3234 = vmatpush2.msra.mxu0 0.0
        %3235 = vmatprep.subr.mxu0 0.0
        %3236 = vmatpush2.msra.mxu0 0.0
        %3237 = vmatprep.subr.mxu0 0.0
        %3238 = vmatpush2.msra.mxu0 0.0
        %3239 = vmatprep.subr.mxu0 0.0
        %3240 = vmatpush2.msra.mxu0 0.0
        %3241 = vmatprep.subr.mxu0 0.0
        %3242 = vmatpush2.msra.mxu0 0.0
        %3243 = vmatprep.subr.mxu0 0.0
        %3244 = vmatpush2.msra.mxu0 0.0
        %3245 = vmatprep.subr.mxu0 0.0
        %3246 = vmatpush2.msra.mxu0 0.0
        %3247 = vmatprep.subr.mxu0 0.0
        %3248 = vmatpush2.msra.mxu0 0.0
        %3249 = vmatprep.subr.mxu0 0.0
        %3250 = vmatpush2.msra.mxu0 0.0
        %3251 = vmatprep.subr.mxu0 0.0
        %3252 = vmatpush2.msra.mxu0 0.0
        %3253 = vmatprep.subr.mxu0 0.0
        %3254 = vmatpush2.msra.mxu0 0.0
        %3255 = vmatprep.mubr.f32.mxu0 0.0
        %v3256 = vand.u32 %v2119, 4294901760
        %v3257 = vsub.f32 %v2119, %v3256
        %v3258 = vand.u32 %v3257, 4294901760
        %3259 = vmatmul.mubr.f32.gmra.mxu0 %v3258
        %v3260 = vpop.f32.mrf.mxu0
        %v3261 = vadd.f32 %v3155, %v3260
        %v3262 = vpop.f32.mrf.mxu0
        %v3263 = vadd.f32 %v3157, %v3262
        %3264 = vmatprep.mubr.f32.mxu0 0.0
        %v3265 = vand.u32 %v2122, 4294901760
        %v3266 = vsub.f32 %v2122, %v3265
        %v3267 = vand.u32 %v3266, 4294901760
        %3268 = vmatmul.mubr.f32.gmra.mxu0 %v3267
        %v3269 = vpop.f32.mrf.mxu0
        %v3270 = vadd.f32 %v3163, %v3269
        %v3271 = vpop.f32.mrf.mxu0
        %v3272 = vadd.f32 %v3165, %v3271
        %3273 = vmatprep.mubr.f32.mxu0 0.0
        %v3274 = vand.u32 %v2125, 4294901760
        %v3275 = vsub.f32 %v2125, %v3274
        %v3276 = vand.u32 %v3275, 4294901760
        %3277 = vmatmul.mubr.f32.gmra.mxu0 %v3276
        %v3278 = vpop.f32.mrf.mxu0
        %v3279 = vadd.f32 %v3171, %v3278
        %v3280 = vpop.f32.mrf.mxu0
        %v3281 = vadd.f32 %v3173, %v3280
        %3282 = vmatprep.mubr.f32.mxu0 0.0
        %v3283 = vand.u32 %v2128, 4294901760
        %v3284 = vsub.f32 %v2128, %v3283
        %v3285 = vand.u32 %v3284, 4294901760
        %3286 = vmatmul.mubr.f32.gmra.mxu0 %v3285
        %v3287 = vpop.f32.mrf.mxu0
        %v3288 = vadd.f32 %v3179, %v3287
        %v3289 = vpop.f32.mrf.mxu0
        %v3290 = vadd.f32 %v3181, %v3289
        %3291 = vdwg.mxu0
        %3292 = vmatprep.subr.mxu0 0.0
        %3293 = vmatpush1.msra.mxu0 0.0
        %3294 = vmatprep.subr.mxu0 0.0
        %3295 = vmatpush1.msra.mxu0 0.0
        %3296 = vmatprep.subr.mxu0 0.0
        %3297 = vmatpush1.msra.mxu0 0.0
        %3298 = vmatprep.subr.mxu0 0.0
        %3299 = vmatpush1.msra.mxu0 0.0
        %3300 = vmatprep.subr.mxu0 0.0
        %3301 = vmatpush1.msra.mxu0 0.0
        %3302 = vmatprep.subr.mxu0 0.0
        %3303 = vmatpush1.msra.mxu0 0.0
        %3304 = vmatprep.subr.mxu0 0.0
        %3305 = vmatpush1.msra.mxu0 0.0
        %3306 = vmatprep.subr.mxu0 0.0
        %3307 = vmatpush1.msra.mxu0 0.0
        %3308 = vmatprep.subr.mxu0 0.0
        %3309 = vmatpush1.msra.mxu0 0.0
        %3310 = vmatprep.subr.mxu0 0.0
        %3311 = vmatpush1.msra.mxu0 0.0
        %3312 = vmatprep.subr.mxu0 0.0
        %3313 = vmatpush1.msra.mxu0 0.0
        %3314 = vmatprep.subr.mxu0 0.0
        %3315 = vmatpush1.msra.mxu0 0.0
        %v3316 = vand.u32 %v255, 4294901760
        %v3317 = vsub.f32 %v255, %v3316
        %v3318 = vand.u32 %v3317, 4294901760
        %3319 = vmatprep.subr.mxu0 %v3318
        %v3320 = vand.u32 %v254, 4294901760
        %v3321 = vsub.f32 %v254, %v3320
        %v3322 = vand.u32 %v3321, 4294901760
        %3323 = vmatpush1.msra.mxu0 %v3322
        %v3324 = vand.u32 %v251, 4294901760
        %v3325 = vsub.f32 %v251, %v3324
        %v3326 = vand.u32 %v3325, 4294901760
        %3327 = vmatprep.subr.mxu0 %v3326
        %v3328 = vand.u32 %v250, 4294901760
        %v3329 = vsub.f32 %v250, %v3328
        %v3330 = vand.u32 %v3329, 4294901760
        %3331 = vmatpush1.msra.mxu0 %v3330
        %v3332 = vand.u32 %v247, 4294901760
        %v3333 = vsub.f32 %v247, %v3332
        %v3334 = vand.u32 %v3333, 4294901760
        %3335 = vmatprep.subr.mxu0 %v3334
        %v3336 = vand.u32 %v246, 4294901760
        %v3337 = vsub.f32 %v246, %v3336
        %v3338 = vand.u32 %v3337, 4294901760
        %3339 = vmatpush1.msra.mxu0 %v3338
        %v3340 = vand.u32 %v243, 4294901760
        %v3341 = vsub.f32 %v243, %v3340
        %v3342 = vand.u32 %v3341, 4294901760
        %3343 = vmatprep.subr.mxu0 %v3342
        %v3344 = vand.u32 %v242, 4294901760
        %v3345 = vsub.f32 %v242, %v3344
        %v3346 = vand.u32 %v3345, 4294901760
        %3347 = vmatpush1.msra.mxu0 %v3346
        %3348 = vmatprep.subr.mxu0 0.0
        %3349 = vmatpush2.msra.mxu0 0.0
        %3350 = vmatprep.subr.mxu0 0.0
        %3351 = vmatpush2.msra.mxu0 0.0
        %3352 = vmatprep.subr.mxu0 0.0
        %3353 = vmatpush2.msra.mxu0 0.0
        %3354 = vmatprep.subr.mxu0 0.0
        %3355 = vmatpush2.msra.mxu0 0.0
        %3356 = vmatprep.subr.mxu0 0.0
        %3357 = vmatpush2.msra.mxu0 0.0
        %3358 = vmatprep.subr.mxu0 0.0
        %3359 = vmatpush2.msra.mxu0 0.0
        %3360 = vmatprep.subr.mxu0 0.0
        %3361 = vmatpush2.msra.mxu0 0.0
        %3362 = vmatprep.subr.mxu0 0.0
        %3363 = vmatpush2.msra.mxu0 0.0
        %3364 = vmatprep.subr.mxu0 0.0
        %3365 = vmatpush2.msra.mxu0 0.0
        %3366 = vmatprep.subr.mxu0 0.0
        %3367 = vmatpush2.msra.mxu0 0.0
        %3368 = vmatprep.subr.mxu0 0.0
        %3369 = vmatpush2.msra.mxu0 0.0
        %3370 = vmatprep.subr.mxu0 0.0
        %3371 = vmatpush2.msra.mxu0 0.0
        %3372 = vmatprep.subr.mxu0 0.0
        %3373 = vmatpush2.msra.mxu0 0.0
        %3374 = vmatprep.subr.mxu0 0.0
        %3375 = vmatpush2.msra.mxu0 0.0
        %3376 = vmatprep.subr.mxu0 0.0
        %3377 = vmatpush2.msra.mxu0 0.0
        %3378 = vmatprep.subr.mxu0 0.0
        %3379 = vmatpush2.msra.mxu0 0.0
        %3380 = vmatprep.mubr.f32.mxu0 0.0
        %v3381 = vand.u32 %v2119, 4294901760
        %3382 = vmatmul.mubr.f32.gmra.mxu0 %v3381
        %v3383 = vpop.f32.mrf.mxu0
        %v3384 = vadd.f32 %v3261, %v3383
        %v3385 = vpop.f32.mrf.mxu0
        %v3386 = vadd.f32 %v3263, %v3385
        %3387 = vmatprep.mubr.f32.mxu0 0.0
        %v3388 = vand.u32 %v2122, 4294901760
        %3389 = vmatmul.mubr.f32.gmra.mxu0 %v3388
        %v3390 = vpop.f32.mrf.mxu0
        %v3391 = vadd.f32 %v3270, %v3390
        %v3392 = vpop.f32.mrf.mxu0
        %v3393 = vadd.f32 %v3272, %v3392
        %3394 = vmatprep.mubr.f32.mxu0 0.0
        %v3395 = vand.u32 %v2125, 4294901760
        %3396 = vmatmul.mubr.f32.gmra.mxu0 %v3395
        %v3397 = vpop.f32.mrf.mxu0
        %v3398 = vadd.f32 %v3279, %v3397
        %v3399 = vpop.f32.mrf.mxu0
        %v3400 = vadd.f32 %v3281, %v3399
        %3401 = vmatprep.mubr.f32.mxu0 0.0
        %v3402 = vand.u32 %v2128, 4294901760
        %3403 = vmatmul.mubr.f32.gmra.mxu0 %v3402
        %v3404 = vpop.f32.mrf.mxu0
        %v3405 = vadd.f32 %v3288, %v3404
        %v3406 = vpop.f32.mrf.mxu0
        %v3407 = vadd.f32 %v3290, %v3406
        %3408 = vdwg.mxu0
        %3409 = vmatprep.subr.mxu0 0.0
        %3410 = vmatpush1.msra.mxu0 0.0
        %3411 = vmatprep.subr.mxu0 0.0
        %3412 = vmatpush1.msra.mxu0 0.0
        %3413 = vmatprep.subr.mxu0 0.0
        %3414 = vmatpush1.msra.mxu0 0.0
        %3415 = vmatprep.subr.mxu0 0.0
        %3416 = vmatpush1.msra.mxu0 0.0
        %3417 = vmatprep.subr.mxu0 0.0
        %3418 = vmatpush1.msra.mxu0 0.0
        %3419 = vmatprep.subr.mxu0 0.0
        %3420 = vmatpush1.msra.mxu0 0.0
        %3421 = vmatprep.subr.mxu0 0.0
        %3422 = vmatpush1.msra.mxu0 0.0
        %3423 = vmatprep.subr.mxu0 0.0
        %3424 = vmatpush1.msra.mxu0 0.0
        %3425 = vmatprep.subr.mxu0 0.0
        %3426 = vmatpush1.msra.mxu0 0.0
        %3427 = vmatprep.subr.mxu0 0.0
        %3428 = vmatpush1.msra.mxu0 0.0
        %3429 = vmatprep.subr.mxu0 0.0
        %3430 = vmatpush1.msra.mxu0 0.0
        %3431 = vmatprep.subr.mxu0 0.0
        %3432 = vmatpush1.msra.mxu0 0.0
        %v3433 = vand.u32 %v255, 4294901760
        %3434 = vmatprep.subr.mxu0 %v3433
        %v3435 = vand.u32 %v254, 4294901760
        %3436 = vmatpush1.msra.mxu0 %v3435
        %v3437 = vand.u32 %v251, 4294901760
        %3438 = vmatprep.subr.mxu0 %v3437
        %v3439 = vand.u32 %v250, 4294901760
        %3440 = vmatpush1.msra.mxu0 %v3439
        %v3441 = vand.u32 %v247, 4294901760
        %3442 = vmatprep.subr.mxu0 %v3441
        %v3443 = vand.u32 %v246, 4294901760
        %3444 = vmatpush1.msra.mxu0 %v3443
        %v3445 = vand.u32 %v243, 4294901760
        %3446 = vmatprep.subr.mxu0 %v3445
        %v3447 = vand.u32 %v242, 4294901760
        %3448 = vmatpush1.msra.mxu0 %v3447
        %3449 = vmatprep.subr.mxu0 0.0
        %3450 = vmatpush2.msra.mxu0 0.0
        %3451 = vmatprep.subr.mxu0 0.0
        %3452 = vmatpush2.msra.mxu0 0.0
        %3453 = vmatprep.subr.mxu0 0.0
        %3454 = vmatpush2.msra.mxu0 0.0
        %3455 = vmatprep.subr.mxu0 0.0
        %3456 = vmatpush2.msra.mxu0 0.0
        %3457 = vmatprep.subr.mxu0 0.0
        %3458 = vmatpush2.msra.mxu0 0.0
        %3459 = vmatprep.subr.mxu0 0.0
        %3460 = vmatpush2.msra.mxu0 0.0
        %3461 = vmatprep.subr.mxu0 0.0
        %3462 = vmatpush2.msra.mxu0 0.0
        %3463 = vmatprep.subr.mxu0 0.0
        %3464 = vmatpush2.msra.mxu0 0.0
        %3465 = vmatprep.subr.mxu0 0.0
        %3466 = vmatpush2.msra.mxu0 0.0
        %3467 = vmatprep.subr.mxu0 0.0
        %3468 = vmatpush2.msra.mxu0 0.0
        %3469 = vmatprep.subr.mxu0 0.0
        %3470 = vmatpush2.msra.mxu0 0.0
        %3471 = vmatprep.subr.mxu0 0.0
        %3472 = vmatpush2.msra.mxu0 0.0
        %3473 = vmatprep.subr.mxu0 0.0
        %3474 = vmatpush2.msra.mxu0 0.0
        %3475 = vmatprep.subr.mxu0 0.0
        %3476 = vmatpush2.msra.mxu0 0.0
        %3477 = vmatprep.subr.mxu0 0.0
        %3478 = vmatpush2.msra.mxu0 0.0
        %3479 = vmatprep.subr.mxu0 0.0
        %3480 = vmatpush2.msra.mxu0 0.0
        %3481 = vmatprep.mubr.f32.mxu0 0.0
        %v3482 = vand.u32 %v2119, 4294901760
        %3483 = vmatmul.mubr.f32.gmra.mxu0 %v3482
        %v3484 = vpop.f32.mrf.mxu0
        %v3485 = vadd.f32 %v3384, %v3484
        %v3486 = vpop.f32.mrf.mxu0
        %v3487 = vadd.f32 %v3386, %v3486
        %3488 = vmatprep.mubr.f32.mxu0 0.0
        %v3489 = vand.u32 %v2122, 4294901760
        %3490 = vmatmul.mubr.f32.gmra.mxu0 %v3489
        %v3491 = vpop.f32.mrf.mxu0
        %v3492 = vadd.f32 %v3391, %v3491
        %v3493 = vpop.f32.mrf.mxu0
        %v3494 = vadd.f32 %v3393, %v3493
        %3495 = vmatprep.mubr.f32.mxu0 0.0
        %v3496 = vand.u32 %v2125, 4294901760
        %3497 = vmatmul.mubr.f32.gmra.mxu0 %v3496
        %v3498 = vpop.f32.mrf.mxu0
        %v3499 = vadd.f32 %v3398, %v3498
        %v3500 = vpop.f32.mrf.mxu0
        %v3501 = vadd.f32 %v3400, %v3500
        %3502 = vmatprep.mubr.f32.mxu0 0.0
        %v3503 = vand.u32 %v2128, 4294901760
        %3504 = vmatmul.mubr.f32.gmra.mxu0 %v3503
        %v3505 = vpop.f32.mrf.mxu0
        %v3506 = vadd.f32 %v3405, %v3505
        %v3507 = vpop.f32.mrf.mxu0
        %v3508 = vadd.f32 %v3407, %v3507
        %3509 = vdwg.mxu0
        %3510 = vst [vmem:[%s222] sm:$0xff] %v2795
        %3511 = vst [vmem:[%s222 + $0x8] sm:$0xff] %v2797
        %3512 = vst [vmem:[%s222 + $0x10] sm:$0xff] %v3485
        %3513 = vst [vmem:[%s222 + $0x18] sm:$0xff] %v3487
        %3514 = vst [vmem:[%s222 + $0x20] sm:$0xff] %v2802
        %3515 = vst [vmem:[%s222 + $0x28] sm:$0xff] %v2804
        %3516 = vst [vmem:[%s222 + $0x30] sm:$0xff] %v3492
        %3517 = vst [vmem:[%s222 + $0x38] sm:$0xff] %v3494
        %3518 = vst [vmem:[%s222 + $0x40] sm:$0xff] %v2809
        %3519 = vst [vmem:[%s222 + $0x48] sm:$0xff] %v2811
        %3520 = vst [vmem:[%s222 + $0x50] sm:$0xff] %v3499
        %3521 = vst [vmem:[%s222 + $0x58] sm:$0xff] %v3501
        %3522 = vst [vmem:[%s222 + $0x60] sm:$0xff] %v2816
        %3523 = vst [vmem:[%s222 + $0x68] sm:$0xff] %v2818
        %3524 = vst [vmem:[%s222 + $0x70] sm:$0xff] %v3506
        %3525 = vst [vmem:[%s222 + $0x78] sm:$0xff] %v3508
        %s3526 = sand.u32 %s121, 1
        %s3527 = scalar_lea.sflag [#allocation4], %s3526
        %s3528 = sand.u32 %s121, 1
        %s3529 = smul.addr %s3528, 128
        %s3530 = scalar_lea.vmem [#allocation5], %s3529
        // Predicated region
        $region41: #{tpu_custom_call.1} parent=35 // pred_check
          %p3531 = pneg %p131
        $region42: #{tpu_custom_call.1} parent=35 // pred_check_branch
          %3533 = sbr.rel (%p3531) target = $region44
        $region43: #{tpu_custom_call.1} parent=35 // pred_region
          %s3534 = smul.u32 4, %s19
          %s3536 = ssub.s32 2048, 2048
          %3537 = vsyncadd %s3527, %s3536
          %s3538 = smul.addr %s3534, 4
          %s3539 = smul.addr %s3538, 128
          %s3540 = scalar_lea.hbm %s4, %s3539
          %s3541 = sshll.u32 %s3530, 4
          %s3542 = int_to_ptr.vmem [resolvable:$true] %s3541
          %3547 = dma.vmem_to_hbm [thread:$0]  %s3542, 2048, %s3540, %s3527, 512, 512, 32
        $region44: #{tpu_custom_call.1} parent=35 // pred_fallthru
          _
      $region36: #{tpu_custom_call.1} parent=5 // pred_fallthru
        _
      %p3548 = scmp.le.s32.totalorder 2, %s14
      // Predicated region
      $region45: #{tpu_custom_call.1} parent=5 // pred_check
        %p3549 = pneg %p3548
      $region46: #{tpu_custom_call.1} parent=5 // pred_check_branch
        %3551 = sbr.rel (%p3549) target = $region48
      $region47: #{tpu_custom_call.1} parent=5 // pred_region
        %s3552 = ssub.s32 %s14, 2
        // Predicated region
        $region49: #{tpu_custom_call.1} parent=47 // pred_check
          %p3553 = pneg %p137
        $region50: #{tpu_custom_call.1} parent=47 // pred_check_branch
          %3555 = sbr.rel (%p3553) target = $region52
        $region51: #{tpu_custom_call.1} parent=47 // pred_region
          %s3556 = sand.u32 %s122, 1
          %s3557 = scalar_lea.sflag [#allocation4], %s3556
          %s3558 = sand.u32 %s122, 1
          %s3559 = smul.addr %s3558, 128
          %s3560 = scalar_lea.vmem [#allocation5], %s3559
          %3561 = dma.done %s3557, 2048
        $region52: #{tpu_custom_call.1} parent=47 // pred_fallthru
          _
      $region48: #{tpu_custom_call.1} parent=5 // pred_fallthru
        _
    $region6: #{tpu_custom_call.1} parent=1 // loop_footer
      %s18 = sadd.s32 1, %s14
    $region7: #{tpu_custom_call.1} parent=1 // loop_footer_branch
      %13 = sbr.rel target = $region3
    $region8: #{tpu_custom_call.1} parent=1 // loop_exit
      _
    %3562 = vsyncpa [#allocation3], 1
    %s3563 = scalar_lea.sflag [#allocation3], 1
    %3564 = vsyncpa %s3563, 1
    %3565 = vsyncpa [#allocation4], 1
    %s3566 = scalar_lea.sflag [#allocation4], 1
    %3567 = vsyncpa %s3566, 1

</llo_original>
